<compile_context>
chip_gen: v7x
topology: tpu7x:2x2x1
jax: 0.10.0
libtpu: 0.0.40
codegen_flags: <defaults>
</compile_context>

<pallas_src>
import jax
import jax.numpy as jnp
import numpy as np
from jax import lax
from jax.experimental import pallas as pl
from jax.experimental.pallas import tpu as pltpu


def _round_up(x, m):
    return (x + m - 1) // m * m


def _lstm_fc_kernel(x_ref, wih_ref, whh_ref, b_ref, wfc_ref, bfc_ref,
                    out_ref, h_sc, c_sc, xg_sc):
    """One grid step = one (batch tile, time chunk).

    x_ref   : (TC, TB, I)   f32 input chunk, time-major
    wih_ref : (I,  4Hp)     W_ih^T, gate blocks [i|f|o|g], lane-aligned to Hp
    whh_ref : (Hp, 4Hp)     W_hh^T
    b_ref   : (1,  4Hp)     b_ih + b_hh (f32)
    wfc_ref : (Hp, Op)      W_fc^T
    bfc_ref : (1,  Op)      b_fc (f32)
    out_ref : (TB, Op)      FC output (written on the last time chunk)
    h_sc/c_sc : (TB, Hp)    f32 state, persistent across the time-chunk axis
    xg_sc   : (TC, TB, 4Hp) f32 chunk input projection (time-major)
    """
    t = pl.program_id(1)

    @pl.when(t == 0)
    def _():
        h_sc[...] = jnp.zeros_like(h_sc)
        c_sc[...] = jnp.zeros_like(c_sc)

    TC, TB, I = x_ref.shape
    Hp = h_sc.shape[1]
    mm_dtype = wih_ref.dtype      # matmul operand dtype (bf16 by default)

    # Input projection for the WHOLE chunk as one matmul (M = TC*TB), bias
    # folded in -> hoisted off the serial recurrence entirely.  The reshape
    # merges leading dims in f32 (TB % 8 == 0 -> relayout-free) before the
    # cast to the matmul dtype.
    x2d = x_ref[...].reshape(TC * TB, I).astype(mm_dtype)
    xg_sc[...] = (jnp.dot(x2d, wih_ref[...],
                          preferred_element_type=jnp.float32)
                  + b_ref[...]).reshape(TC, TB, 4 * Hp)

    whh = whh_ref[...]

    # TODO(synk): for small Hp the per-step MXU cost is dominated by pushing
    # W_hh; pltpu.matmul_push_rhs/matmul_acc_lhs could hold it across the
    # chunk.  Left as jnp.dot for portability.
    def step(s, carry):
        h, c = carry
        # xg_sc[s] is a contiguous (TB, 4Hp) leading-dim slice (time-major).
        gates = xg_sc[s] + jnp.dot(h.astype(mm_dtype), whh,
                                   preferred_element_type=jnp.float32)
        # Gate layout [i|f|o|g]: one sigmoid over a contiguous 3Hp block,
        # tanh over the last block.  Gate math stays f32 on all generations.
        sig = jax.nn.sigmoid(gates[:, :3 * Hp])
        i_g = sig[:, 0 * Hp:1 * Hp]
        f_g = sig[:, 1 * Hp:2 * Hp]
        o_g = sig[:, 2 * Hp:3 * Hp]
        g_g = jnp.tanh(gates[:, 3 * Hp:4 * Hp])
        c = f_g * c + i_g * g_g
        h = o_g * jnp.tanh(c)
        return (h, c)

    carry = (h_sc[...], c_sc[...])
    if TC <= 8:
        # Short chunk: full static unroll (LLO scheduler sees everything).
        for s in range(TC):
            carry = step(s, carry)
    else:
        # Larger chunk: bound live ranges with a partially-unrolled loop.
        carry = lax.fori_loop(0, TC, step, carry, unroll=8)
    h, c = carry

    h_sc[...] = h
    c_sc[...] = c

    @pl.when(t == pl.num_programs(1) - 1)
    def _():
        out = (jnp.dot(h.astype(mm_dtype), wfc_ref[...],
                       preferred_element_type=jnp.float32)
               + bfc_ref[...])
        out_ref[...] = out.astype(out_ref.dtype)


# Padded gate block k takes PyTorch gate block _GATE_ORDER[k].
# PyTorch gate order is [i|f|g|o]; padded layout is [i|f|o|g].
_GATE_ORDER = (0, 1, 3, 2)


def rnn_memory_forward(x_btI, params, *, time_chunk=32,
                       matmul_dtype=jnp.bfloat16,
                       xg_budget_bytes=12 << 20):
    """x_btI: (B, T, I) batch_first like PyTorch.  Returns (B, O) float32."""
    w_ih, w_hh, b_ih, b_hh, w_fc, b_fc = params   # (I,4H), (H,4H), ..., (H,O)
    B, T, I = x_btI.shape
    H = w_hh.shape[0]          # pre-transposed (H, 4H) -> hidden is dim 0
    O = w_fc.shape[1]
    f32 = jnp.float32

    # Lane/sublane aligned padded sizes.
    Hp = _round_up(H, 128)
    Op = _round_up(O, 128)
    Bp = _round_up(B, 8)

    # Batch tiling: only split when the batch is large enough that the
    # recurrent matmul is data-streaming bound.  Small batches are dominated
    # by re-pushing W_hh into the MXU (batch independent), so splitting just
    # idles a megacore.
    if Bp <= 64:
        TB = Bp
    else:
        TB = min(256, _round_up((Bp + 1) // 2, 8))   # >= 2 "parallel" tiles
        Bp = _round_up(Bp, TB)

    # Time chunk: any divisor of T is legal (TC is the leading block dim so
    # the (8,128) rule never sees it); pick the largest one under both the
    # requested chunk and the xg-scratch VMEM budget (v7x: 64 MiB physical).
    tc_cap = max(1, min(time_chunk, xg_budget_bytes // (TB * 4 * Hp * 4), T))
    TC = max(d for d in range(1, tc_cap + 1) if T % d == 0)

    def pad_gate_cols(w):
        # (rows, 4H) -> (rows, 4Hp): PyTorch gate blocks [i|f|g|o] re-laid out
        # as [i|f|o|g], each at a lane-aligned offset k*Hp; padded lanes are
        # exactly zero, so padded h/c lanes stay identically zero.
        out = jnp.zeros((w.shape[0], 4 * Hp), f32)
        for k, src in enumerate(_GATE_ORDER):
            out = out.at[:, k * Hp:k * Hp + H].set(w[:, src * H:(src + 1) * H])
        return out

    wih_p = pad_gate_cols(w_ih.astype(f32)).astype(matmul_dtype)          # (I, 4Hp)
    whh_p = jnp.zeros((Hp, 4 * Hp), f32).at[:H, :].set(
        pad_gate_cols(w_hh.astype(f32))).astype(matmul_dtype)             # (Hp, 4Hp)
    b_p = pad_gate_cols((b_ih + b_hh).astype(f32).reshape(1, 4 * H))      # (1, 4Hp) f32
    wfc_p = jnp.zeros((Hp, Op), f32).at[:H, :O].set(
        w_fc.astype(f32)).astype(matmul_dtype)                            # (Hp, Op)
    bfc_p = jnp.zeros((1, Op), f32).at[0, :O].set(b_fc.astype(f32))       # (1, Op) f32

    # x stays f32 through HBM/DMA (cast in-kernel) and is laid out time-major
    # once so the per-step gate slab is a contiguous leading-dim slice.
    x_tm = jnp.transpose(x_btI.astype(f32), (1, 0, 2))                    # (T, B, I)
    x_p = jnp.zeros((T, Bp, I), f32).at[:, :B, :].set(x_tm)

    grid = (Bp // TB, T // TC)
    mm_bytes = np.dtype(matmul_dtype).itemsize
    weight_bytes = ((I * 4 * Hp + Hp * 4 * Hp + Hp * Op) * mm_bytes
                    + (4 * Hp + Op) * 4)

    def run(single_buffer_weights):
        def wspec(shape):
            if single_buffer_weights:
                # Grid-invariant operands: a second pipeline buffer is pure
                # VMEM waste -> request single buffering.
                return pl.BlockSpec(shape, lambda b, t: (0, 0),
                                    pipeline_mode=pl.Buffered(1))
            return pl.BlockSpec(shape, lambda b, t: (0, 0))

        wb = 1 if single_buffer_weights else 2
        resident = (weight_bytes * wb                        # weights + biases
                    + 2 * TC * TB * I * 4                    # x chunk (dbl buf)
                    + 2 * TB * Op * 4                        # output (dbl buf)
                    + (2 * TB * Hp + TC * TB * 4 * Hp) * 4)  # h/c + xg scratch
        # Explicit VMEM budget sized from the resident footprint (+ headroom
        # for gate temporaries), instead of relying on the per-gen default.
        vmem_limit = int(min(128 << 20, max(2 * resident + (8 << 20), 16 << 20)))

        return pl.pallas_call(
            _lstm_fc_kernel,
            out_shape=jax.ShapeDtypeStruct((Bp, Op), jnp.float32),
            grid_spec=pltpu.PrefetchScalarGridSpec(
                num_scalar_prefetch=0,
                grid=grid,
                in_specs=[
                    pl.BlockSpec((TC, TB, I), lambda b, t: (t, b, 0)),  # x
                    wspec((I, 4 * Hp)),      # W_ih^T
                    wspec((Hp, 4 * Hp)),     # W_hh^T
                    wspec((1, 4 * Hp)),      # bias (f32)
                    wspec((Hp, Op)),         # W_fc^T
                    wspec((1, Op)),          # b_fc (f32)
                ],
                out_specs=pl.BlockSpec((TB, Op), lambda b, t: (b, 0)),
                scratch_shapes=[
                    pltpu.VMEM((TB, Hp), jnp.float32),           # h (carried)
                    pltpu.VMEM((TB, Hp), jnp.float32),           # c (carried)
                    pltpu.VMEM((TC, TB, 4 * Hp), jnp.float32),   # xg chunk
                ],
            ),
            compiler_params=pltpu.CompilerParams(
                # batch tiles independent (megacore); time chunks must stay
                # sequential on one core because h/c scratch carries state.
                dimension_semantics=("parallel", "arbitrary"),
                vmem_limit_bytes=vmem_limit),
        )(x_p, wih_p, whh_p, b_p, wfc_p, bfc_p)

    try:
        out_p = run(single_buffer_weights=True)
    except Exception:
        # pl.Buffered(1) rejected by this jax build -> default double buffering.
        out_p = run(single_buffer_weights=False)

    return out_p[:B, :O]


def _reference_forward(x_btI, params):
    """Pure-JAX reference mirroring torch.nn.LSTM + Linear semantics."""
    w_ih, w_hh, b_ih, b_hh, w_fc, b_fc = params
    B, T, I = x_btI.shape
    H = w_hh.shape[0]

    def step(carry, x_t):
        h, c = carry
        gates = x_t @ w_ih + h @ w_hh + b_ih + b_hh
        i_g = jax.nn.sigmoid(gates[:, 0 * H:1 * H])
        f_g = jax.nn.sigmoid(gates[:, 1 * H:2 * H])
        g_g = jnp.tanh(gates[:, 2 * H:3 * H])
        o_g = jax.nn.sigmoid(gates[:, 3 * H:4 * H])
        c = f_g * c + i_g * g_g
        h = o_g * jnp.tanh(c)
        return (h, c), h

    h0 = jnp.zeros((B, H), jnp.float32)
    c0 = jnp.zeros((B, H), jnp.float32)
    (h_last, _), _ = lax.scan(step, (h0, c0), jnp.transpose(x_btI, (1, 0, 2)))
    return h_last @ w_fc + b_fc


def make_params(key, input_size, hidden_size, output_size):
    """Deterministic synthetic parameters, stored pre-transposed:
    W_ih^T (I, 4H), W_hh^T (H, 4H), W_fc^T (H, O).  Gate order i,f,g,o."""
    ks = jax.random.split(key, 6)
    s = 0.1
    w_ih = s * jax.random.normal(ks[0], (input_size, 4 * hidden_size), jnp.float32)
    w_hh = s * jax.random.normal(ks[1], (hidden_size, 4 * hidden_size), jnp.float32)
    b_ih = s * jax.random.normal(ks[2], (4 * hidden_size,), jnp.float32)
    b_hh = s * jax.random.normal(ks[3], (4 * hidden_size,), jnp.float32)
    w_fc = s * jax.random.normal(ks[4], (hidden_size, output_size), jnp.float32)
    b_fc = s * jax.random.normal(ks[5], (output_size,), jnp.float32)
    return (w_ih, w_hh, b_ih, b_hh, w_fc, b_fc)


if __name__ == "__main__":
    B, T, I, H, O = 2, 8, 16, 32, 8
    key = jax.random.PRNGKey(0)
    kx, kp = jax.random.split(key)
    x = jax.random.normal(kx, (B, T, I), jnp.float32)   # batch_first like PyTorch
    params = make_params(kp, I, H, O)

    ref = jax.block_until_ready(_reference_forward(x, params))

    # Default: bf16 matmul operands (f32 accumulation + f32 gate math).
    out = jax.block_until_ready(rnn_memory_forward(x, params))
    assert out.shape == (B, O)
    assert jnp.allclose(out, ref, atol=5e-2, rtol=5e-2), "bf16 mismatch vs reference"

    # Full f32 matmuls (matches PyTorch default dtype semantics closely).
    out_f32 = jax.block_until_ready(
        rnn_memory_forward(x, params, matmul_dtype=jnp.float32))
    assert jnp.allclose(out_f32, ref, atol=2e-3, rtol=2e-3), "f32 mismatch vs reference"

    print("KERNEL_OK")
</pallas_src>

<mosaic_0001>
module attributes {stable_mosaic.version = 11 : i64} {
  func.func @_lstm_fc_kernel(%arg0: i32, %arg1: i32, %arg2: memref<8x8x16xf32, #tpu.memory_space<vmem>>, %arg3: memref<16x512xbf16, #tpu.memory_space<vmem>>, %arg4: memref<128x512xbf16, #tpu.memory_space<vmem>>, %arg5: memref<1x512xf32, #tpu.memory_space<vmem>>, %arg6: memref<128x128xbf16, #tpu.memory_space<vmem>>, %arg7: memref<1x128xf32, #tpu.memory_space<vmem>>, %arg8: memref<8x128xf32, #tpu.memory_space<vmem>>, %arg9: memref<8x128xf32, #tpu.memory_space<vmem>>, %arg10: memref<8x128xf32, #tpu.memory_space<vmem>>, %arg11: memref<8x8x512xf32, #tpu.memory_space<vmem>>) attributes {dimension_semantics = [#tpu.dimension_semantics<parallel>, #tpu.dimension_semantics<arbitrary>], iteration_bounds = array<i64: 1, 1>, scalar_prefetch = 0 : i64, scratch_operands = 3 : i64, tpu.core_type = #tpu.core_type<tc>, window_params = [{transform_indices = @transform_0, window_bounds = array<i64: 8, 8, 16>}, {pipeline_mode = #tpu.pipeline_mode<synchronous>, transform_indices = @transform_1, window_bounds = array<i64: 16, 512>}, {pipeline_mode = #tpu.pipeline_mode<synchronous>, transform_indices = @transform_2, window_bounds = array<i64: 128, 512>}, {pipeline_mode = #tpu.pipeline_mode<synchronous>, transform_indices = @transform_3, window_bounds = array<i64: 1, 512>}, {pipeline_mode = #tpu.pipeline_mode<synchronous>, transform_indices = @transform_4, window_bounds = array<i64: 128, 128>}, {pipeline_mode = #tpu.pipeline_mode<synchronous>, transform_indices = @transform_5, window_bounds = array<i64: 1, 128>}, {transform_indices = @transform_6, window_bounds = array<i64: 8, 128>}]} {
    %c0_i32 = arith.constant 0 : i32
    %0 = arith.cmpi eq, %arg1, %c0_i32 : i32
    %1 = arith.extui %0 : i1 to i32
    %c0_i32_0 = arith.constant 0 : i32
    %2 = arith.cmpi ne, %1, %c0_i32_0 : i32
    scf.if %2 {
      %cst_55 = arith.constant 0.000000e+00 : f32
      %189 = vector.broadcast %cst_55 : f32 to vector<8x128xf32>
      %c0_56 = arith.constant 0 : index
      %c0_57 = arith.constant 0 : index
      %190 = vector.load %arg9[%c0_56, %c0_57] : memref<8x128xf32, #tpu.memory_space<vmem>>, vector<8x128xf32>
      tpu.vector_store %arg9[%c0_56, %c0_57], %189 {strides = array<i32>} : memref<8x128xf32, #tpu.memory_space<vmem>>, vector<8x128xf32>,
      %cst_58 = arith.constant 0.000000e+00 : f32
      %191 = vector.broadcast %cst_58 : f32 to vector<8x128xf32>
      %c0_59 = arith.constant 0 : index
      %c0_60 = arith.constant 0 : index
      %192 = vector.load %arg10[%c0_59, %c0_60] : memref<8x128xf32, #tpu.memory_space<vmem>>, vector<8x128xf32>
      tpu.vector_store %arg10[%c0_59, %c0_60], %191 {strides = array<i32>} : memref<8x128xf32, #tpu.memory_space<vmem>>, vector<8x128xf32>,
    } else {
    }
    %c0 = arith.constant 0 : index
    %c0_1 = arith.constant 0 : index
    %c0_2 = arith.constant 0 : index
    %3 = vector.load %arg2[%c0, %c0_1, %c0_2] : memref<8x8x16xf32, #tpu.memory_space<vmem>>, vector<8x8x16xf32>
    %4 = vector.shape_cast %3 : vector<8x8x16xf32> to vector<64x16xf32>
    %5 = arith.truncf %4 : vector<64x16xf32> to vector<64x16xbf16>
    %c0_3 = arith.constant 0 : index
    %c0_4 = arith.constant 0 : index
    %6 = vector.load %arg3[%c0_3, %c0_4] : memref<16x512xbf16, #tpu.memory_space<vmem>>, vector<16x512xbf16>
    %cst = arith.constant dense<0.000000e+00> : vector<64x512xf32>
    %7 = tpu.matmul %5, %6, %cst {dimension_numbers = #tpu.dot_dimension_numbers<[1], [0], [0], [1], [0, 0, 1, 1], [], []>} : vector<64x16xbf16>, vector<16x512xbf16>, vector<64x512xf32> -> vector<64x512xf32>
    %c0_5 = arith.constant 0 : index
    %c0_6 = arith.constant 0 : index
    %8 = vector.load %arg5[%c0_5, %c0_6] : memref<1x512xf32, #tpu.memory_space<vmem>>, vector<1x512xf32>
    %9 = vector.broadcast %8 : vector<1x512xf32> to vector<64x512xf32>
    %10 = arith.addf %7, %9 : vector<64x512xf32>
    %11 = vector.shape_cast %10 : vector<64x512xf32> to vector<8x8x512xf32>
    %c0_7 = arith.constant 0 : index
    %c0_8 = arith.constant 0 : index
    %c0_9 = arith.constant 0 : index
    %12 = vector.load %arg11[%c0_7, %c0_8, %c0_9] : memref<8x8x512xf32, #tpu.memory_space<vmem>>, vector<8x8x512xf32>
    tpu.vector_store %arg11[%c0_7, %c0_8, %c0_9], %11 {strides = array<i32>} : memref<8x8x512xf32, #tpu.memory_space<vmem>>, vector<8x8x512xf32>,
    %c0_10 = arith.constant 0 : index
    %c0_11 = arith.constant 0 : index
    %13 = vector.load %arg4[%c0_10, %c0_11] : memref<128x512xbf16, #tpu.memory_space<vmem>>, vector<128x512xbf16>
    %c0_12 = arith.constant 0 : index
    %c0_13 = arith.constant 0 : index
    %14 = vector.load %arg9[%c0_12, %c0_13] : memref<8x128xf32, #tpu.memory_space<vmem>>, vector<8x128xf32>
    %c0_14 = arith.constant 0 : index
    %c0_15 = arith.constant 0 : index
    %15 = vector.load %arg10[%c0_14, %c0_15] : memref<8x128xf32, #tpu.memory_space<vmem>>, vector<8x128xf32>
    %c0_16 = arith.constant 0 : index
    %c0_17 = arith.constant 0 : index
    %c0_18 = arith.constant 0 : index
    %16 = vector.load %arg11[%c0_16, %c0_17, %c0_18] : memref<8x8x512xf32, #tpu.memory_space<vmem>>, vector<1x8x512xf32>
    %17 = vector.shape_cast %16 : vector<1x8x512xf32> to vector<8x512xf32>
    %18 = arith.truncf %14 : vector<8x128xf32> to vector<8x128xbf16>
    %cst_19 = arith.constant dense<0.000000e+00> : vector<8x512xf32>
    %19 = tpu.matmul %18, %13, %cst_19 {dimension_numbers = #tpu.dot_dimension_numbers<[1], [0], [0], [1], [0, 0, 1, 1], [], []>} : vector<8x128xbf16>, vector<128x512xbf16>, vector<8x512xf32> -> vector<8x512xf32>
    %20 = arith.addf %17, %19 : vector<8x512xf32>
    %21 = vector.extract_strided_slice %20 {offsets = [0, 0], sizes = [8, 384], strides = [1, 1]} : vector<8x512xf32> to vector<8x384xf32>
    %22 = arith.negf %21 : vector<8x384xf32>
    %23 = math.exp %22 : vector<8x384xf32>
    %cst_20 = arith.constant 1.000000e+00 : f32
    %24 = vector.broadcast %cst_20 : f32 to vector<8x384xf32>
    %25 = arith.addf %24, %23 : vector<8x384xf32>
    %26 = arith.divf %24, %25 : vector<8x384xf32>
    %27 = vector.extract_strided_slice %26 {offsets = [0, 0], sizes = [8, 128], strides = [1, 1]} : vector<8x384xf32> to vector<8x128xf32>
    %28 = vector.extract_strided_slice %26 {offsets = [0, 128], sizes = [8, 128], strides = [1, 1]} : vector<8x384xf32> to vector<8x128xf32>
    %29 = vector.extract_strided_slice %26 {offsets = [0, 256], sizes = [8, 128], strides = [1, 1]} : vector<8x384xf32> to vector<8x128xf32>
    %30 = vector.extract_strided_slice %20 {offsets = [0, 384], sizes = [8, 128], strides = [1, 1]} : vector<8x512xf32> to vector<8x128xf32>
    %31 = math.tanh %30 : vector<8x128xf32>
    %32 = arith.mulf %28, %15 : vector<8x128xf32>
    %33 = arith.mulf %27, %31 : vector<8x128xf32>
    %34 = arith.addf %32, %33 : vector<8x128xf32>
    %35 = math.tanh %34 : vector<8x128xf32>
    %36 = arith.mulf %29, %35 : vector<8x128xf32>
    %c1 = arith.constant 1 : index
    %c0_21 = arith.constant 0 : index
    %c0_22 = arith.constant 0 : index
    %37 = vector.load %arg11[%c1, %c0_21, %c0_22] : memref<8x8x512xf32, #tpu.memory_space<vmem>>, vector<1x8x512xf32>
    %38 = vector.shape_cast %37 : vector<1x8x512xf32> to vector<8x512xf32>
    %39 = arith.truncf %36 : vector<8x128xf32> to vector<8x128xbf16>
    %cst_23 = arith.constant dense<0.000000e+00> : vector<8x512xf32>
    %40 = tpu.matmul %39, %13, %cst_23 {dimension_numbers = #tpu.dot_dimension_numbers<[1], [0], [0], [1], [0, 0, 1, 1], [], []>} : vector<8x128xbf16>, vector<128x512xbf16>, vector<8x512xf32> -> vector<8x512xf32>
    %41 = arith.addf %38, %40 : vector<8x512xf32>
    %42 = vector.extract_strided_slice %41 {offsets = [0, 0], sizes = [8, 384], strides = [1, 1]} : vector<8x512xf32> to vector<8x384xf32>
    %43 = arith.negf %42 : vector<8x384xf32>
    %44 = math.exp %43 : vector<8x384xf32>
    %cst_24 = arith.constant 1.000000e+00 : f32
    %45 = vector.broadcast %cst_24 : f32 to vector<8x384xf32>
    %46 = arith.addf %45, %44 : vector<8x384xf32>
    %47 = arith.divf %45, %46 : vector<8x384xf32>
    %48 = vector.extract_strided_slice %47 {offsets = [0, 0], sizes = [8, 128], strides = [1, 1]} : vector<8x384xf32> to vector<8x128xf32>
    %49 = vector.extract_strided_slice %47 {offsets = [0, 128], sizes = [8, 128], strides = [1, 1]} : vector<8x384xf32> to vector<8x128xf32>
    %50 = vector.extract_strided_slice %47 {offsets = [0, 256], sizes = [8, 128], strides = [1, 1]} : vector<8x384xf32> to vector<8x128xf32>
    %51 = vector.extract_strided_slice %41 {offsets = [0, 384], sizes = [8, 128], strides = [1, 1]} : vector<8x512xf32> to vector<8x128xf32>
    %52 = math.tanh %51 : vector<8x128xf32>
    %53 = arith.mulf %49, %34 : vector<8x128xf32>
    %54 = arith.mulf %48, %52 : vector<8x128xf32>
    %55 = arith.addf %53, %54 : vector<8x128xf32>
    %56 = math.tanh %55 : vector<8x128xf32>
    %57 = arith.mulf %50, %56 : vector<8x128xf32>
    %c2 = arith.constant 2 : index
    %c0_25 = arith.constant 0 : index
    %c0_26 = arith.constant 0 : index
    %58 = vector.load %arg11[%c2, %c0_25, %c0_26] : memref<8x8x512xf32, #tpu.memory_space<vmem>>, vector<1x8x512xf32>
    %59 = vector.shape_cast %58 : vector<1x8x512xf32> to vector<8x512xf32>
    %60 = arith.truncf %57 : vector<8x128xf32> to vector<8x128xbf16>
    %cst_27 = arith.constant dense<0.000000e+00> : vector<8x512xf32>
    %61 = tpu.matmul %60, %13, %cst_27 {dimension_numbers = #tpu.dot_dimension_numbers<[1], [0], [0], [1], [0, 0, 1, 1], [], []>} : vector<8x128xbf16>, vector<128x512xbf16>, vector<8x512xf32> -> vector<8x512xf32>
    %62 = arith.addf %59, %61 : vector<8x512xf32>
    %63 = vector.extract_strided_slice %62 {offsets = [0, 0], sizes = [8, 384], strides = [1, 1]} : vector<8x512xf32> to vector<8x384xf32>
    %64 = arith.negf %63 : vector<8x384xf32>
    %65 = math.exp %64 : vector<8x384xf32>
    %cst_28 = arith.constant 1.000000e+00 : f32
    %66 = vector.broadcast %cst_28 : f32 to vector<8x384xf32>
    %67 = arith.addf %66, %65 : vector<8x384xf32>
    %68 = arith.divf %66, %67 : vector<8x384xf32>
    %69 = vector.extract_strided_slice %68 {offsets = [0, 0], sizes = [8, 128], strides = [1, 1]} : vector<8x384xf32> to vector<8x128xf32>
    %70 = vector.extract_strided_slice %68 {offsets = [0, 128], sizes = [8, 128], strides = [1, 1]} : vector<8x384xf32> to vector<8x128xf32>
    %71 = vector.extract_strided_slice %68 {offsets = [0, 256], sizes = [8, 128], strides = [1, 1]} : vector<8x384xf32> to vector<8x128xf32>
    %72 = vector.extract_strided_slice %62 {offsets = [0, 384], sizes = [8, 128], strides = [1, 1]} : vector<8x512xf32> to vector<8x128xf32>
    %73 = math.tanh %72 : vector<8x128xf32>
    %74 = arith.mulf %70, %55 : vector<8x128xf32>
    %75 = arith.mulf %69, %73 : vector<8x128xf32>
    %76 = arith.addf %74, %75 : vector<8x128xf32>
    %77 = math.tanh %76 : vector<8x128xf32>
    %78 = arith.mulf %71, %77 : vector<8x128xf32>
    %c3 = arith.constant 3 : index
    %c0_29 = arith.constant 0 : index
    %c0_30 = arith.constant 0 : index
    %79 = vector.load %arg11[%c3, %c0_29, %c0_30] : memref<8x8x512xf32, #tpu.memory_space<vmem>>, vector<1x8x512xf32>
    %80 = vector.shape_cast %79 : vector<1x8x512xf32> to vector<8x512xf32>
    %81 = arith.truncf %78 : vector<8x128xf32> to vector<8x128xbf16>
    %cst_31 = arith.constant dense<0.000000e+00> : vector<8x512xf32>
    %82 = tpu.matmul %81, %13, %cst_31 {dimension_numbers = #tpu.dot_dimension_numbers<[1], [0], [0], [1], [0, 0, 1, 1], [], []>} : vector<8x128xbf16>, vector<128x512xbf16>, vector<8x512xf32> -> vector<8x512xf32>
    %83 = arith.addf %80, %82 : vector<8x512xf32>
    %84 = vector.extract_strided_slice %83 {offsets = [0, 0], sizes = [8, 384], strides = [1, 1]} : vector<8x512xf32> to vector<8x384xf32>
    %85 = arith.negf %84 : vector<8x384xf32>
    %86 = math.exp %85 : vector<8x384xf32>
    %cst_32 = arith.constant 1.000000e+00 : f32
    %87 = vector.broadcast %cst_32 : f32 to vector<8x384xf32>
    %88 = arith.addf %87, %86 : vector<8x384xf32>
    %89 = arith.divf %87, %88 : vector<8x384xf32>
    %90 = vector.extract_strided_slice %89 {offsets = [0, 0], sizes = [8, 128], strides = [1, 1]} : vector<8x384xf32> to vector<8x128xf32>
    %91 = vector.extract_strided_slice %89 {offsets = [0, 128], sizes = [8, 128], strides = [1, 1]} : vector<8x384xf32> to vector<8x128xf32>
    %92 = vector.extract_strided_slice %89 {offsets = [0, 256], sizes = [8, 128], strides = [1, 1]} : vector<8x384xf32> to vector<8x128xf32>
    %93 = vector.extract_strided_slice %83 {offsets = [0, 384], sizes = [8, 128], strides = [1, 1]} : vector<8x512xf32> to vector<8x128xf32>
    %94 = math.tanh %93 : vector<8x128xf32>
    %95 = arith.mulf %91, %76 : vector<8x128xf32>
    %96 = arith.mulf %90, %94 : vector<8x128xf32>
    %97 = arith.addf %95, %96 : vector<8x128xf32>
    %98 = math.tanh %97 : vector<8x128xf32>
    %99 = arith.mulf %92, %98 : vector<8x128xf32>
    %c4 = arith.constant 4 : index
    %c0_33 = arith.constant 0 : index
    %c0_34 = arith.constant 0 : index
    %100 = vector.load %arg11[%c4, %c0_33, %c0_34] : memref<8x8x512xf32, #tpu.memory_space<vmem>>, vector<1x8x512xf32>
    %101 = vector.shape_cast %100 : vector<1x8x512xf32> to vector<8x512xf32>
    %102 = arith.truncf %99 : vector<8x128xf32> to vector<8x128xbf16>
    %cst_35 = arith.constant dense<0.000000e+00> : vector<8x512xf32>
    %103 = tpu.matmul %102, %13, %cst_35 {dimension_numbers = #tpu.dot_dimension_numbers<[1], [0], [0], [1], [0, 0, 1, 1], [], []>} : vector<8x128xbf16>, vector<128x512xbf16>, vector<8x512xf32> -> vector<8x512xf32>
    %104 = arith.addf %101, %103 : vector<8x512xf32>
    %105 = vector.extract_strided_slice %104 {offsets = [0, 0], sizes = [8, 384], strides = [1, 1]} : vector<8x512xf32> to vector<8x384xf32>
    %106 = arith.negf %105 : vector<8x384xf32>
    %107 = math.exp %106 : vector<8x384xf32>
    %cst_36 = arith.constant 1.000000e+00 : f32
    %108 = vector.broadcast %cst_36 : f32 to vector<8x384xf32>
    %109 = arith.addf %108, %107 : vector<8x384xf32>
    %110 = arith.divf %108, %109 : vector<8x384xf32>
    %111 = vector.extract_strided_slice %110 {offsets = [0, 0], sizes = [8, 128], strides = [1, 1]} : vector<8x384xf32> to vector<8x128xf32>
    %112 = vector.extract_strided_slice %110 {offsets = [0, 128], sizes = [8, 128], strides = [1, 1]} : vector<8x384xf32> to vector<8x128xf32>
    %113 = vector.extract_strided_slice %110 {offsets = [0, 256], sizes = [8, 128], strides = [1, 1]} : vector<8x384xf32> to vector<8x128xf32>
    %114 = vector.extract_strided_slice %104 {offsets = [0, 384], sizes = [8, 128], strides = [1, 1]} : vector<8x512xf32> to vector<8x128xf32>
    %115 = math.tanh %114 : vector<8x128xf32>
    %116 = arith.mulf %112, %97 : vector<8x128xf32>
    %117 = arith.mulf %111, %115 : vector<8x128xf32>
    %118 = arith.addf %116, %117 : vector<8x128xf32>
    %119 = math.tanh %118 : vector<8x128xf32>
    %120 = arith.mulf %113, %119 : vector<8x128xf32>
    %c5 = arith.constant 5 : index
    %c0_37 = arith.constant 0 : index
    %c0_38 = arith.constant 0 : index
    %121 = vector.load %arg11[%c5, %c0_37, %c0_38] : memref<8x8x512xf32, #tpu.memory_space<vmem>>, vector<1x8x512xf32>
    %122 = vector.shape_cast %121 : vector<1x8x512xf32> to vector<8x512xf32>
    %123 = arith.truncf %120 : vector<8x128xf32> to vector<8x128xbf16>
    %cst_39 = arith.constant dense<0.000000e+00> : vector<8x512xf32>
    %124 = tpu.matmul %123, %13, %cst_39 {dimension_numbers = #tpu.dot_dimension_numbers<[1], [0], [0], [1], [0, 0, 1, 1], [], []>} : vector<8x128xbf16>, vector<128x512xbf16>, vector<8x512xf32> -> vector<8x512xf32>
    %125 = arith.addf %122, %124 : vector<8x512xf32>
    %126 = vector.extract_strided_slice %125 {offsets = [0, 0], sizes = [8, 384], strides = [1, 1]} : vector<8x512xf32> to vector<8x384xf32>
    %127 = arith.negf %126 : vector<8x384xf32>
    %128 = math.exp %127 : vector<8x384xf32>
    %cst_40 = arith.constant 1.000000e+00 : f32
    %129 = vector.broadcast %cst_40 : f32 to vector<8x384xf32>
    %130 = arith.addf %129, %128 : vector<8x384xf32>
    %131 = arith.divf %129, %130 : vector<8x384xf32>
    %132 = vector.extract_strided_slice %131 {offsets = [0, 0], sizes = [8, 128], strides = [1, 1]} : vector<8x384xf32> to vector<8x128xf32>
    %133 = vector.extract_strided_slice %131 {offsets = [0, 128], sizes = [8, 128], strides = [1, 1]} : vector<8x384xf32> to vector<8x128xf32>
    %134 = vector.extract_strided_slice %131 {offsets = [0, 256], sizes = [8, 128], strides = [1, 1]} : vector<8x384xf32> to vector<8x128xf32>
    %135 = vector.extract_strided_slice %125 {offsets = [0, 384], sizes = [8, 128], strides = [1, 1]} : vector<8x512xf32> to vector<8x128xf32>
    %136 = math.tanh %135 : vector<8x128xf32>
    %137 = arith.mulf %133, %118 : vector<8x128xf32>
    %138 = arith.mulf %132, %136 : vector<8x128xf32>
    %139 = arith.addf %137, %138 : vector<8x128xf32>
    %140 = math.tanh %139 : vector<8x128xf32>
    %141 = arith.mulf %134, %140 : vector<8x128xf32>
    %c6 = arith.constant 6 : index
    %c0_41 = arith.constant 0 : index
    %c0_42 = arith.constant 0 : index
    %142 = vector.load %arg11[%c6, %c0_41, %c0_42] : memref<8x8x512xf32, #tpu.memory_space<vmem>>, vector<1x8x512xf32>
    %143 = vector.shape_cast %142 : vector<1x8x512xf32> to vector<8x512xf32>
    %144 = arith.truncf %141 : vector<8x128xf32> to vector<8x128xbf16>
    %cst_43 = arith.constant dense<0.000000e+00> : vector<8x512xf32>
    %145 = tpu.matmul %144, %13, %cst_43 {dimension_numbers = #tpu.dot_dimension_numbers<[1], [0], [0], [1], [0, 0, 1, 1], [], []>} : vector<8x128xbf16>, vector<128x512xbf16>, vector<8x512xf32> -> vector<8x512xf32>
    %146 = arith.addf %143, %145 : vector<8x512xf32>
    %147 = vector.extract_strided_slice %146 {offsets = [0, 0], sizes = [8, 384], strides = [1, 1]} : vector<8x512xf32> to vector<8x384xf32>
    %148 = arith.negf %147 : vector<8x384xf32>
    %149 = math.exp %148 : vector<8x384xf32>
    %cst_44 = arith.constant 1.000000e+00 : f32
    %150 = vector.broadcast %cst_44 : f32 to vector<8x384xf32>
    %151 = arith.addf %150, %149 : vector<8x384xf32>
    %152 = arith.divf %150, %151 : vector<8x384xf32>
    %153 = vector.extract_strided_slice %152 {offsets = [0, 0], sizes = [8, 128], strides = [1, 1]} : vector<8x384xf32> to vector<8x128xf32>
    %154 = vector.extract_strided_slice %152 {offsets = [0, 128], sizes = [8, 128], strides = [1, 1]} : vector<8x384xf32> to vector<8x128xf32>
    %155 = vector.extract_strided_slice %152 {offsets = [0, 256], sizes = [8, 128], strides = [1, 1]} : vector<8x384xf32> to vector<8x128xf32>
    %156 = vector.extract_strided_slice %146 {offsets = [0, 384], sizes = [8, 128], strides = [1, 1]} : vector<8x512xf32> to vector<8x128xf32>
    %157 = math.tanh %156 : vector<8x128xf32>
    %158 = arith.mulf %154, %139 : vector<8x128xf32>
    %159 = arith.mulf %153, %157 : vector<8x128xf32>
    %160 = arith.addf %158, %159 : vector<8x128xf32>
    %161 = math.tanh %160 : vector<8x128xf32>
    %162 = arith.mulf %155, %161 : vector<8x128xf32>
    %c7 = arith.constant 7 : index
    %c0_45 = arith.constant 0 : index
    %c0_46 = arith.constant 0 : index
    %163 = vector.load %arg11[%c7, %c0_45, %c0_46] : memref<8x8x512xf32, #tpu.memory_space<vmem>>, vector<1x8x512xf32>
    %164 = vector.shape_cast %163 : vector<1x8x512xf32> to vector<8x512xf32>
    %165 = arith.truncf %162 : vector<8x128xf32> to vector<8x128xbf16>
    %cst_47 = arith.constant dense<0.000000e+00> : vector<8x512xf32>
    %166 = tpu.matmul %165, %13, %cst_47 {dimension_numbers = #tpu.dot_dimension_numbers<[1], [0], [0], [1], [0, 0, 1, 1], [], []>} : vector<8x128xbf16>, vector<128x512xbf16>, vector<8x512xf32> -> vector<8x512xf32>
    %167 = arith.addf %164, %166 : vector<8x512xf32>
    %168 = vector.extract_strided_slice %167 {offsets = [0, 0], sizes = [8, 384], strides = [1, 1]} : vector<8x512xf32> to vector<8x384xf32>
    %169 = arith.negf %168 : vector<8x384xf32>
    %170 = math.exp %169 : vector<8x384xf32>
    %cst_48 = arith.constant 1.000000e+00 : f32
    %171 = vector.broadcast %cst_48 : f32 to vector<8x384xf32>
    %172 = arith.addf %171, %170 : vector<8x384xf32>
    %173 = arith.divf %171, %172 : vector<8x384xf32>
    %174 = vector.extract_strided_slice %173 {offsets = [0, 0], sizes = [8, 128], strides = [1, 1]} : vector<8x384xf32> to vector<8x128xf32>
    %175 = vector.extract_strided_slice %173 {offsets = [0, 128], sizes = [8, 128], strides = [1, 1]} : vector<8x384xf32> to vector<8x128xf32>
    %176 = vector.extract_strided_slice %173 {offsets = [0, 256], sizes = [8, 128], strides = [1, 1]} : vector<8x384xf32> to vector<8x128xf32>
    %177 = vector.extract_strided_slice %167 {offsets = [0, 384], sizes = [8, 128], strides = [1, 1]} : vector<8x512xf32> to vector<8x128xf32>
    %178 = math.tanh %177 : vector<8x128xf32>
    %179 = arith.mulf %175, %160 : vector<8x128xf32>
    %180 = arith.mulf %174, %178 : vector<8x128xf32>
    %181 = arith.addf %179, %180 : vector<8x128xf32>
    %182 = math.tanh %181 : vector<8x128xf32>
    %183 = arith.mulf %176, %182 : vector<8x128xf32>
    %c0_49 = arith.constant 0 : index
    %c0_50 = arith.constant 0 : index
    %184 = vector.load %arg9[%c0_49, %c0_50] : memref<8x128xf32, #tpu.memory_space<vmem>>, vector<8x128xf32>
    tpu.vector_store %arg9[%c0_49, %c0_50], %183 {strides = array<i32>} : memref<8x128xf32, #tpu.memory_space<vmem>>, vector<8x128xf32>,
    %c0_51 = arith.constant 0 : index
    %c0_52 = arith.constant 0 : index
    %185 = vector.load %arg10[%c0_51, %c0_52] : memref<8x128xf32, #tpu.memory_space<vmem>>, vector<8x128xf32>
    tpu.vector_store %arg10[%c0_51, %c0_52], %181 {strides = array<i32>} : memref<8x128xf32, #tpu.memory_space<vmem>>, vector<8x128xf32>,
    %c0_i32_53 = arith.constant 0 : i32
    %186 = arith.cmpi eq, %arg1, %c0_i32_53 : i32
    %187 = arith.extui %186 : i1 to i32
    %c0_i32_54 = arith.constant 0 : i32
    %188 = arith.cmpi ne, %187, %c0_i32_54 : i32
    scf.if %188 {
      %189 = arith.truncf %183 : vector<8x128xf32> to vector<8x128xbf16>
      %c0_55 = arith.constant 0 : index
      %c0_56 = arith.constant 0 : index
      %190 = vector.load %arg6[%c0_55, %c0_56] : memref<128x128xbf16, #tpu.memory_space<vmem>>, vector<128x128xbf16>
      %cst_57 = arith.constant dense<0.000000e+00> : vector<8x128xf32>
      %191 = tpu.matmul %189, %190, %cst_57 {dimension_numbers = #tpu.dot_dimension_numbers<[1], [0], [0], [1], [0, 0, 1, 1], [], []>} : vector<8x128xbf16>, vector<128x128xbf16>, vector<8x128xf32> -> vector<8x128xf32>
      %c0_58 = arith.constant 0 : index
      %c0_59 = arith.constant 0 : index
      %192 = vector.load %arg7[%c0_58, %c0_59] : memref<1x128xf32, #tpu.memory_space<vmem>>, vector<1x128xf32>
      %193 = vector.broadcast %192 : vector<1x128xf32> to vector<8x128xf32>
      %194 = arith.addf %191, %193 : vector<8x128xf32>
      %c0_60 = arith.constant 0 : index
      %c0_61 = arith.constant 0 : index
      %195 = vector.load %arg8[%c0_60, %c0_61] : memref<8x128xf32, #tpu.memory_space<vmem>>, vector<8x128xf32>
      tpu.vector_store %arg8[%c0_60, %c0_61], %194 {strides = array<i32>} : memref<8x128xf32, #tpu.memory_space<vmem>>, vector<8x128xf32>,
    } else {
    }
    return
  }
  func.func @transform_0(%arg0: i32, %arg1: i32) -> (i32, i32, i32) {
    %c0_i32 = arith.constant 0 : i32
    %c0_i32_0 = arith.constant 0 : i32
    return %arg1, %arg0, %c0_i32 : i32, i32, i32
  }
  func.func @transform_1(%arg0: i32, %arg1: i32) -> (i32, i32) {
    %c0_i32 = arith.constant 0 : i32
    %c0_i32_0 = arith.constant 0 : i32
    %c0_i32_1 = arith.constant 0 : i32
    return %c0_i32, %c0_i32_0 : i32, i32
  }
  func.func @transform_2(%arg0: i32, %arg1: i32) -> (i32, i32) {
    %c0_i32 = arith.constant 0 : i32
    %c0_i32_0 = arith.constant 0 : i32
    %c0_i32_1 = arith.constant 0 : i32
    return %c0_i32, %c0_i32_0 : i32, i32
  }
  func.func @transform_3(%arg0: i32, %arg1: i32) -> (i32, i32) {
    %c0_i32 = arith.constant 0 : i32
    %c0_i32_0 = arith.constant 0 : i32
    %c0_i32_1 = arith.constant 0 : i32
    return %c0_i32, %c0_i32_0 : i32, i32
  }
  func.func @transform_4(%arg0: i32, %arg1: i32) -> (i32, i32) {
    %c0_i32 = arith.constant 0 : i32
    %c0_i32_0 = arith.constant 0 : i32
    %c0_i32_1 = arith.constant 0 : i32
    return %c0_i32, %c0_i32_0 : i32, i32
  }
  func.func @transform_5(%arg0: i32, %arg1: i32) -> (i32, i32) {
    %c0_i32 = arith.constant 0 : i32
    %c0_i32_0 = arith.constant 0 : i32
    %c0_i32_1 = arith.constant 0 : i32
    return %c0_i32, %c0_i32_0 : i32, i32
  }
  func.func @transform_6(%arg0: i32, %arg1: i32) -> (i32, i32) {
    %c0_i32 = arith.constant 0 : i32
    %c0_i32_0 = arith.constant 0 : i32
    return %arg0, %c0_i32 : i32, i32
  }
}

module attributes {stable_mosaic.version = 11 : i64} {
  func.func @_lstm_fc_kernel(%arg0: i32, %arg1: i32, %arg2: memref<8x8x16xf32, #tpu.memory_space<vmem>>, %arg3: memref<16x512xbf16, #tpu.memory_space<vmem>>, %arg4: memref<128x512xbf16, #tpu.memory_space<vmem>>, %arg5: memref<1x512xf32, #tpu.memory_space<vmem>>, %arg6: memref<128x128xbf16, #tpu.memory_space<vmem>>, %arg7: memref<1x128xf32, #tpu.memory_space<vmem>>, %arg8: memref<8x128xf32, #tpu.memory_space<vmem>>, %arg9: memref<8x128xf32, #tpu.memory_space<vmem>>, %arg10: memref<8x128xf32, #tpu.memory_space<vmem>>, %arg11: memref<8x8x512xf32, #tpu.memory_space<vmem>>) attributes {dimension_semantics = [#tpu.dimension_semantics<parallel>, #tpu.dimension_semantics<arbitrary>], iteration_bounds = array<i64: 1, 1>, scalar_prefetch = 0 : i64, scratch_operands = 3 : i64, tpu.core_type = #tpu.core_type<tc>, window_params = [{transform_indices = @transform_0, window_bounds = array<i64: 8, 8, 16>}, {pipeline_mode = #tpu.pipeline_mode<synchronous>, transform_indices = @transform_1, window_bounds = array<i64: 16, 512>}, {pipeline_mode = #tpu.pipeline_mode<synchronous>, transform_indices = @transform_2, window_bounds = array<i64: 128, 512>}, {pipeline_mode = #tpu.pipeline_mode<synchronous>, transform_indices = @transform_3, window_bounds = array<i64: 1, 512>}, {pipeline_mode = #tpu.pipeline_mode<synchronous>, transform_indices = @transform_4, window_bounds = array<i64: 128, 128>}, {pipeline_mode = #tpu.pipeline_mode<synchronous>, transform_indices = @transform_5, window_bounds = array<i64: 1, 128>}, {transform_indices = @transform_6, window_bounds = array<i64: 8, 128>}]} {
    %c0_i32 = arith.constant 0 : i32
    %0 = arith.cmpi eq, %arg1, %c0_i32 : i32
    %1 = arith.extui %0 : i1 to i32
    %c0_i32_0 = arith.constant 0 : i32
    %2 = arith.cmpi ne, %1, %c0_i32_0 : i32
    scf.if %2 {
      %cst_55 = arith.constant 0.000000e+00 : f32
      %189 = vector.broadcast %cst_55 : f32 to vector<8x128xf32>
      %c0_56 = arith.constant 0 : index
      %c0_57 = arith.constant 0 : index
      %190 = vector.load %arg9[%c0_56, %c0_57] : memref<8x128xf32, #tpu.memory_space<vmem>>, vector<8x128xf32>
      tpu.vector_store %arg9[%c0_56, %c0_57], %189 {strides = array<i32>} : memref<8x128xf32, #tpu.memory_space<vmem>>, vector<8x128xf32>,
      %cst_58 = arith.constant 0.000000e+00 : f32
      %191 = vector.broadcast %cst_58 : f32 to vector<8x128xf32>
      %c0_59 = arith.constant 0 : index
      %c0_60 = arith.constant 0 : index
      %192 = vector.load %arg10[%c0_59, %c0_60] : memref<8x128xf32, #tpu.memory_space<vmem>>, vector<8x128xf32>
      tpu.vector_store %arg10[%c0_59, %c0_60], %191 {strides = array<i32>} : memref<8x128xf32, #tpu.memory_space<vmem>>, vector<8x128xf32>,
    } else {
    }
    %c0 = arith.constant 0 : index
    %c0_1 = arith.constant 0 : index
    %c0_2 = arith.constant 0 : index
    %3 = vector.load %arg2[%c0, %c0_1, %c0_2] : memref<8x8x16xf32, #tpu.memory_space<vmem>>, vector<8x8x16xf32>
    %4 = vector.shape_cast %3 : vector<8x8x16xf32> to vector<64x16xf32>
    %5 = arith.truncf %4 : vector<64x16xf32> to vector<64x16xbf16>
    %c0_3 = arith.constant 0 : index
    %c0_4 = arith.constant 0 : index
    %6 = vector.load %arg3[%c0_3, %c0_4] : memref<16x512xbf16, #tpu.memory_space<vmem>>, vector<16x512xbf16>
    %cst = arith.constant dense<0.000000e+00> : vector<64x512xf32>
    %7 = tpu.matmul %5, %6, %cst {dimension_numbers = #tpu.dot_dimension_numbers<[1], [0], [0], [1], [0, 0, 1, 1], [], []>} : vector<64x16xbf16>, vector<16x512xbf16>, vector<64x512xf32> -> vector<64x512xf32>
    %c0_5 = arith.constant 0 : index
    %c0_6 = arith.constant 0 : index
    %8 = vector.load %arg5[%c0_5, %c0_6] : memref<1x512xf32, #tpu.memory_space<vmem>>, vector<1x512xf32>
    %9 = vector.broadcast %8 : vector<1x512xf32> to vector<64x512xf32>
    %10 = arith.addf %7, %9 : vector<64x512xf32>
    %11 = vector.shape_cast %10 : vector<64x512xf32> to vector<8x8x512xf32>
    %c0_7 = arith.constant 0 : index
    %c0_8 = arith.constant 0 : index
    %c0_9 = arith.constant 0 : index
    %12 = vector.load %arg11[%c0_7, %c0_8, %c0_9] : memref<8x8x512xf32, #tpu.memory_space<vmem>>, vector<8x8x512xf32>
    tpu.vector_store %arg11[%c0_7, %c0_8, %c0_9], %11 {strides = array<i32>} : memref<8x8x512xf32, #tpu.memory_space<vmem>>, vector<8x8x512xf32>,
    %c0_10 = arith.constant 0 : index
    %c0_11 = arith.constant 0 : index
    %13 = vector.load %arg4[%c0_10, %c0_11] : memref<128x512xbf16, #tpu.memory_space<vmem>>, vector<128x512xbf16>
    %c0_12 = arith.constant 0 : index
    %c0_13 = arith.constant 0 : index
    %14 = vector.load %arg9[%c0_12, %c0_13] : memref<8x128xf32, #tpu.memory_space<vmem>>, vector<8x128xf32>
    %c0_14 = arith.constant 0 : index
    %c0_15 = arith.constant 0 : index
    %15 = vector.load %arg10[%c0_14, %c0_15] : memref<8x128xf32, #tpu.memory_space<vmem>>, vector<8x128xf32>
    %c0_16 = arith.constant 0 : index
    %c0_17 = arith.constant 0 : index
    %c0_18 = arith.constant 0 : index
    %16 = vector.load %arg11[%c0_16, %c0_17, %c0_18] : memref<8x8x512xf32, #tpu.memory_space<vmem>>, vector<1x8x512xf32>
    %17 = vector.shape_cast %16 : vector<1x8x512xf32> to vector<8x512xf32>
    %18 = arith.truncf %14 : vector<8x128xf32> to vector<8x128xbf16>
    %cst_19 = arith.constant dense<0.000000e+00> : vector<8x512xf32>
    %19 = tpu.matmul %18, %13, %cst_19 {dimension_numbers = #tpu.dot_dimension_numbers<[1], [0], [0], [1], [0, 0, 1, 1], [], []>} : vector<8x128xbf16>, vector<128x512xbf16>, vector<8x512xf32> -> vector<8x512xf32>
    %20 = arith.addf %17, %19 : vector<8x512xf32>
    %21 = vector.extract_strided_slice %20 {offsets = [0, 0], sizes = [8, 384], strides = [1, 1]} : vector<8x512xf32> to vector<8x384xf32>
    %22 = arith.negf %21 : vector<8x384xf32>
    %23 = math.exp %22 : vector<8x384xf32>
    %cst_20 = arith.constant 1.000000e+00 : f32
    %24 = vector.broadcast %cst_20 : f32 to vector<8x384xf32>
    %25 = arith.addf %24, %23 : vector<8x384xf32>
    %26 = arith.divf %24, %25 : vector<8x384xf32>
    %27 = vector.extract_strided_slice %26 {offsets = [0, 0], sizes = [8, 128], strides = [1, 1]} : vector<8x384xf32> to vector<8x128xf32>
    %28 = vector.extract_strided_slice %26 {offsets = [0, 128], sizes = [8, 128], strides = [1, 1]} : vector<8x384xf32> to vector<8x128xf32>
    %29 = vector.extract_strided_slice %26 {offsets = [0, 256], sizes = [8, 128], strides = [1, 1]} : vector<8x384xf32> to vector<8x128xf32>
    %30 = vector.extract_strided_slice %20 {offsets = [0, 384], sizes = [8, 128], strides = [1, 1]} : vector<8x512xf32> to vector<8x128xf32>
    %31 = math.tanh %30 : vector<8x128xf32>
    %32 = arith.mulf %28, %15 : vector<8x128xf32>
    %33 = arith.mulf %27, %31 : vector<8x128xf32>
    %34 = arith.addf %32, %33 : vector<8x128xf32>
    %35 = math.tanh %34 : vector<8x128xf32>
    %36 = arith.mulf %29, %35 : vector<8x128xf32>
    %c1 = arith.constant 1 : index
    %c0_21 = arith.constant 0 : index
    %c0_22 = arith.constant 0 : index
    %37 = vector.load %arg11[%c1, %c0_21, %c0_22] : memref<8x8x512xf32, #tpu.memory_space<vmem>>, vector<1x8x512xf32>
    %38 = vector.shape_cast %37 : vector<1x8x512xf32> to vector<8x512xf32>
    %39 = arith.truncf %36 : vector<8x128xf32> to vector<8x128xbf16>
    %cst_23 = arith.constant dense<0.000000e+00> : vector<8x512xf32>
    %40 = tpu.matmul %39, %13, %cst_23 {dimension_numbers = #tpu.dot_dimension_numbers<[1], [0], [0], [1], [0, 0, 1, 1], [], []>} : vector<8x128xbf16>, vector<128x512xbf16>, vector<8x512xf32> -> vector<8x512xf32>
    %41 = arith.addf %38, %40 : vector<8x512xf32>
    %42 = vector.extract_strided_slice %41 {offsets = [0, 0], sizes = [8, 384], strides = [1, 1]} : vector<8x512xf32> to vector<8x384xf32>
    %43 = arith.negf %42 : vector<8x384xf32>
    %44 = math.exp %43 : vector<8x384xf32>
    %cst_24 = arith.constant 1.000000e+00 : f32
    %45 = vector.broadcast %cst_24 : f32 to vector<8x384xf32>
    %46 = arith.addf %45, %44 : vector<8x384xf32>
    %47 = arith.divf %45, %46 : vector<8x384xf32>
    %48 = vector.extract_strided_slice %47 {offsets = [0, 0], sizes = [8, 128], strides = [1, 1]} : vector<8x384xf32> to vector<8x128xf32>
    %49 = vector.extract_strided_slice %47 {offsets = [0, 128], sizes = [8, 128], strides = [1, 1]} : vector<8x384xf32> to vector<8x128xf32>
    %50 = vector.extract_strided_slice %47 {offsets = [0, 256], sizes = [8, 128], strides = [1, 1]} : vector<8x384xf32> to vector<8x128xf32>
    %51 = vector.extract_strided_slice %41 {offsets = [0, 384], sizes = [8, 128], strides = [1, 1]} : vector<8x512xf32> to vector<8x128xf32>
    %52 = math.tanh %51 : vector<8x128xf32>
    %53 = arith.mulf %49, %34 : vector<8x128xf32>
    %54 = arith.mulf %48, %52 : vector<8x128xf32>
    %55 = arith.addf %53, %54 : vector<8x128xf32>
    %56 = math.tanh %55 : vector<8x128xf32>
    %57 = arith.mulf %50, %56 : vector<8x128xf32>
    %c2 = arith.constant 2 : index
    %c0_25 = arith.constant 0 : index
    %c0_26 = arith.constant 0 : index
    %58 = vector.load %arg11[%c2, %c0_25, %c0_26] : memref<8x8x512xf32, #tpu.memory_space<vmem>>, vector<1x8x512xf32>
    %59 = vector.shape_cast %58 : vector<1x8x512xf32> to vector<8x512xf32>
    %60 = arith.truncf %57 : vector<8x128xf32> to vector<8x128xbf16>
    %cst_27 = arith.constant dense<0.000000e+00> : vector<8x512xf32>
    %61 = tpu.matmul %60, %13, %cst_27 {dimension_numbers = #tpu.dot_dimension_numbers<[1], [0], [0], [1], [0, 0, 1, 1], [], []>} : vector<8x128xbf16>, vector<128x512xbf16>, vector<8x512xf32> -> vector<8x512xf32>
    %62 = arith.addf %59, %61 : vector<8x512xf32>
    %63 = vector.extract_strided_slice %62 {offsets = [0, 0], sizes = [8, 384], strides = [1, 1]} : vector<8x512xf32> to vector<8x384xf32>
    %64 = arith.negf %63 : vector<8x384xf32>
    %65 = math.exp %64 : vector<8x384xf32>
    %cst_28 = arith.constant 1.000000e+00 : f32
    %66 = vector.broadcast %cst_28 : f32 to vector<8x384xf32>
    %67 = arith.addf %66, %65 : vector<8x384xf32>
    %68 = arith.divf %66, %67 : vector<8x384xf32>
    %69 = vector.extract_strided_slice %68 {offsets = [0, 0], sizes = [8, 128], strides = [1, 1]} : vector<8x384xf32> to vector<8x128xf32>
    %70 = vector.extract_strided_slice %68 {offsets = [0, 128], sizes = [8, 128], strides = [1, 1]} : vector<8x384xf32> to vector<8x128xf32>
    %71 = vector.extract_strided_slice %68 {offsets = [0, 256], sizes = [8, 128], strides = [1, 1]} : vector<8x384xf32> to vector<8x128xf32>
    %72 = vector.extract_strided_slice %62 {offsets = [0, 384], sizes = [8, 128], strides = [1, 1]} : vector<8x512xf32> to vector<8x128xf32>
    %73 = math.tanh %72 : vector<8x128xf32>
    %74 = arith.mulf %70, %55 : vector<8x128xf32>
    %75 = arith.mulf %69, %73 : vector<8x128xf32>
    %76 = arith.addf %74, %75 : vector<8x128xf32>
    %77 = math.tanh %76 : vector<8x128xf32>
    %78 = arith.mulf %71, %77 : vector<8x128xf32>
    %c3 = arith.constant 3 : index
    %c0_29 = arith.constant 0 : index
    %c0_30 = arith.constant 0 : index
    %79 = vector.load %arg11[%c3, %c0_29, %c0_30] : memref<8x8x512xf32, #tpu.memory_space<vmem>>, vector<1x8x512xf32>
    %80 = vector.shape_cast %79 : vector<1x8x512xf32> to vector<8x512xf32>
    %81 = arith.truncf %78 : vector<8x128xf32> to vector<8x128xbf16>
    %cst_31 = arith.constant dense<0.000000e+00> : vector<8x512xf32>
    %82 = tpu.matmul %81, %13, %cst_31 {dimension_numbers = #tpu.dot_dimension_numbers<[1], [0], [0], [1], [0, 0, 1, 1], [], []>} : vector<8x128xbf16>, vector<128x512xbf16>, vector<8x512xf32> -> vector<8x512xf32>
    %83 = arith.addf %80, %82 : vector<8x512xf32>
    %84 = vector.extract_strided_slice %83 {offsets = [0, 0], sizes = [8, 384], strides = [1, 1]} : vector<8x512xf32> to vector<8x384xf32>
    %85 = arith.negf %84 : vector<8x384xf32>
    %86 = math.exp %85 : vector<8x384xf32>
    %cst_32 = arith.constant 1.000000e+00 : f32
    %87 = vector.broadcast %cst_32 : f32 to vector<8x384xf32>
    %88 = arith.addf %87, %86 : vector<8x384xf32>
    %89 = arith.divf %87, %88 : vector<8x384xf32>
    %90 = vector.extract_strided_slice %89 {offsets = [0, 0], sizes = [8, 128], strides = [1, 1]} : vector<8x384xf32> to vector<8x128xf32>
    %91 = vector.extract_strided_slice %89 {offsets = [0, 128], sizes = [8, 128], strides = [1, 1]} : vector<8x384xf32> to vector<8x128xf32>
    %92 = vector.extract_strided_slice %89 {offsets = [0, 256], sizes = [8, 128], strides = [1, 1]} : vector<8x384xf32> to vector<8x128xf32>
    %93 = vector.extract_strided_slice %83 {offsets = [0, 384], sizes = [8, 128], strides = [1, 1]} : vector<8x512xf32> to vector<8x128xf32>
    %94 = math.tanh %93 : vector<8x128xf32>
    %95 = arith.mulf %91, %76 : vector<8x128xf32>
    %96 = arith.mulf %90, %94 : vector<8x128xf32>
    %97 = arith.addf %95, %96 : vector<8x128xf32>
    %98 = math.tanh %97 : vector<8x128xf32>
    %99 = arith.mulf %92, %98 : vector<8x128xf32>
    %c4 = arith.constant 4 : index
    %c0_33 = arith.constant 0 : index
    %c0_34 = arith.constant 0 : index
    %100 = vector.load %arg11[%c4, %c0_33, %c0_34] : memref<8x8x512xf32, #tpu.memory_space<vmem>>, vector<1x8x512xf32>
    %101 = vector.shape_cast %100 : vector<1x8x512xf32> to vector<8x512xf32>
    %102 = arith.truncf %99 : vector<8x128xf32> to vector<8x128xbf16>
    %cst_35 = arith.constant dense<0.000000e+00> : vector<8x512xf32>
    %103 = tpu.matmul %102, %13, %cst_35 {dimension_numbers = #tpu.dot_dimension_numbers<[1], [0], [0], [1], [0, 0, 1, 1], [], []>} : vector<8x128xbf16>, vector<128x512xbf16>, vector<8x512xf32> -> vector<8x512xf32>
    %104 = arith.addf %101, %103 : vector<8x512xf32>
    %105 = vector.extract_strided_slice %104 {offsets = [0, 0], sizes = [8, 384], strides = [1, 1]} : vector<8x512xf32> to vector<8x384xf32>
    %106 = arith.negf %105 : vector<8x384xf32>
    %107 = math.exp %106 : vector<8x384xf32>
    %cst_36 = arith.constant 1.000000e+00 : f32
    %108 = vector.broadcast %cst_36 : f32 to vector<8x384xf32>
    %109 = arith.addf %108, %107 : vector<8x384xf32>
    %110 = arith.divf %108, %109 : vector<8x384xf32>
    %111 = vector.extract_strided_slice %110 {offsets = [0, 0], sizes = [8, 128], strides = [1, 1]} : vector<8x384xf32> to vector<8x128xf32>
    %112 = vector.extract_strided_slice %110 {offsets = [0, 128], sizes = [8, 128], strides = [1, 1]} : vector<8x384xf32> to vector<8x128xf32>
    %113 = vector.extract_strided_slice %110 {offsets = [0, 256], sizes = [8, 128], strides = [1, 1]} : vector<8x384xf32> to vector<8x128xf32>
    %114 = vector.extract_strided_slice %104 {offsets = [0, 384], sizes = [8, 128], strides = [1, 1]} : vector<8x512xf32> to vector<8x128xf32>
    %115 = math.tanh %114 : vector<8x128xf32>
    %116 = arith.mulf %112, %97 : vector<8x128xf32>
    %117 = arith.mulf %111, %115 : vector<8x128xf32>
    %118 = arith.addf %116, %117 : vector<8x128xf32>
    %119 = math.tanh %118 : vector<8x128xf32>
    %120 = arith.mulf %113, %119 : vector<8x128xf32>
    %c5 = arith.constant 5 : index
    %c0_37 = arith.constant 0 : index
    %c0_38 = arith.constant 0 : index
    %121 = vector.load %arg11[%c5, %c0_37, %c0_38] : memref<8x8x512xf32, #tpu.memory_space<vmem>>, vector<1x8x512xf32>
    %122 = vector.shape_cast %121 : vector<1x8x512xf32> to vector<8x512xf32>
    %123 = arith.truncf %120 : vector<8x128xf32> to vector<8x128xbf16>
    %cst_39 = arith.constant dense<0.000000e+00> : vector<8x512xf32>
    %124 = tpu.matmul %123, %13, %cst_39 {dimension_numbers = #tpu.dot_dimension_numbers<[1], [0], [0], [1], [0, 0, 1, 1], [], []>} : vector<8x128xbf16>, vector<128x512xbf16>, vector<8x512xf32> -> vector<8x512xf32>
    %125 = arith.addf %122, %124 : vector<8x512xf32>
    %126 = vector.extract_strided_slice %125 {offsets = [0, 0], sizes = [8, 384], strides = [1, 1]} : vector<8x512xf32> to vector<8x384xf32>
    %127 = arith.negf %126 : vector<8x384xf32>
    %128 = math.exp %127 : vector<8x384xf32>
    %cst_40 = arith.constant 1.000000e+00 : f32
    %129 = vector.broadcast %cst_40 : f32 to vector<8x384xf32>
    %130 = arith.addf %129, %128 : vector<8x384xf32>
    %131 = arith.divf %129, %130 : vector<8x384xf32>
    %132 = vector.extract_strided_slice %131 {offsets = [0, 0], sizes = [8, 128], strides = [1, 1]} : vector<8x384xf32> to vector<8x128xf32>
    %133 = vector.extract_strided_slice %131 {offsets = [0, 128], sizes = [8, 128], strides = [1, 1]} : vector<8x384xf32> to vector<8x128xf32>
    %134 = vector.extract_strided_slice %131 {offsets = [0, 256], sizes = [8, 128], strides = [1, 1]} : vector<8x384xf32> to vector<8x128xf32>
    %135 = vector.extract_strided_slice %125 {offsets = [0, 384], sizes = [8, 128], strides = [1, 1]} : vector<8x512xf32> to vector<8x128xf32>
    %136 = math.tanh %135 : vector<8x128xf32>
    %137 = arith.mulf %133, %118 : vector<8x128xf32>
    %138 = arith.mulf %132, %136 : vector<8x128xf32>
    %139 = arith.addf %137, %138 : vector<8x128xf32>
    %140 = math.tanh %139 : vector<8x128xf32>
    %141 = arith.mulf %134, %140 : vector<8x128xf32>
    %c6 = arith.constant 6 : index
    %c0_41 = arith.constant 0 : index
    %c0_42 = arith.constant 0 : index
    %142 = vector.load %arg11[%c6, %c0_41, %c0_42] : memref<8x8x512xf32, #tpu.memory_space<vmem>>, vector<1x8x512xf32>
    %143 = vector.shape_cast %142 : vector<1x8x512xf32> to vector<8x512xf32>
    %144 = arith.truncf %141 : vector<8x128xf32> to vector<8x128xbf16>
    %cst_43 = arith.constant dense<0.000000e+00> : vector<8x512xf32>
    %145 = tpu.matmul %144, %13, %cst_43 {dimension_numbers = #tpu.dot_dimension_numbers<[1], [0], [0], [1], [0, 0, 1, 1], [], []>} : vector<8x128xbf16>, vector<128x512xbf16>, vector<8x512xf32> -> vector<8x512xf32>
    %146 = arith.addf %143, %145 : vector<8x512xf32>
    %147 = vector.extract_strided_slice %146 {offsets = [0, 0], sizes = [8, 384], strides = [1, 1]} : vector<8x512xf32> to vector<8x384xf32>
    %148 = arith.negf %147 : vector<8x384xf32>
    %149 = math.exp %148 : vector<8x384xf32>
    %cst_44 = arith.constant 1.000000e+00 : f32
    %150 = vector.broadcast %cst_44 : f32 to vector<8x384xf32>
    %151 = arith.addf %150, %149 : vector<8x384xf32>
    %152 = arith.divf %150, %151 : vector<8x384xf32>
    %153 = vector.extract_strided_slice %152 {offsets = [0, 0], sizes = [8, 128], strides = [1, 1]} : vector<8x384xf32> to vector<8x128xf32>
    %154 = vector.extract_strided_slice %152 {offsets = [0, 128], sizes = [8, 128], strides = [1, 1]} : vector<8x384xf32> to vector<8x128xf32>
    %155 = vector.extract_strided_slice %152 {offsets = [0, 256], sizes = [8, 128], strides = [1, 1]} : vector<8x384xf32> to vector<8x128xf32>
    %156 = vector.extract_strided_slice %146 {offsets = [0, 384], sizes = [8, 128], strides = [1, 1]} : vector<8x512xf32> to vector<8x128xf32>
    %157 = math.tanh %156 : vector<8x128xf32>
    %158 = arith.mulf %154, %139 : vector<8x128xf32>
    %159 = arith.mulf %153, %157 : vector<8x128xf32>
    %160 = arith.addf %158, %159 : vector<8x128xf32>
    %161 = math.tanh %160 : vector<8x128xf32>
    %162 = arith.mulf %155, %161 : vector<8x128xf32>
    %c7 = arith.constant 7 : index
    %c0_45 = arith.constant 0 : index
    %c0_46 = arith.constant 0 : index
    %163 = vector.load %arg11[%c7, %c0_45, %c0_46] : memref<8x8x512xf32, #tpu.memory_space<vmem>>, vector<1x8x512xf32>
    %164 = vector.shape_cast %163 : vector<1x8x512xf32> to vector<8x512xf32>
    %165 = arith.truncf %162 : vector<8x128xf32> to vector<8x128xbf16>
    %cst_47 = arith.constant dense<0.000000e+00> : vector<8x512xf32>
    %166 = tpu.matmul %165, %13, %cst_47 {dimension_numbers = #tpu.dot_dimension_numbers<[1], [0], [0], [1], [0, 0, 1, 1], [], []>} : vector<8x128xbf16>, vector<128x512xbf16>, vector<8x512xf32> -> vector<8x512xf32>
    %167 = arith.addf %164, %166 : vector<8x512xf32>
    %168 = vector.extract_strided_slice %167 {offsets = [0, 0], sizes = [8, 384], strides = [1, 1]} : vector<8x512xf32> to vector<8x384xf32>
    %169 = arith.negf %168 : vector<8x384xf32>
    %170 = math.exp %169 : vector<8x384xf32>
    %cst_48 = arith.constant 1.000000e+00 : f32
    %171 = vector.broadcast %cst_48 : f32 to vector<8x384xf32>
    %172 = arith.addf %171, %170 : vector<8x384xf32>
    %173 = arith.divf %171, %172 : vector<8x384xf32>
    %174 = vector.extract_strided_slice %173 {offsets = [0, 0], sizes = [8, 128], strides = [1, 1]} : vector<8x384xf32> to vector<8x128xf32>
    %175 = vector.extract_strided_slice %173 {offsets = [0, 128], sizes = [8, 128], strides = [1, 1]} : vector<8x384xf32> to vector<8x128xf32>
    %176 = vector.extract_strided_slice %173 {offsets = [0, 256], sizes = [8, 128], strides = [1, 1]} : vector<8x384xf32> to vector<8x128xf32>
    %177 = vector.extract_strided_slice %167 {offsets = [0, 384], sizes = [8, 128], strides = [1, 1]} : vector<8x512xf32> to vector<8x128xf32>
    %178 = math.tanh %177 : vector<8x128xf32>
    %179 = arith.mulf %175, %160 : vector<8x128xf32>
    %180 = arith.mulf %174, %178 : vector<8x128xf32>
    %181 = arith.addf %179, %180 : vector<8x128xf32>
    %182 = math.tanh %181 : vector<8x128xf32>
    %183 = arith.mulf %176, %182 : vector<8x128xf32>
    %c0_49 = arith.constant 0 : index
    %c0_50 = arith.constant 0 : index
    %184 = vector.load %arg9[%c0_49, %c0_50] : memref<8x128xf32, #tpu.memory_space<vmem>>, vector<8x128xf32>
    tpu.vector_store %arg9[%c0_49, %c0_50], %183 {strides = array<i32>} : memref<8x128xf32, #tpu.memory_space<vmem>>, vector<8x128xf32>,
    %c0_51 = arith.constant 0 : index
    %c0_52 = arith.constant 0 : index
    %185 = vector.load %arg10[%c0_51, %c0_52] : memref<8x128xf32, #tpu.memory_space<vmem>>, vector<8x128xf32>
    tpu.vector_store %arg10[%c0_51, %c0_52], %181 {strides = array<i32>} : memref<8x128xf32, #tpu.memory_space<vmem>>, vector<8x128xf32>,
    %c0_i32_53 = arith.constant 0 : i32
    %186 = arith.cmpi eq, %arg1, %c0_i32_53 : i32
    %187 = arith.extui %186 : i1 to i32
    %c0_i32_54 = arith.constant 0 : i32
    %188 = arith.cmpi ne, %187, %c0_i32_54 : i32
    scf.if %188 {
      %189 = arith.truncf %183 : vector<8x128xf32> to vector<8x128xbf16>
      %c0_55 = arith.constant 0 : index
      %c0_56 = arith.constant 0 : index
      %190 = vector.load %arg6[%c0_55, %c0_56] : memref<128x128xbf16, #tpu.memory_space<vmem>>, vector<128x128xbf16>
      %cst_57 = arith.constant dense<0.000000e+00> : vector<8x128xf32>
      %191 = tpu.matmul %189, %190, %cst_57 {dimension_numbers = #tpu.dot_dimension_numbers<[1], [0], [0], [1], [0, 0, 1, 1], [], []>} : vector<8x128xbf16>, vector<128x128xbf16>, vector<8x128xf32> -> vector<8x128xf32>
      %c0_58 = arith.constant 0 : index
      %c0_59 = arith.constant 0 : index
      %192 = vector.load %arg7[%c0_58, %c0_59] : memref<1x128xf32, #tpu.memory_space<vmem>>, vector<1x128xf32>
      %193 = vector.broadcast %192 : vector<1x128xf32> to vector<8x128xf32>
      %194 = arith.addf %191, %193 : vector<8x128xf32>
      %c0_60 = arith.constant 0 : index
      %c0_61 = arith.constant 0 : index
      %195 = vector.load %arg8[%c0_60, %c0_61] : memref<8x128xf32, #tpu.memory_space<vmem>>, vector<8x128xf32>
      tpu.vector_store %arg8[%c0_60, %c0_61], %194 {strides = array<i32>} : memref<8x128xf32, #tpu.memory_space<vmem>>, vector<8x128xf32>,
    } else {
    }
    return
  }
  func.func @transform_0(%arg0: i32, %arg1: i32) -> (i32, i32, i32) {
    %c0_i32 = arith.constant 0 : i32
    %c0_i32_0 = arith.constant 0 : i32
    return %arg1, %arg0, %c0_i32 : i32, i32, i32
  }
  func.func @transform_1(%arg0: i32, %arg1: i32) -> (i32, i32) {
    %c0_i32 = arith.constant 0 : i32
    %c0_i32_0 = arith.constant 0 : i32
    %c0_i32_1 = arith.constant 0 : i32
    return %c0_i32, %c0_i32_0 : i32, i32
  }
  func.func @transform_2(%arg0: i32, %arg1: i32) -> (i32, i32) {
    %c0_i32 = arith.constant 0 : i32
    %c0_i32_0 = arith.constant 0 : i32
    %c0_i32_1 = arith.constant 0 : i32
    return %c0_i32, %c0_i32_0 : i32, i32
  }
  func.func @transform_3(%arg0: i32, %arg1: i32) -> (i32, i32) {
    %c0_i32 = arith.constant 0 : i32
    %c0_i32_0 = arith.constant 0 : i32
    %c0_i32_1 = arith.constant 0 : i32
    return %c0_i32, %c0_i32_0 : i32, i32
  }
  func.func @transform_4(%arg0: i32, %arg1: i32) -> (i32, i32) {
    %c0_i32 = arith.constant 0 : i32
    %c0_i32_0 = arith.constant 0 : i32
    %c0_i32_1 = arith.constant 0 : i32
    return %c0_i32, %c0_i32_0 : i32, i32
  }
  func.func @transform_5(%arg0: i32, %arg1: i32) -> (i32, i32) {
    %c0_i32 = arith.constant 0 : i32
    %c0_i32_0 = arith.constant 0 : i32
    %c0_i32_1 = arith.constant 0 : i32
    return %c0_i32, %c0_i32_0 : i32, i32
  }
  func.func @transform_6(%arg0: i32, %arg1: i32) -> (i32, i32) {
    %c0_i32 = arith.constant 0 : i32
    %c0_i32_0 = arith.constant 0 : i32
    return %arg0, %c0_i32 : i32, i32
  }
}

</mosaic_0001>

<llo_original>
// kernel: tpu_custom_call.1
$region0: #{tpu_custom_call.1}
  #allocation0 [shape = 'u32[]', space=smem, size = 0x4, offset = 0x4, fixed_abs, tag = 'smem constant byte address 0x4 - core index']
  #allocation1 [shape = 'u32[144,128]{1,0:T(1,128)}', space=vmem, size = 0x12000, scoped, tag = 'internal scratch']
  #allocation2 [shape = 'f32[8,128]{1,0:T(8,128)}', space=vmem, size = 0x1000, scoped, tag = 'scratch operand']
  #allocation3 [shape = 'f32[8,128]{1,0:T(8,128)}', space=vmem, size = 0x1000, scoped, tag = 'scratch operand']
  #allocation4 [shape = 'f32[8,8,512]{2,1,0:T(8,128)}', space=vmem, size = 0x20000, scoped, tag = 'scratch operand']
  %s0 = inlined_call_operand.hbm [shape: f32[8,8,16], index: 0, kind: input, shape index: {}]
  %s1 = inlined_call_operand.hbm [shape: bf16[16,512], index: 1, kind: input, shape index: {}]
  %s2 = inlined_call_operand.hbm [shape: bf16[128,512], index: 2, kind: input, shape index: {}]
  %s3 = inlined_call_operand.vmem [shape: f32[1,512], index: 3, kind: input, shape index: {}]
  %s4 = inlined_call_operand.hbm [shape: bf16[128,128], index: 4, kind: input, shape index: {}]
  %s5 = inlined_call_operand.vmem [shape: f32[1,128], index: 5, kind: input, shape index: {}]
  %s6 = inlined_call_operand.hbm [shape: f32[8,128], index: 6, kind: output, shape index: {}]
  %s7 = sld [smem:[#allocation0]]
  $region58: #{tpu_custom_call.1} parent=0
    _
  %s9 = ssub.s32 1, %s7
  %s10 = scalar_select 0, %s9, %s7
  $region1: #{tpu_custom_call.1} parent=0
    #allocation5 [shape = 'u8[32768]{0}', space=vmem, size = 0x8000, scoped, tag = 'input window, operand 0, single buffered']
    #allocation6 [shape = 's32[1]{0}', space=sflag, size = 0x4, scoped, tag = 'scoped memory for tpu_custom_call.1']
    #allocation7 [shape = 's32[1]{0}', space=sflag, size = 0x4, scoped, tag = 'scoped memory for tpu_custom_call.1']
    #allocation8 [shape = 'u8[16384]{0}', space=vmem, size = 0x4000, scoped, tag = 'input window, operand 1, single buffered']
    #allocation9 [shape = 's32[1]{0}', space=sflag, size = 0x4, scoped, tag = 'scoped memory for tpu_custom_call.1']
    #allocation10 [shape = 'u8[131072]{0}', space=vmem, size = 0x20000, scoped, tag = 'input window, operand 2, single buffered']
    #allocation11 [shape = 'u8[32768]{0}', space=vmem, size = 0x8000, scoped, tag = 'input window, operand 4, single buffered']
    #allocation12 [shape = 's32[1]{0}', space=sflag, size = 0x4, scoped, tag = 'scoped memory for tpu_custom_call.1']
    #allocation13 [shape = 'u8[4096]{0}', space=vmem, size = 0x1000, scoped, tag = 'output window, operand 0, single buffered']
    %11 = vsyncpa [#allocation6], 0
    %12 = vsyncpa [#allocation9], 0
    %13 = vsyncpa [#allocation12], 0
    %14 = vsyncpa [#allocation7], 0
    // Predicated region
    $region2: #{tpu_custom_call.1} parent=1 // pred_check
      _
    $region3: #{tpu_custom_call.1} parent=1 // pred_check_branch
      %16 = sbr.rel (0) target = $region5
    $region4: #{tpu_custom_call.1} parent=1 // pred_region
      %s18 = ssub.s32 1024, 1024
      %19 = vsyncadd [#allocation6], %s18
      %s20 = sshll.u32 [#allocation5], 4
      %s21 = int_to_ptr.vmem [resolvable:$true] %s20
      %26 = dma.hbm_to_vmem [thread:$0]  %s0, 1024, %s21, [#allocation6], 128, 128, 8
    $region5: #{tpu_custom_call.1} parent=1 // pred_fallthru
      _
    // Predicated region
    $region6: #{tpu_custom_call.1} parent=1 // pred_check
      _
    $region7: #{tpu_custom_call.1} parent=1 // pred_check_branch
      %28 = sbr.rel (0) target = $region9
    $region8: #{tpu_custom_call.1} parent=1 // pred_region
      %s30 = ssub.s32 512, 512
      %31 = vsyncadd [#allocation9], %s30
      %s32 = sshll.u32 [#allocation8], 4
      %s33 = int_to_ptr.vmem [resolvable:$true] %s32
      %38 = dma.hbm_to_vmem [thread:$0]  %s1, 512, %s33, [#allocation9], 256, 256, 16
    $region9: #{tpu_custom_call.1} parent=1 // pred_fallthru
      _
    // Predicated region
    $region10: #{tpu_custom_call.1} parent=1 // pred_check
      _
    $region11: #{tpu_custom_call.1} parent=1 // pred_check_branch
      %40 = sbr.rel (0) target = $region13
    $region12: #{tpu_custom_call.1} parent=1 // pred_region
      %s42 = ssub.s32 4096, 4096
      %43 = vsyncadd [#allocation9], %s42
      %s44 = sshll.u32 [#allocation10], 4
      %s45 = int_to_ptr.vmem [resolvable:$true] %s44
      %50 = dma.hbm_to_vmem [thread:$0]  %s2, 4096, %s45, [#allocation9], 256, 256, 16
    $region13: #{tpu_custom_call.1} parent=1 // pred_fallthru
      _
    // Predicated region
    $region14: #{tpu_custom_call.1} parent=1 // pred_check
      _
    $region15: #{tpu_custom_call.1} parent=1 // pred_check_branch
      %52 = sbr.rel (0) target = $region17
    $region16: #{tpu_custom_call.1} parent=1 // pred_region
      _
    $region17: #{tpu_custom_call.1} parent=1 // pred_fallthru
      _
    // Predicated region
    $region18: #{tpu_custom_call.1} parent=1 // pred_check
      _
    $region19: #{tpu_custom_call.1} parent=1 // pred_check_branch
      %54 = sbr.rel (0) target = $region21
    $region20: #{tpu_custom_call.1} parent=1 // pred_region
      %s56 = ssub.s32 1024, 1024
      %57 = vsyncadd [#allocation12], %s56
      %s58 = sshll.u32 [#allocation11], 4
      %s59 = int_to_ptr.vmem [resolvable:$true] %s58
      %64 = dma.hbm_to_vmem [thread:$0]  %s4, 1024, %s59, [#allocation12], 64, 64, 4
    $region21: #{tpu_custom_call.1} parent=1 // pred_fallthru
      _
    // Predicated region
    $region22: #{tpu_custom_call.1} parent=1 // pred_check
      _
    $region23: #{tpu_custom_call.1} parent=1 // pred_check_branch
      %66 = sbr.rel (0) target = $region25
    $region24: #{tpu_custom_call.1} parent=1 // pred_region
      _
    $region25: #{tpu_custom_call.1} parent=1 // pred_fallthru
      _
    // Predicated region
    $region26: #{tpu_custom_call.1} parent=1 // pred_check
      _
    $region27: #{tpu_custom_call.1} parent=1 // pred_check_branch
      %68 = sbr.rel (0) target = $region29
    $region28: #{tpu_custom_call.1} parent=1 // pred_region
      %69 = dma.done [#allocation6], 1024
    $region29: #{tpu_custom_call.1} parent=1 // pred_fallthru
      _
    // Predicated region
    $region30: #{tpu_custom_call.1} parent=1 // pred_check
      _
    $region31: #{tpu_custom_call.1} parent=1 // pred_check_branch
      %71 = sbr.rel (0) target = $region33
    $region32: #{tpu_custom_call.1} parent=1 // pred_region
      %72 = dma.done [#allocation9], 512
    $region33: #{tpu_custom_call.1} parent=1 // pred_fallthru
      _
    // Predicated region
    $region34: #{tpu_custom_call.1} parent=1 // pred_check
      _
    $region35: #{tpu_custom_call.1} parent=1 // pred_check_branch
      %74 = sbr.rel (0) target = $region37
    $region36: #{tpu_custom_call.1} parent=1 // pred_region
      %75 = dma.done [#allocation9], 4096
    $region37: #{tpu_custom_call.1} parent=1 // pred_fallthru
      _
    // Predicated region
    $region38: #{tpu_custom_call.1} parent=1 // pred_check
      _
    $region39: #{tpu_custom_call.1} parent=1 // pred_check_branch
      %77 = sbr.rel (0) target = $region41
    $region40: #{tpu_custom_call.1} parent=1 // pred_region
      %78 = dma.done [#allocation12], 1024
    $region41: #{tpu_custom_call.1} parent=1 // pred_fallthru
      _
    %p80 = scmp.eq.s32.totalorder 0, 0
    // Predicated region
    $region42: #{tpu_custom_call.1} parent=1 // pred_check
      %p81 = pneg %p80
    $region43: #{tpu_custom_call.1} parent=1 // pred_check_branch
      %83 = sbr.rel (%p81) target = $region45
    $region44: #{tpu_custom_call.1} parent=1 // pred_region
      %84 = vst [vmem:[#allocation2] sm:$0xff] 0.0
      %85 = vst [vmem:[#allocation3] sm:$0xff] 0.0
    $region45: #{tpu_custom_call.1} parent=1 // pred_fallthru
      _
    %v86 = vld [vmem:[#allocation5] sm:$0xff]
    %v87 = vld [vmem:[#allocation5 + $0x8] sm:$0xff]
    %v88 = vld [vmem:[#allocation5 + $0x10] sm:$0xff]
    %v89 = vld [vmem:[#allocation5 + $0x18] sm:$0xff]
    %v90 = vld [vmem:[#allocation5 + $0x20] sm:$0xff]
    %v91 = vld [vmem:[#allocation5 + $0x28] sm:$0xff]
    %v92 = vld [vmem:[#allocation5 + $0x30] sm:$0xff]
    %v93 = vld [vmem:[#allocation5 + $0x38] sm:$0xff]
    %v94 = vpack.c.bf16 %v87, %v86
    %v95 = vpack.c.bf16 %v89, %v88
    %v96 = vpack.c.bf16 %v91, %v90
    %v97 = vpack.c.bf16 %v93, %v92
    %v98 = vld [vmem:[#allocation8] sm:$0xff]
    %v99 = vld [vmem:[#allocation8 + $0x8] sm:$0xff]
    %v100 = vld [vmem:[#allocation8 + $0x10] sm:$0xff]
    %v101 = vld [vmem:[#allocation8 + $0x18] sm:$0xff]
    %v102 = vld [vmem:[%s3] sm:$0xf]
    %v104 = vlaneseq
    %v105 = vshrl.u32 %v104, 7
    %v106 = vsub.s32 0, %v105
    %v107 = vrot.slane %v102, %v106
    %v108 = vlaneseq
    %v109 = vshrl.u32 %v108, 7
    %v110 = vsub.s32 1, %v109
    %v111 = vrot.slane %v102, %v110
    %v112 = vlaneseq
    %v113 = vshrl.u32 %v112, 7
    %v114 = vsub.s32 2, %v113
    %v115 = vrot.slane %v102, %v114
    %v116 = vlaneseq
    %v117 = vshrl.u32 %v116, 7
    %v118 = vsub.s32 3, %v117
    %v119 = vrot.slane %v102, %v118
    %v128 = vunpack.c.l.b16 %v98
    %v129 = vunpack.c.h.b16 %v98
    %v130 = vunpack.c.l.b16 %v99
    %v131 = vunpack.c.h.b16 %v99
    %v132 = vunpack.c.l.b16 %v100
    %v133 = vunpack.c.h.b16 %v100
    %v134 = vunpack.c.l.b16 %v101
    %v135 = vunpack.c.h.b16 %v101
    %v136 = vpack.c.b16 %v132, %v128
    %v137 = vpack.c.b16 %v133, %v129
    %v138 = vpack.c.b16 %v134, %v130
    %v139 = vpack.c.b16 %v135, %v131
    %vm144 = vcmask 130048
    %v146 = vsel %vm144, %v94, 0
    %v149 = vsel %vm144, %v95, 0
    %v152 = vsel %vm144, %v96, 0
    %v155 = vsel %vm144, %v97, 0
    %157 = vmatprep.subr.bf16.mxu0 %v137
    %158 = vmatpush1.bf16.msra.mxu0 %v136
    %159 = vmatprep.subr.bf16.mxu0 0
    %160 = vmatpush1.bf16.msra.mxu0 0
    %161 = vmatprep.subr.bf16.mxu0 0
    %162 = vmatpush1.bf16.msra.mxu0 0
    %163 = vmatprep.subr.bf16.mxu0 0
    %164 = vmatpush1.bf16.msra.mxu0 0
    %165 = vmatprep.subr.bf16.mxu0 0
    %166 = vmatpush1.bf16.msra.mxu0 0
    %167 = vmatprep.subr.bf16.mxu0 0
    %168 = vmatpush1.bf16.msra.mxu0 0
    %169 = vmatprep.subr.bf16.mxu0 0
    %170 = vmatpush1.bf16.msra.mxu0 0
    %171 = vmatprep.subr.bf16.mxu0 0
    %172 = vmatpush1.bf16.msra.mxu0 0
    %173 = vmatprep.subr.bf16.mxu0 0
    %174 = vmatpush1.bf16.msra.mxu0 0
    %175 = vmatprep.subr.bf16.mxu0 0
    %176 = vmatpush1.bf16.msra.mxu0 0
    %177 = vmatprep.subr.bf16.mxu0 0
    %178 = vmatpush1.bf16.msra.mxu0 0
    %179 = vmatprep.subr.bf16.mxu0 0
    %180 = vmatpush1.bf16.msra.mxu0 0
    %181 = vmatprep.subr.bf16.mxu0 0
    %182 = vmatpush1.bf16.msra.mxu0 0
    %183 = vmatprep.subr.bf16.mxu0 0
    %184 = vmatpush1.bf16.msra.mxu0 0
    %185 = vmatprep.subr.bf16.mxu0 0
    %186 = vmatpush1.bf16.msra.mxu0 0
    %187 = vmatprep.subr.bf16.mxu0 0
    %188 = vmatpush1.bf16.msra.mxu0 0
    %189 = vmatprep.mubr.bf16.mxu0 0
    %190 = vmatmul.mubr.bf16.gmra.mrb[0].mxu0 %v146
    %v191 = vpop.f32.mrb[0].mxu0
    %v192 = vadd.f32 %v107, %v191
    %v193 = vpop.f32.mrb[0].mxu0
    %v194 = vadd.f32 %v111, %v193
    %v195 = vpop.f32.mrb[0].mxu0
    %v196 = vadd.f32 %v107, %v195
    %v197 = vpop.f32.mrb[0].mxu0
    %v198 = vadd.f32 %v111, %v197
    %199 = vmatprep.mubr.bf16.mxu0 0
    %200 = vmatmul.mubr.bf16.gmra.mrb[0].mxu0 %v149
    %v201 = vpop.f32.mrb[0].mxu0
    %v202 = vadd.f32 %v107, %v201
    %v203 = vpop.f32.mrb[0].mxu0
    %v204 = vadd.f32 %v111, %v203
    %v205 = vpop.f32.mrb[0].mxu0
    %v206 = vadd.f32 %v107, %v205
    %v207 = vpop.f32.mrb[0].mxu0
    %v208 = vadd.f32 %v111, %v207
    %209 = vmatprep.mubr.bf16.mxu0 0
    %210 = vmatmul.mubr.bf16.gmra.mrb[0].mxu0 %v152
    %v211 = vpop.f32.mrb[0].mxu0
    %v212 = vadd.f32 %v107, %v211
    %v213 = vpop.f32.mrb[0].mxu0
    %v214 = vadd.f32 %v111, %v213
    %v215 = vpop.f32.mrb[0].mxu0
    %v216 = vadd.f32 %v107, %v215
    %v217 = vpop.f32.mrb[0].mxu0
    %v218 = vadd.f32 %v111, %v217
    %219 = vmatprep.mubr.bf16.mxu0 0
    %220 = vmatmul.mubr.bf16.gmra.mrb[0].mxu0 %v155
    %v221 = vpop.f32.mrb[0].mxu0
    %v222 = vadd.f32 %v107, %v221
    %v223 = vpop.f32.mrb[0].mxu0
    %v224 = vadd.f32 %v111, %v223
    %v225 = vpop.f32.mrb[0].mxu0
    %v226 = vadd.f32 %v107, %v225
    %v227 = vpop.f32.mrb[0].mxu0
    %v228 = vadd.f32 %v111, %v227
    %229 = vdwg.mxu0
    %230 = vmatprep.subr.bf16.mxu0 %v139
    %231 = vmatpush1.bf16.msra.mxu0 %v138
    %232 = vmatprep.subr.bf16.mxu0 0
    %233 = vmatpush1.bf16.msra.mxu0 0
    %234 = vmatprep.subr.bf16.mxu0 0
    %235 = vmatpush1.bf16.msra.mxu0 0
    %236 = vmatprep.subr.bf16.mxu0 0
    %237 = vmatpush1.bf16.msra.mxu0 0
    %238 = vmatprep.subr.bf16.mxu0 0
    %239 = vmatpush1.bf16.msra.mxu0 0
    %240 = vmatprep.subr.bf16.mxu0 0
    %241 = vmatpush1.bf16.msra.mxu0 0
    %242 = vmatprep.subr.bf16.mxu0 0
    %243 = vmatpush1.bf16.msra.mxu0 0
    %244 = vmatprep.subr.bf16.mxu0 0
    %245 = vmatpush1.bf16.msra.mxu0 0
    %246 = vmatprep.subr.bf16.mxu0 0
    %247 = vmatpush1.bf16.msra.mxu0 0
    %248 = vmatprep.subr.bf16.mxu0 0
    %249 = vmatpush1.bf16.msra.mxu0 0
    %250 = vmatprep.subr.bf16.mxu0 0
    %251 = vmatpush1.bf16.msra.mxu0 0
    %252 = vmatprep.subr.bf16.mxu0 0
    %253 = vmatpush1.bf16.msra.mxu0 0
    %254 = vmatprep.subr.bf16.mxu0 0
    %255 = vmatpush1.bf16.msra.mxu0 0
    %256 = vmatprep.subr.bf16.mxu0 0
    %257 = vmatpush1.bf16.msra.mxu0 0
    %258 = vmatprep.subr.bf16.mxu0 0
    %259 = vmatpush1.bf16.msra.mxu0 0
    %260 = vmatprep.subr.bf16.mxu0 0
    %261 = vmatpush1.bf16.msra.mxu0 0
    %262 = vmatprep.mubr.bf16.mxu0 0
    %263 = vmatmul.mubr.bf16.gmra.mrb[0].mxu0 %v146
    %v264 = vpop.f32.mrb[0].mxu0
    %v265 = vadd.f32 %v115, %v264
    %v266 = vpop.f32.mrb[0].mxu0
    %v267 = vadd.f32 %v119, %v266
    %v268 = vpop.f32.mrb[0].mxu0
    %v269 = vadd.f32 %v115, %v268
    %v270 = vpop.f32.mrb[0].mxu0
    %v271 = vadd.f32 %v119, %v270
    %272 = vmatprep.mubr.bf16.mxu0 0
    %273 = vmatmul.mubr.bf16.gmra.mrb[0].mxu0 %v149
    %v274 = vpop.f32.mrb[0].mxu0
    %v275 = vadd.f32 %v115, %v274
    %v276 = vpop.f32.mrb[0].mxu0
    %v277 = vadd.f32 %v119, %v276
    %v278 = vpop.f32.mrb[0].mxu0
    %v279 = vadd.f32 %v115, %v278
    %v280 = vpop.f32.mrb[0].mxu0
    %v281 = vadd.f32 %v119, %v280
    %282 = vmatprep.mubr.bf16.mxu0 0
    %283 = vmatmul.mubr.bf16.gmra.mrb[0].mxu0 %v152
    %v284 = vpop.f32.mrb[0].mxu0
    %v285 = vadd.f32 %v115, %v284
    %v286 = vpop.f32.mrb[0].mxu0
    %v287 = vadd.f32 %v119, %v286
    %v288 = vpop.f32.mrb[0].mxu0
    %v289 = vadd.f32 %v115, %v288
    %v290 = vpop.f32.mrb[0].mxu0
    %v291 = vadd.f32 %v119, %v290
    %292 = vmatprep.mubr.bf16.mxu0 0
    %293 = vmatmul.mubr.bf16.gmra.mrb[0].mxu0 %v155
    %v294 = vpop.f32.mrb[0].mxu0
    %v295 = vadd.f32 %v115, %v294
    %v296 = vpop.f32.mrb[0].mxu0
    %v297 = vadd.f32 %v119, %v296
    %v298 = vpop.f32.mrb[0].mxu0
    %v299 = vadd.f32 %v115, %v298
    %v300 = vpop.f32.mrb[0].mxu0
    %v301 = vadd.f32 %v119, %v300
    %302 = vdwg.mxu0
    %303 = vst [vmem:[#allocation4] sm:$0xff] %v192
    %304 = vst [vmem:[#allocation4 + $0x8] sm:$0xff] %v194
    %305 = vst [vmem:[#allocation4 + $0x10] sm:$0xff] %v265
    %306 = vst [vmem:[#allocation4 + $0x18] sm:$0xff] %v267
    %307 = vst [vmem:[#allocation4 + $0x20] sm:$0xff] %v196
    %308 = vst [vmem:[#allocation4 + $0x28] sm:$0xff] %v198
    %309 = vst [vmem:[#allocation4 + $0x30] sm:$0xff] %v269
    %310 = vst [vmem:[#allocation4 + $0x38] sm:$0xff] %v271
    %311 = vst [vmem:[#allocation4 + $0x40] sm:$0xff] %v202
    %312 = vst [vmem:[#allocation4 + $0x48] sm:$0xff] %v204
    %313 = vst [vmem:[#allocation4 + $0x50] sm:$0xff] %v275
    %314 = vst [vmem:[#allocation4 + $0x58] sm:$0xff] %v277
    %315 = vst [vmem:[#allocation4 + $0x60] sm:$0xff] %v206
    %316 = vst [vmem:[#allocation4 + $0x68] sm:$0xff] %v208
    %317 = vst [vmem:[#allocation4 + $0x70] sm:$0xff] %v279
    %318 = vst [vmem:[#allocation4 + $0x78] sm:$0xff] %v281
    %319 = vst [vmem:[#allocation4 + $0x80] sm:$0xff] %v212
    %320 = vst [vmem:[#allocation4 + $0x88] sm:$0xff] %v214
    %321 = vst [vmem:[#allocation4 + $0x90] sm:$0xff] %v285
    %322 = vst [vmem:[#allocation4 + $0x98] sm:$0xff] %v287
    %323 = vst [vmem:[#allocation4 + $0xa0] sm:$0xff] %v216
    %324 = vst [vmem:[#allocation4 + $0xa8] sm:$0xff] %v218
    %325 = vst [vmem:[#allocation4 + $0xb0] sm:$0xff] %v289
    %326 = vst [vmem:[#allocation4 + $0xb8] sm:$0xff] %v291
    %327 = vst [vmem:[#allocation4 + $0xc0] sm:$0xff] %v222
    %328 = vst [vmem:[#allocation4 + $0xc8] sm:$0xff] %v224
    %329 = vst [vmem:[#allocation4 + $0xd0] sm:$0xff] %v295
    %330 = vst [vmem:[#allocation4 + $0xd8] sm:$0xff] %v297
    %331 = vst [vmem:[#allocation4 + $0xe0] sm:$0xff] %v226
    %332 = vst [vmem:[#allocation4 + $0xe8] sm:$0xff] %v228
    %333 = vst [vmem:[#allocation4 + $0xf0] sm:$0xff] %v299
    %334 = vst [vmem:[#allocation4 + $0xf8] sm:$0xff] %v301
    %v335 = vld [vmem:[#allocation10] sm:$0xff]
    %v336 = vld [vmem:[#allocation10 + $0x8] sm:$0xff]
    %v337 = vld [vmem:[#allocation10 + $0x10] sm:$0xff]
    %v338 = vld [vmem:[#allocation10 + $0x18] sm:$0xff]
    %v339 = vld [vmem:[#allocation10 + $0x20] sm:$0xff]
    %v340 = vld [vmem:[#allocation10 + $0x28] sm:$0xff]
    %v341 = vld [vmem:[#allocation10 + $0x30] sm:$0xff]
    %v342 = vld [vmem:[#allocation10 + $0x38] sm:$0xff]
    %v343 = vld [vmem:[#allocation10 + $0x40] sm:$0xff]
    %v344 = vld [vmem:[#allocation10 + $0x48] sm:$0xff]
    %v345 = vld [vmem:[#allocation10 + $0x50] sm:$0xff]
    %v346 = vld [vmem:[#allocation10 + $0x58] sm:$0xff]
    %v347 = vld [vmem:[#allocation10 + $0x60] sm:$0xff]
    %v348 = vld [vmem:[#allocation10 + $0x68] sm:$0xff]
    %v349 = vld [vmem:[#allocation10 + $0x70] sm:$0xff]
    %v350 = vld [vmem:[#allocation10 + $0x78] sm:$0xff]
    %v351 = vld [vmem:[#allocation10 + $0x80] sm:$0xff]
    %v352 = vld [vmem:[#allocation10 + $0x88] sm:$0xff]
    %v353 = vld [vmem:[#allocation10 + $0x90] sm:$0xff]
    %v354 = vld [vmem:[#allocation10 + $0x98] sm:$0xff]
    %v355 = vld [vmem:[#allocation10 + $0xa0] sm:$0xff]
    %v356 = vld [vmem:[#allocation10 + $0xa8] sm:$0xff]
    %v357 = vld [vmem:[#allocation10 + $0xb0] sm:$0xff]
    %v358 = vld [vmem:[#allocation10 + $0xb8] sm:$0xff]
    %v359 = vld [vmem:[#allocation10 + $0xc0] sm:$0xff]
    %v360 = vld [vmem:[#allocation10 + $0xc8] sm:$0xff]
    %v361 = vld [vmem:[#allocation10 + $0xd0] sm:$0xff]
    %v362 = vld [vmem:[#allocation10 + $0xd8] sm:$0xff]
    %v363 = vld [vmem:[#allocation10 + $0xe0] sm:$0xff]
    %v364 = vld [vmem:[#allocation10 + $0xe8] sm:$0xff]
    %v365 = vld [vmem:[#allocation10 + $0xf0] sm:$0xff]
    %v366 = vld [vmem:[#allocation10 + $0xf8] sm:$0xff]
    %v367 = vld [vmem:[#allocation2] sm:$0xff]
    %v368 = vld [vmem:[#allocation3] sm:$0xff]
    %v369 = vld [vmem:[#allocation4] sm:$0xff]
    %v370 = vld [vmem:[#allocation4 + $0x8] sm:$0xff]
    %v371 = vld [vmem:[#allocation4 + $0x10] sm:$0xff]
    %v372 = vld [vmem:[#allocation4 + $0x18] sm:$0xff]
    %v373 = vpack.c.bf16 %v367, %v367
    %v406 = vunpack.c.l.b16 %v335
    %v407 = vunpack.c.h.b16 %v335
    %v408 = vunpack.c.l.b16 %v336
    %v409 = vunpack.c.h.b16 %v336
    %v410 = vunpack.c.l.b16 %v337
    %v411 = vunpack.c.h.b16 %v337
    %v412 = vunpack.c.l.b16 %v338
    %v413 = vunpack.c.h.b16 %v338
    %v414 = vunpack.c.l.b16 %v339
    %v415 = vunpack.c.h.b16 %v339
    %v416 = vunpack.c.l.b16 %v340
    %v417 = vunpack.c.h.b16 %v340
    %v418 = vunpack.c.l.b16 %v341
    %v419 = vunpack.c.h.b16 %v341
    %v420 = vunpack.c.l.b16 %v342
    %v421 = vunpack.c.h.b16 %v342
    %v422 = vunpack.c.l.b16 %v343
    %v423 = vunpack.c.h.b16 %v343
    %v424 = vunpack.c.l.b16 %v344
    %v425 = vunpack.c.h.b16 %v344
    %v426 = vunpack.c.l.b16 %v345
    %v427 = vunpack.c.h.b16 %v345
    %v428 = vunpack.c.l.b16 %v346
    %v429 = vunpack.c.h.b16 %v346
    %v430 = vunpack.c.l.b16 %v347
    %v431 = vunpack.c.h.b16 %v347
    %v432 = vunpack.c.l.b16 %v348
    %v433 = vunpack.c.h.b16 %v348
    %v434 = vunpack.c.l.b16 %v349
    %v435 = vunpack.c.h.b16 %v349
    %v436 = vunpack.c.l.b16 %v350
    %v437 = vunpack.c.h.b16 %v350
    %v438 = vunpack.c.l.b16 %v351
    %v439 = vunpack.c.h.b16 %v351
    %v440 = vunpack.c.l.b16 %v352
    %v441 = vunpack.c.h.b16 %v352
    %v442 = vunpack.c.l.b16 %v353
    %v443 = vunpack.c.h.b16 %v353
    %v444 = vunpack.c.l.b16 %v354
    %v445 = vunpack.c.h.b16 %v354
    %v446 = vunpack.c.l.b16 %v355
    %v447 = vunpack.c.h.b16 %v355
    %v448 = vunpack.c.l.b16 %v356
    %v449 = vunpack.c.h.b16 %v356
    %v450 = vunpack.c.l.b16 %v357
    %v451 = vunpack.c.h.b16 %v357
    %v452 = vunpack.c.l.b16 %v358
    %v453 = vunpack.c.h.b16 %v358
    %v454 = vunpack.c.l.b16 %v359
    %v455 = vunpack.c.h.b16 %v359
    %v456 = vunpack.c.l.b16 %v360
    %v457 = vunpack.c.h.b16 %v360
    %v458 = vunpack.c.l.b16 %v361
    %v459 = vunpack.c.h.b16 %v361
    %v460 = vunpack.c.l.b16 %v362
    %v461 = vunpack.c.h.b16 %v362
    %v462 = vunpack.c.l.b16 %v363
    %v463 = vunpack.c.h.b16 %v363
    %v464 = vunpack.c.l.b16 %v364
    %v465 = vunpack.c.h.b16 %v364
    %v466 = vunpack.c.l.b16 %v365
    %v467 = vunpack.c.h.b16 %v365
    %v468 = vunpack.c.l.b16 %v366
    %v469 = vunpack.c.h.b16 %v366
    %v470 = vpack.c.b16 %v410, %v406
    %v471 = vpack.c.b16 %v411, %v407
    %v472 = vpack.c.b16 %v412, %v408
    %v473 = vpack.c.b16 %v413, %v409
    %v474 = vpack.c.b16 %v418, %v414
    %v475 = vpack.c.b16 %v419, %v415
    %v476 = vpack.c.b16 %v420, %v416
    %v477 = vpack.c.b16 %v421, %v417
    %v478 = vpack.c.b16 %v426, %v422
    %v479 = vpack.c.b16 %v427, %v423
    %v480 = vpack.c.b16 %v428, %v424
    %v481 = vpack.c.b16 %v429, %v425
    %v482 = vpack.c.b16 %v434, %v430
    %v483 = vpack.c.b16 %v435, %v431
    %v484 = vpack.c.b16 %v436, %v432
    %v485 = vpack.c.b16 %v437, %v433
    %v486 = vpack.c.b16 %v442, %v438
    %v487 = vpack.c.b16 %v443, %v439
    %v488 = vpack.c.b16 %v444, %v440
    %v489 = vpack.c.b16 %v445, %v441
    %v490 = vpack.c.b16 %v450, %v446
    %v491 = vpack.c.b16 %v451, %v447
    %v492 = vpack.c.b16 %v452, %v448
    %v493 = vpack.c.b16 %v453, %v449
    %v494 = vpack.c.b16 %v458, %v454
    %v495 = vpack.c.b16 %v459, %v455
    %v496 = vpack.c.b16 %v460, %v456
    %v497 = vpack.c.b16 %v461, %v457
    %v498 = vpack.c.b16 %v466, %v462
    %v499 = vpack.c.b16 %v467, %v463
    %v500 = vpack.c.b16 %v468, %v464
    %v501 = vpack.c.b16 %v469, %v465
    %534 = vmatprep.subr.bf16.mxu0 %v471
    %535 = vmatpush1.bf16.msra.mxu0 %v470
    %536 = vmatprep.subr.bf16.mxu0 %v475
    %537 = vmatpush1.bf16.msra.mxu0 %v474
    %538 = vmatprep.subr.bf16.mxu0 %v479
    %539 = vmatpush1.bf16.msra.mxu0 %v478
    %540 = vmatprep.subr.bf16.mxu0 %v483
    %541 = vmatpush1.bf16.msra.mxu0 %v482
    %542 = vmatprep.subr.bf16.mxu0 %v487
    %543 = vmatpush1.bf16.msra.mxu0 %v486
    %544 = vmatprep.subr.bf16.mxu0 %v491
    %545 = vmatpush1.bf16.msra.mxu0 %v490
    %546 = vmatprep.subr.bf16.mxu0 %v495
    %547 = vmatpush1.bf16.msra.mxu0 %v494
    %548 = vmatprep.subr.bf16.mxu0 %v499
    %549 = vmatpush1.bf16.msra.mxu0 %v498
    %550 = vmatprep.subr.bf16.mxu0 0
    %551 = vmatpush1.bf16.msra.mxu0 0
    %552 = vmatprep.subr.bf16.mxu0 0
    %553 = vmatpush1.bf16.msra.mxu0 0
    %554 = vmatprep.subr.bf16.mxu0 0
    %555 = vmatpush1.bf16.msra.mxu0 0
    %556 = vmatprep.subr.bf16.mxu0 0
    %557 = vmatpush1.bf16.msra.mxu0 0
    %558 = vmatprep.subr.bf16.mxu0 0
    %559 = vmatpush1.bf16.msra.mxu0 0
    %560 = vmatprep.subr.bf16.mxu0 0
    %561 = vmatpush1.bf16.msra.mxu0 0
    %562 = vmatprep.subr.bf16.mxu0 0
    %563 = vmatpush1.bf16.msra.mxu0 0
    %564 = vmatprep.subr.bf16.mxu0 0
    %565 = vmatpush1.bf16.msra.mxu0 0
    %566 = vmatprep.mubr.bf16.mxu0 0
    %567 = vmatmul.mubr.bf16.gmra.mrb[0].mxu0 %v373
    %v568 = vpop.f32.mrb[0].mxu0
    %v569 = vadd.f32 0.0, %v568
    %v570 = vpop.f32.mrb[0].mxu0
    %v571 = vadd.f32 0.0, %v570
    %v572 = vpop.f32.mrb[0].mxu0
    %v573 = vpop.f32.mrb[0].mxu0
    %574 = vdwg.mxu0
    %575 = vmatprep.subr.bf16.mxu0 %v473
    %576 = vmatpush1.bf16.msra.mxu0 %v472
    %577 = vmatprep.subr.bf16.mxu0 %v477
    %578 = vmatpush1.bf16.msra.mxu0 %v476
    %579 = vmatprep.subr.bf16.mxu0 %v481
    %580 = vmatpush1.bf16.msra.mxu0 %v480
    %581 = vmatprep.subr.bf16.mxu0 %v485
    %582 = vmatpush1.bf16.msra.mxu0 %v484
    %583 = vmatprep.subr.bf16.mxu0 %v489
    %584 = vmatpush1.bf16.msra.mxu0 %v488
    %585 = vmatprep.subr.bf16.mxu0 %v493
    %586 = vmatpush1.bf16.msra.mxu0 %v492
    %587 = vmatprep.subr.bf16.mxu0 %v497
    %588 = vmatpush1.bf16.msra.mxu0 %v496
    %589 = vmatprep.subr.bf16.mxu0 %v501
    %590 = vmatpush1.bf16.msra.mxu0 %v500
    %591 = vmatprep.subr.bf16.mxu0 0
    %592 = vmatpush1.bf16.msra.mxu0 0
    %593 = vmatprep.subr.bf16.mxu0 0
    %594 = vmatpush1.bf16.msra.mxu0 0
    %595 = vmatprep.subr.bf16.mxu0 0
    %596 = vmatpush1.bf16.msra.mxu0 0
    %597 = vmatprep.subr.bf16.mxu0 0
    %598 = vmatpush1.bf16.msra.mxu0 0
    %599 = vmatprep.subr.bf16.mxu0 0
    %600 = vmatpush1.bf16.msra.mxu0 0
    %601 = vmatprep.subr.bf16.mxu0 0
    %602 = vmatpush1.bf16.msra.mxu0 0
    %603 = vmatprep.subr.bf16.mxu0 0
    %604 = vmatpush1.bf16.msra.mxu0 0
    %605 = vmatprep.subr.bf16.mxu0 0
    %606 = vmatpush1.bf16.msra.mxu0 0
    %607 = vmatprep.mubr.bf16.mxu0 0
    %608 = vmatmul.mubr.bf16.gmra.mrb[0].mxu0 %v373
    %v609 = vpop.f32.mrb[0].mxu0
    %v610 = vadd.f32 0.0, %v609
    %v611 = vpop.f32.mrb[0].mxu0
    %v612 = vadd.f32 0.0, %v611
    %v613 = vpop.f32.mrb[0].mxu0
    %v614 = vpop.f32.mrb[0].mxu0
    %615 = vdwg.mxu0
    %v616 = vadd.f32 %v369, %v569
    %v617 = vadd.f32 %v370, %v571
    %v618 = vadd.f32 %v371, %v610
    %v619 = vadd.f32 %v372, %v612
    %v620 = vxor.u32 %v616, 2147483648
    %v621 = vxor.u32 %v617, 2147483648
    %v622 = vxor.u32 %v618, 2147483648
    %v623 = vmul.f32 %v620, 1.442695
    %v624 = vpow.pop %v623
    %v625 = vmul.f32 %v621, 1.442695
    %v626 = vpow.pop %v625
    %v627 = vmul.f32 %v622, 1.442695
    %v628 = vpow.pop %v627
    %v629 = vadd.f32 %v624, 1.0
    %v630 = vadd.f32 %v626, 1.0
    %v631 = vadd.f32 %v628, 1.0
    %v632 = vrcp.pop %v629
    %v633 = vmul.f32 1.0, %v632
    %v634 = vrcp.pop %v630
    %v635 = vmul.f32 1.0, %v634
    %v636 = vrcp.pop %v631
    %v637 = vmul.f32 1.0, %v636
    %v638 = vtanh.pop %v619
    %v639 = vmul.f32 %v635, %v368
    %v640 = vmul.f32 %v633, %v638
    %v641 = vadd.f32 %v639, %v640
    %v642 = vtanh.pop %v641
    %v643 = vmul.f32 %v637, %v642
    %s644 = scalar_lea.vmem [#allocation4], 32
    %v645 = vld [vmem:[%s644] sm:$0xff]
    %v646 = vld [vmem:[%s644 + $0x8] sm:$0xff]
    %v647 = vld [vmem:[%s644 + $0x10] sm:$0xff]
    %v648 = vld [vmem:[%s644 + $0x18] sm:$0xff]
    %v649 = vpack.c.bf16 %v643, %v643
    %650 = vmatprep.subr.bf16.mxu0 %v471
    %651 = vmatpush1.bf16.msra.mxu0 %v470
    %652 = vmatprep.subr.bf16.mxu0 %v475
    %653 = vmatpush1.bf16.msra.mxu0 %v474
    %654 = vmatprep.subr.bf16.mxu0 %v479
    %655 = vmatpush1.bf16.msra.mxu0 %v478
    %656 = vmatprep.subr.bf16.mxu0 %v483
    %657 = vmatpush1.bf16.msra.mxu0 %v482
    %658 = vmatprep.subr.bf16.mxu0 %v487
    %659 = vmatpush1.bf16.msra.mxu0 %v486
    %660 = vmatprep.subr.bf16.mxu0 %v491
    %661 = vmatpush1.bf16.msra.mxu0 %v490
    %662 = vmatprep.subr.bf16.mxu0 %v495
    %663 = vmatpush1.bf16.msra.mxu0 %v494
    %664 = vmatprep.subr.bf16.mxu0 %v499
    %665 = vmatpush1.bf16.msra.mxu0 %v498
    %666 = vmatprep.subr.bf16.mxu0 0
    %667 = vmatpush1.bf16.msra.mxu0 0
    %668 = vmatprep.subr.bf16.mxu0 0
    %669 = vmatpush1.bf16.msra.mxu0 0
    %670 = vmatprep.subr.bf16.mxu0 0
    %671 = vmatpush1.bf16.msra.mxu0 0
    %672 = vmatprep.subr.bf16.mxu0 0
    %673 = vmatpush1.bf16.msra.mxu0 0
    %674 = vmatprep.subr.bf16.mxu0 0
    %675 = vmatpush1.bf16.msra.mxu0 0
    %676 = vmatprep.subr.bf16.mxu0 0
    %677 = vmatpush1.bf16.msra.mxu0 0
    %678 = vmatprep.subr.bf16.mxu0 0
    %679 = vmatpush1.bf16.msra.mxu0 0
    %680 = vmatprep.subr.bf16.mxu0 0
    %681 = vmatpush1.bf16.msra.mxu0 0
    %682 = vmatprep.mubr.bf16.mxu0 0
    %683 = vmatmul.mubr.bf16.gmra.mrb[0].mxu0 %v649
    %v684 = vpop.f32.mrb[0].mxu0
    %v685 = vadd.f32 0.0, %v684
    %v686 = vpop.f32.mrb[0].mxu0
    %v687 = vadd.f32 0.0, %v686
    %v688 = vpop.f32.mrb[0].mxu0
    %v689 = vpop.f32.mrb[0].mxu0
    %690 = vdwg.mxu0
    %691 = vmatprep.subr.bf16.mxu0 %v473
    %692 = vmatpush1.bf16.msra.mxu0 %v472
    %693 = vmatprep.subr.bf16.mxu0 %v477
    %694 = vmatpush1.bf16.msra.mxu0 %v476
    %695 = vmatprep.subr.bf16.mxu0 %v481
    %696 = vmatpush1.bf16.msra.mxu0 %v480
    %697 = vmatprep.subr.bf16.mxu0 %v485
    %698 = vmatpush1.bf16.msra.mxu0 %v484
    %699 = vmatprep.subr.bf16.mxu0 %v489
    %700 = vmatpush1.bf16.msra.mxu0 %v488
    %701 = vmatprep.subr.bf16.mxu0 %v493
    %702 = vmatpush1.bf16.msra.mxu0 %v492
    %703 = vmatprep.subr.bf16.mxu0 %v497
    %704 = vmatpush1.bf16.msra.mxu0 %v496
    %705 = vmatprep.subr.bf16.mxu0 %v501
    %706 = vmatpush1.bf16.msra.mxu0 %v500
    %707 = vmatprep.subr.bf16.mxu0 0
    %708 = vmatpush1.bf16.msra.mxu0 0
    %709 = vmatprep.subr.bf16.mxu0 0
    %710 = vmatpush1.bf16.msra.mxu0 0
    %711 = vmatprep.subr.bf16.mxu0 0
    %712 = vmatpush1.bf16.msra.mxu0 0
    %713 = vmatprep.subr.bf16.mxu0 0
    %714 = vmatpush1.bf16.msra.mxu0 0
    %715 = vmatprep.subr.bf16.mxu0 0
    %716 = vmatpush1.bf16.msra.mxu0 0
    %717 = vmatprep.subr.bf16.mxu0 0
    %718 = vmatpush1.bf16.msra.mxu0 0
    %719 = vmatprep.subr.bf16.mxu0 0
    %720 = vmatpush1.bf16.msra.mxu0 0
    %721 = vmatprep.subr.bf16.mxu0 0
    %722 = vmatpush1.bf16.msra.mxu0 0
    %723 = vmatprep.mubr.bf16.mxu0 0
    %724 = vmatmul.mubr.bf16.gmra.mrb[0].mxu0 %v649
    %v725 = vpop.f32.mrb[0].mxu0
    %v726 = vadd.f32 0.0, %v725
    %v727 = vpop.f32.mrb[0].mxu0
    %v728 = vadd.f32 0.0, %v727
    %v729 = vpop.f32.mrb[0].mxu0
    %v730 = vpop.f32.mrb[0].mxu0
    %731 = vdwg.mxu0
    %v732 = vadd.f32 %v645, %v685
    %v733 = vadd.f32 %v646, %v687
    %v734 = vadd.f32 %v647, %v726
    %v735 = vadd.f32 %v648, %v728
    %v736 = vxor.u32 %v732, 2147483648
    %v737 = vxor.u32 %v733, 2147483648
    %v738 = vxor.u32 %v734, 2147483648
    %v739 = vmul.f32 %v736, 1.442695
    %v740 = vpow.pop %v739
    %v741 = vmul.f32 %v737, 1.442695
    %v742 = vpow.pop %v741
    %v743 = vmul.f32 %v738, 1.442695
    %v744 = vpow.pop %v743
    %v745 = vadd.f32 %v740, 1.0
    %v746 = vadd.f32 %v742, 1.0
    %v747 = vadd.f32 %v744, 1.0
    %v748 = vrcp.pop %v745
    %v749 = vmul.f32 1.0, %v748
    %v750 = vrcp.pop %v746
    %v751 = vmul.f32 1.0, %v750
    %v752 = vrcp.pop %v747
    %v753 = vmul.f32 1.0, %v752
    %v754 = vtanh.pop %v735
    %v755 = vmul.f32 %v751, %v641
    %v756 = vmul.f32 %v749, %v754
    %v757 = vadd.f32 %v755, %v756
    %v758 = vtanh.pop %v757
    %v759 = vmul.f32 %v753, %v758
    %s760 = scalar_lea.vmem [#allocation4], 64
    %v761 = vld [vmem:[%s760] sm:$0xff]
    %v762 = vld [vmem:[%s760 + $0x8] sm:$0xff]
    %v763 = vld [vmem:[%s760 + $0x10] sm:$0xff]
    %v764 = vld [vmem:[%s760 + $0x18] sm:$0xff]
    %v765 = vpack.c.bf16 %v759, %v759
    %766 = vmatprep.subr.bf16.mxu0 %v471
    %767 = vmatpush1.bf16.msra.mxu0 %v470
    %768 = vmatprep.subr.bf16.mxu0 %v475
    %769 = vmatpush1.bf16.msra.mxu0 %v474
    %770 = vmatprep.subr.bf16.mxu0 %v479
    %771 = vmatpush1.bf16.msra.mxu0 %v478
    %772 = vmatprep.subr.bf16.mxu0 %v483
    %773 = vmatpush1.bf16.msra.mxu0 %v482
    %774 = vmatprep.subr.bf16.mxu0 %v487
    %775 = vmatpush1.bf16.msra.mxu0 %v486
    %776 = vmatprep.subr.bf16.mxu0 %v491
    %777 = vmatpush1.bf16.msra.mxu0 %v490
    %778 = vmatprep.subr.bf16.mxu0 %v495
    %779 = vmatpush1.bf16.msra.mxu0 %v494
    %780 = vmatprep.subr.bf16.mxu0 %v499
    %781 = vmatpush1.bf16.msra.mxu0 %v498
    %782 = vmatprep.subr.bf16.mxu0 0
    %783 = vmatpush1.bf16.msra.mxu0 0
    %784 = vmatprep.subr.bf16.mxu0 0
    %785 = vmatpush1.bf16.msra.mxu0 0
    %786 = vmatprep.subr.bf16.mxu0 0
    %787 = vmatpush1.bf16.msra.mxu0 0
    %788 = vmatprep.subr.bf16.mxu0 0
    %789 = vmatpush1.bf16.msra.mxu0 0
    %790 = vmatprep.subr.bf16.mxu0 0
    %791 = vmatpush1.bf16.msra.mxu0 0
    %792 = vmatprep.subr.bf16.mxu0 0
    %793 = vmatpush1.bf16.msra.mxu0 0
    %794 = vmatprep.subr.bf16.mxu0 0
    %795 = vmatpush1.bf16.msra.mxu0 0
    %796 = vmatprep.subr.bf16.mxu0 0
    %797 = vmatpush1.bf16.msra.mxu0 0
    %798 = vmatprep.mubr.bf16.mxu0 0
    %799 = vmatmul.mubr.bf16.gmra.mrb[0].mxu0 %v765
    %v800 = vpop.f32.mrb[0].mxu0
    %v801 = vadd.f32 0.0, %v800
    %v802 = vpop.f32.mrb[0].mxu0
    %v803 = vadd.f32 0.0, %v802
    %v804 = vpop.f32.mrb[0].mxu0
    %v805 = vpop.f32.mrb[0].mxu0
    %806 = vdwg.mxu0
    %807 = vmatprep.subr.bf16.mxu0 %v473
    %808 = vmatpush1.bf16.msra.mxu0 %v472
    %809 = vmatprep.subr.bf16.mxu0 %v477
    %810 = vmatpush1.bf16.msra.mxu0 %v476
    %811 = vmatprep.subr.bf16.mxu0 %v481
    %812 = vmatpush1.bf16.msra.mxu0 %v480
    %813 = vmatprep.subr.bf16.mxu0 %v485
    %814 = vmatpush1.bf16.msra.mxu0 %v484
    %815 = vmatprep.subr.bf16.mxu0 %v489
    %816 = vmatpush1.bf16.msra.mxu0 %v488
    %817 = vmatprep.subr.bf16.mxu0 %v493
    %818 = vmatpush1.bf16.msra.mxu0 %v492
    %819 = vmatprep.subr.bf16.mxu0 %v497
    %820 = vmatpush1.bf16.msra.mxu0 %v496
    %821 = vmatprep.subr.bf16.mxu0 %v501
    %822 = vmatpush1.bf16.msra.mxu0 %v500
    %823 = vmatprep.subr.bf16.mxu0 0
    %824 = vmatpush1.bf16.msra.mxu0 0
    %825 = vmatprep.subr.bf16.mxu0 0
    %826 = vmatpush1.bf16.msra.mxu0 0
    %827 = vmatprep.subr.bf16.mxu0 0
    %828 = vmatpush1.bf16.msra.mxu0 0
    %829 = vmatprep.subr.bf16.mxu0 0
    %830 = vmatpush1.bf16.msra.mxu0 0
    %831 = vmatprep.subr.bf16.mxu0 0
    %832 = vmatpush1.bf16.msra.mxu0 0
    %833 = vmatprep.subr.bf16.mxu0 0
    %834 = vmatpush1.bf16.msra.mxu0 0
    %835 = vmatprep.subr.bf16.mxu0 0
    %836 = vmatpush1.bf16.msra.mxu0 0
    %837 = vmatprep.subr.bf16.mxu0 0
    %838 = vmatpush1.bf16.msra.mxu0 0
    %839 = vmatprep.mubr.bf16.mxu0 0
    %840 = vmatmul.mubr.bf16.gmra.mrb[0].mxu0 %v765
    %v841 = vpop.f32.mrb[0].mxu0
    %v842 = vadd.f32 0.0, %v841
    %v843 = vpop.f32.mrb[0].mxu0
    %v844 = vadd.f32 0.0, %v843
    %v845 = vpop.f32.mrb[0].mxu0
    %v846 = vpop.f32.mrb[0].mxu0
    %847 = vdwg.mxu0
    %v848 = vadd.f32 %v761, %v801
    %v849 = vadd.f32 %v762, %v803
    %v850 = vadd.f32 %v763, %v842
    %v851 = vadd.f32 %v764, %v844
    %v852 = vxor.u32 %v848, 2147483648
    %v853 = vxor.u32 %v849, 2147483648
    %v854 = vxor.u32 %v850, 2147483648
    %v855 = vmul.f32 %v852, 1.442695
    %v856 = vpow.pop %v855
    %v857 = vmul.f32 %v853, 1.442695
    %v858 = vpow.pop %v857
    %v859 = vmul.f32 %v854, 1.442695
    %v860 = vpow.pop %v859
    %v861 = vadd.f32 %v856, 1.0
    %v862 = vadd.f32 %v858, 1.0
    %v863 = vadd.f32 %v860, 1.0
    %v864 = vrcp.pop %v861
    %v865 = vmul.f32 1.0, %v864
    %v866 = vrcp.pop %v862
    %v867 = vmul.f32 1.0, %v866
    %v868 = vrcp.pop %v863
    %v869 = vmul.f32 1.0, %v868
    %v870 = vtanh.pop %v851
    %v871 = vmul.f32 %v867, %v757
    %v872 = vmul.f32 %v865, %v870
    %v873 = vadd.f32 %v871, %v872
    %v874 = vtanh.pop %v873
    %v875 = vmul.f32 %v869, %v874
    %s876 = scalar_lea.vmem [#allocation4], 96
    %v877 = vld [vmem:[%s876] sm:$0xff]
    %v878 = vld [vmem:[%s876 + $0x8] sm:$0xff]
    %v879 = vld [vmem:[%s876 + $0x10] sm:$0xff]
    %v880 = vld [vmem:[%s876 + $0x18] sm:$0xff]
    %v881 = vpack.c.bf16 %v875, %v875
    %882 = vmatprep.subr.bf16.mxu0 %v471
    %883 = vmatpush1.bf16.msra.mxu0 %v470
    %884 = vmatprep.subr.bf16.mxu0 %v475
    %885 = vmatpush1.bf16.msra.mxu0 %v474
    %886 = vmatprep.subr.bf16.mxu0 %v479
    %887 = vmatpush1.bf16.msra.mxu0 %v478
    %888 = vmatprep.subr.bf16.mxu0 %v483
    %889 = vmatpush1.bf16.msra.mxu0 %v482
    %890 = vmatprep.subr.bf16.mxu0 %v487
    %891 = vmatpush1.bf16.msra.mxu0 %v486
    %892 = vmatprep.subr.bf16.mxu0 %v491
    %893 = vmatpush1.bf16.msra.mxu0 %v490
    %894 = vmatprep.subr.bf16.mxu0 %v495
    %895 = vmatpush1.bf16.msra.mxu0 %v494
    %896 = vmatprep.subr.bf16.mxu0 %v499
    %897 = vmatpush1.bf16.msra.mxu0 %v498
    %898 = vmatprep.subr.bf16.mxu0 0
    %899 = vmatpush1.bf16.msra.mxu0 0
    %900 = vmatprep.subr.bf16.mxu0 0
    %901 = vmatpush1.bf16.msra.mxu0 0
    %902 = vmatprep.subr.bf16.mxu0 0
    %903 = vmatpush1.bf16.msra.mxu0 0
    %904 = vmatprep.subr.bf16.mxu0 0
    %905 = vmatpush1.bf16.msra.mxu0 0
    %906 = vmatprep.subr.bf16.mxu0 0
    %907 = vmatpush1.bf16.msra.mxu0 0
    %908 = vmatprep.subr.bf16.mxu0 0
    %909 = vmatpush1.bf16.msra.mxu0 0
    %910 = vmatprep.subr.bf16.mxu0 0
    %911 = vmatpush1.bf16.msra.mxu0 0
    %912 = vmatprep.subr.bf16.mxu0 0
    %913 = vmatpush1.bf16.msra.mxu0 0
    %914 = vmatprep.mubr.bf16.mxu0 0
    %915 = vmatmul.mubr.bf16.gmra.mrb[0].mxu0 %v881
    %v916 = vpop.f32.mrb[0].mxu0
    %v917 = vadd.f32 0.0, %v916
    %v918 = vpop.f32.mrb[0].mxu0
    %v919 = vadd.f32 0.0, %v918
    %v920 = vpop.f32.mrb[0].mxu0
    %v921 = vpop.f32.mrb[0].mxu0
    %922 = vdwg.mxu0
    %923 = vmatprep.subr.bf16.mxu0 %v473
    %924 = vmatpush1.bf16.msra.mxu0 %v472
    %925 = vmatprep.subr.bf16.mxu0 %v477
    %926 = vmatpush1.bf16.msra.mxu0 %v476
    %927 = vmatprep.subr.bf16.mxu0 %v481
    %928 = vmatpush1.bf16.msra.mxu0 %v480
    %929 = vmatprep.subr.bf16.mxu0 %v485
    %930 = vmatpush1.bf16.msra.mxu0 %v484
    %931 = vmatprep.subr.bf16.mxu0 %v489
    %932 = vmatpush1.bf16.msra.mxu0 %v488
    %933 = vmatprep.subr.bf16.mxu0 %v493
    %934 = vmatpush1.bf16.msra.mxu0 %v492
    %935 = vmatprep.subr.bf16.mxu0 %v497
    %936 = vmatpush1.bf16.msra.mxu0 %v496
    %937 = vmatprep.subr.bf16.mxu0 %v501
    %938 = vmatpush1.bf16.msra.mxu0 %v500
    %939 = vmatprep.subr.bf16.mxu0 0
    %940 = vmatpush1.bf16.msra.mxu0 0
    %941 = vmatprep.subr.bf16.mxu0 0
    %942 = vmatpush1.bf16.msra.mxu0 0
    %943 = vmatprep.subr.bf16.mxu0 0
    %944 = vmatpush1.bf16.msra.mxu0 0
    %945 = vmatprep.subr.bf16.mxu0 0
    %946 = vmatpush1.bf16.msra.mxu0 0
    %947 = vmatprep.subr.bf16.mxu0 0
    %948 = vmatpush1.bf16.msra.mxu0 0
    %949 = vmatprep.subr.bf16.mxu0 0
    %950 = vmatpush1.bf16.msra.mxu0 0
    %951 = vmatprep.subr.bf16.mxu0 0
    %952 = vmatpush1.bf16.msra.mxu0 0
    %953 = vmatprep.subr.bf16.mxu0 0
    %954 = vmatpush1.bf16.msra.mxu0 0
    %955 = vmatprep.mubr.bf16.mxu0 0
    %956 = vmatmul.mubr.bf16.gmra.mrb[0].mxu0 %v881
    %v957 = vpop.f32.mrb[0].mxu0
    %v958 = vadd.f32 0.0, %v957
    %v959 = vpop.f32.mrb[0].mxu0
    %v960 = vadd.f32 0.0, %v959
    %v961 = vpop.f32.mrb[0].mxu0
    %v962 = vpop.f32.mrb[0].mxu0
    %963 = vdwg.mxu0
    %v964 = vadd.f32 %v877, %v917
    %v965 = vadd.f32 %v878, %v919
    %v966 = vadd.f32 %v879, %v958
    %v967 = vadd.f32 %v880, %v960
    %v968 = vxor.u32 %v964, 2147483648
    %v969 = vxor.u32 %v965, 2147483648
    %v970 = vxor.u32 %v966, 2147483648
    %v971 = vmul.f32 %v968, 1.442695
    %v972 = vpow.pop %v971
    %v973 = vmul.f32 %v969, 1.442695
    %v974 = vpow.pop %v973
    %v975 = vmul.f32 %v970, 1.442695
    %v976 = vpow.pop %v975
    %v977 = vadd.f32 %v972, 1.0
    %v978 = vadd.f32 %v974, 1.0
    %v979 = vadd.f32 %v976, 1.0
    %v980 = vrcp.pop %v977
    %v981 = vmul.f32 1.0, %v980
    %v982 = vrcp.pop %v978
    %v983 = vmul.f32 1.0, %v982
    %v984 = vrcp.pop %v979
    %v985 = vmul.f32 1.0, %v984
    %v986 = vtanh.pop %v967
    %v987 = vmul.f32 %v983, %v873
    %v988 = vmul.f32 %v981, %v986
    %v989 = vadd.f32 %v987, %v988
    %v990 = vtanh.pop %v989
    %v991 = vmul.f32 %v985, %v990
    %s992 = scalar_lea.vmem [#allocation4], 128
    %v993 = vld [vmem:[%s992] sm:$0xff]
    %v994 = vld [vmem:[%s992 + $0x8] sm:$0xff]
    %v995 = vld [vmem:[%s992 + $0x10] sm:$0xff]
    %v996 = vld [vmem:[%s992 + $0x18] sm:$0xff]
    %v997 = vpack.c.bf16 %v991, %v991
    %998 = vmatprep.subr.bf16.mxu0 %v471
    %999 = vmatpush1.bf16.msra.mxu0 %v470
    %1000 = vmatprep.subr.bf16.mxu0 %v475
    %1001 = vmatpush1.bf16.msra.mxu0 %v474
    %1002 = vmatprep.subr.bf16.mxu0 %v479
    %1003 = vmatpush1.bf16.msra.mxu0 %v478
    %1004 = vmatprep.subr.bf16.mxu0 %v483
    %1005 = vmatpush1.bf16.msra.mxu0 %v482
    %1006 = vmatprep.subr.bf16.mxu0 %v487
    %1007 = vmatpush1.bf16.msra.mxu0 %v486
    %1008 = vmatprep.subr.bf16.mxu0 %v491
    %1009 = vmatpush1.bf16.msra.mxu0 %v490
    %1010 = vmatprep.subr.bf16.mxu0 %v495
    %1011 = vmatpush1.bf16.msra.mxu0 %v494
    %1012 = vmatprep.subr.bf16.mxu0 %v499
    %1013 = vmatpush1.bf16.msra.mxu0 %v498
    %1014 = vmatprep.subr.bf16.mxu0 0
    %1015 = vmatpush1.bf16.msra.mxu0 0
    %1016 = vmatprep.subr.bf16.mxu0 0
    %1017 = vmatpush1.bf16.msra.mxu0 0
    %1018 = vmatprep.subr.bf16.mxu0 0
    %1019 = vmatpush1.bf16.msra.mxu0 0
    %1020 = vmatprep.subr.bf16.mxu0 0
    %1021 = vmatpush1.bf16.msra.mxu0 0
    %1022 = vmatprep.subr.bf16.mxu0 0
    %1023 = vmatpush1.bf16.msra.mxu0 0
    %1024 = vmatprep.subr.bf16.mxu0 0
    %1025 = vmatpush1.bf16.msra.mxu0 0
    %1026 = vmatprep.subr.bf16.mxu0 0
    %1027 = vmatpush1.bf16.msra.mxu0 0
    %1028 = vmatprep.subr.bf16.mxu0 0
    %1029 = vmatpush1.bf16.msra.mxu0 0
    %1030 = vmatprep.mubr.bf16.mxu0 0
    %1031 = vmatmul.mubr.bf16.gmra.mrb[0].mxu0 %v997
    %v1032 = vpop.f32.mrb[0].mxu0
    %v1033 = vadd.f32 0.0, %v1032
    %v1034 = vpop.f32.mrb[0].mxu0
    %v1035 = vadd.f32 0.0, %v1034
    %v1036 = vpop.f32.mrb[0].mxu0
    %v1037 = vpop.f32.mrb[0].mxu0
    %1038 = vdwg.mxu0
    %1039 = vmatprep.subr.bf16.mxu0 %v473
    %1040 = vmatpush1.bf16.msra.mxu0 %v472
    %1041 = vmatprep.subr.bf16.mxu0 %v477
    %1042 = vmatpush1.bf16.msra.mxu0 %v476
    %1043 = vmatprep.subr.bf16.mxu0 %v481
    %1044 = vmatpush1.bf16.msra.mxu0 %v480
    %1045 = vmatprep.subr.bf16.mxu0 %v485
    %1046 = vmatpush1.bf16.msra.mxu0 %v484
    %1047 = vmatprep.subr.bf16.mxu0 %v489
    %1048 = vmatpush1.bf16.msra.mxu0 %v488
    %1049 = vmatprep.subr.bf16.mxu0 %v493
    %1050 = vmatpush1.bf16.msra.mxu0 %v492
    %1051 = vmatprep.subr.bf16.mxu0 %v497
    %1052 = vmatpush1.bf16.msra.mxu0 %v496
    %1053 = vmatprep.subr.bf16.mxu0 %v501
    %1054 = vmatpush1.bf16.msra.mxu0 %v500
    %1055 = vmatprep.subr.bf16.mxu0 0
    %1056 = vmatpush1.bf16.msra.mxu0 0
    %1057 = vmatprep.subr.bf16.mxu0 0
    %1058 = vmatpush1.bf16.msra.mxu0 0
    %1059 = vmatprep.subr.bf16.mxu0 0
    %1060 = vmatpush1.bf16.msra.mxu0 0
    %1061 = vmatprep.subr.bf16.mxu0 0
    %1062 = vmatpush1.bf16.msra.mxu0 0
    %1063 = vmatprep.subr.bf16.mxu0 0
    %1064 = vmatpush1.bf16.msra.mxu0 0
    %1065 = vmatprep.subr.bf16.mxu0 0
    %1066 = vmatpush1.bf16.msra.mxu0 0
    %1067 = vmatprep.subr.bf16.mxu0 0
    %1068 = vmatpush1.bf16.msra.mxu0 0
    %1069 = vmatprep.subr.bf16.mxu0 0
    %1070 = vmatpush1.bf16.msra.mxu0 0
    %1071 = vmatprep.mubr.bf16.mxu0 0
    %1072 = vmatmul.mubr.bf16.gmra.mrb[0].mxu0 %v997
    %v1073 = vpop.f32.mrb[0].mxu0
    %v1074 = vadd.f32 0.0, %v1073
    %v1075 = vpop.f32.mrb[0].mxu0
    %v1076 = vadd.f32 0.0, %v1075
    %v1077 = vpop.f32.mrb[0].mxu0
    %v1078 = vpop.f32.mrb[0].mxu0
    %1079 = vdwg.mxu0
    %v1080 = vadd.f32 %v993, %v1033
    %v1081 = vadd.f32 %v994, %v1035
    %v1082 = vadd.f32 %v995, %v1074
    %v1083 = vadd.f32 %v996, %v1076
    %v1084 = vxor.u32 %v1080, 2147483648
    %v1085 = vxor.u32 %v1081, 2147483648
    %v1086 = vxor.u32 %v1082, 2147483648
    %v1087 = vmul.f32 %v1084, 1.442695
    %v1088 = vpow.pop %v1087
    %v1089 = vmul.f32 %v1085, 1.442695
    %v1090 = vpow.pop %v1089
    %v1091 = vmul.f32 %v1086, 1.442695
    %v1092 = vpow.pop %v1091
    %v1093 = vadd.f32 %v1088, 1.0
    %v1094 = vadd.f32 %v1090, 1.0
    %v1095 = vadd.f32 %v1092, 1.0
    %v1096 = vrcp.pop %v1093
    %v1097 = vmul.f32 1.0, %v1096
    %v1098 = vrcp.pop %v1094
    %v1099 = vmul.f32 1.0, %v1098
    %v1100 = vrcp.pop %v1095
    %v1101 = vmul.f32 1.0, %v1100
    %v1102 = vtanh.pop %v1083
    %v1103 = vmul.f32 %v1099, %v989
    %v1104 = vmul.f32 %v1097, %v1102
    %v1105 = vadd.f32 %v1103, %v1104
    %v1106 = vtanh.pop %v1105
    %v1107 = vmul.f32 %v1101, %v1106
    %s1108 = scalar_lea.vmem [#allocation4], 160
    %v1109 = vld [vmem:[%s1108] sm:$0xff]
    %v1110 = vld [vmem:[%s1108 + $0x8] sm:$0xff]
    %v1111 = vld [vmem:[%s1108 + $0x10] sm:$0xff]
    %v1112 = vld [vmem:[%s1108 + $0x18] sm:$0xff]
    %v1113 = vpack.c.bf16 %v1107, %v1107
    %1114 = vmatprep.subr.bf16.mxu0 %v471
    %1115 = vmatpush1.bf16.msra.mxu0 %v470
    %1116 = vmatprep.subr.bf16.mxu0 %v475
    %1117 = vmatpush1.bf16.msra.mxu0 %v474
    %1118 = vmatprep.subr.bf16.mxu0 %v479
    %1119 = vmatpush1.bf16.msra.mxu0 %v478
    %1120 = vmatprep.subr.bf16.mxu0 %v483
    %1121 = vmatpush1.bf16.msra.mxu0 %v482
    %1122 = vmatprep.subr.bf16.mxu0 %v487
    %1123 = vmatpush1.bf16.msra.mxu0 %v486
    %1124 = vmatprep.subr.bf16.mxu0 %v491
    %1125 = vmatpush1.bf16.msra.mxu0 %v490
    %1126 = vmatprep.subr.bf16.mxu0 %v495
    %1127 = vmatpush1.bf16.msra.mxu0 %v494
    %1128 = vmatprep.subr.bf16.mxu0 %v499
    %1129 = vmatpush1.bf16.msra.mxu0 %v498
    %1130 = vmatprep.subr.bf16.mxu0 0
    %1131 = vmatpush1.bf16.msra.mxu0 0
    %1132 = vmatprep.subr.bf16.mxu0 0
    %1133 = vmatpush1.bf16.msra.mxu0 0
    %1134 = vmatprep.subr.bf16.mxu0 0
    %1135 = vmatpush1.bf16.msra.mxu0 0
    %1136 = vmatprep.subr.bf16.mxu0 0
    %1137 = vmatpush1.bf16.msra.mxu0 0
    %1138 = vmatprep.subr.bf16.mxu0 0
    %1139 = vmatpush1.bf16.msra.mxu0 0
    %1140 = vmatprep.subr.bf16.mxu0 0
    %1141 = vmatpush1.bf16.msra.mxu0 0
    %1142 = vmatprep.subr.bf16.mxu0 0
    %1143 = vmatpush1.bf16.msra.mxu0 0
    %1144 = vmatprep.subr.bf16.mxu0 0
    %1145 = vmatpush1.bf16.msra.mxu0 0
    %1146 = vmatprep.mubr.bf16.mxu0 0
    %1147 = vmatmul.mubr.bf16.gmra.mrb[0].mxu0 %v1113
    %v1148 = vpop.f32.mrb[0].mxu0
    %v1149 = vadd.f32 0.0, %v1148
    %v1150 = vpop.f32.mrb[0].mxu0
    %v1151 = vadd.f32 0.0, %v1150
    %v1152 = vpop.f32.mrb[0].mxu0
    %v1153 = vpop.f32.mrb[0].mxu0
    %1154 = vdwg.mxu0
    %1155 = vmatprep.subr.bf16.mxu0 %v473
    %1156 = vmatpush1.bf16.msra.mxu0 %v472
    %1157 = vmatprep.subr.bf16.mxu0 %v477
    %1158 = vmatpush1.bf16.msra.mxu0 %v476
    %1159 = vmatprep.subr.bf16.mxu0 %v481
    %1160 = vmatpush1.bf16.msra.mxu0 %v480
    %1161 = vmatprep.subr.bf16.mxu0 %v485
    %1162 = vmatpush1.bf16.msra.mxu0 %v484
    %1163 = vmatprep.subr.bf16.mxu0 %v489
    %1164 = vmatpush1.bf16.msra.mxu0 %v488
    %1165 = vmatprep.subr.bf16.mxu0 %v493
    %1166 = vmatpush1.bf16.msra.mxu0 %v492
    %1167 = vmatprep.subr.bf16.mxu0 %v497
    %1168 = vmatpush1.bf16.msra.mxu0 %v496
    %1169 = vmatprep.subr.bf16.mxu0 %v501
    %1170 = vmatpush1.bf16.msra.mxu0 %v500
    %1171 = vmatprep.subr.bf16.mxu0 0
    %1172 = vmatpush1.bf16.msra.mxu0 0
    %1173 = vmatprep.subr.bf16.mxu0 0
    %1174 = vmatpush1.bf16.msra.mxu0 0
    %1175 = vmatprep.subr.bf16.mxu0 0
    %1176 = vmatpush1.bf16.msra.mxu0 0
    %1177 = vmatprep.subr.bf16.mxu0 0
    %1178 = vmatpush1.bf16.msra.mxu0 0
    %1179 = vmatprep.subr.bf16.mxu0 0
    %1180 = vmatpush1.bf16.msra.mxu0 0
    %1181 = vmatprep.subr.bf16.mxu0 0
    %1182 = vmatpush1.bf16.msra.mxu0 0
    %1183 = vmatprep.subr.bf16.mxu0 0
    %1184 = vmatpush1.bf16.msra.mxu0 0
    %1185 = vmatprep.subr.bf16.mxu0 0
    %1186 = vmatpush1.bf16.msra.mxu0 0
    %1187 = vmatprep.mubr.bf16.mxu0 0
    %1188 = vmatmul.mubr.bf16.gmra.mrb[0].mxu0 %v1113
    %v1189 = vpop.f32.mrb[0].mxu0
    %v1190 = vadd.f32 0.0, %v1189
    %v1191 = vpop.f32.mrb[0].mxu0
    %v1192 = vadd.f32 0.0, %v1191
    %v1193 = vpop.f32.mrb[0].mxu0
    %v1194 = vpop.f32.mrb[0].mxu0
    %1195 = vdwg.mxu0
    %v1196 = vadd.f32 %v1109, %v1149
    %v1197 = vadd.f32 %v1110, %v1151
    %v1198 = vadd.f32 %v1111, %v1190
    %v1199 = vadd.f32 %v1112, %v1192
    %v1200 = vxor.u32 %v1196, 2147483648
    %v1201 = vxor.u32 %v1197, 2147483648
    %v1202 = vxor.u32 %v1198, 2147483648
    %v1203 = vmul.f32 %v1200, 1.442695
    %v1204 = vpow.pop %v1203
    %v1205 = vmul.f32 %v1201, 1.442695
    %v1206 = vpow.pop %v1205
    %v1207 = vmul.f32 %v1202, 1.442695
    %v1208 = vpow.pop %v1207
    %v1209 = vadd.f32 %v1204, 1.0
    %v1210 = vadd.f32 %v1206, 1.0
    %v1211 = vadd.f32 %v1208, 1.0
    %v1212 = vrcp.pop %v1209
    %v1213 = vmul.f32 1.0, %v1212
    %v1214 = vrcp.pop %v1210
    %v1215 = vmul.f32 1.0, %v1214
    %v1216 = vrcp.pop %v1211
    %v1217 = vmul.f32 1.0, %v1216
    %v1218 = vtanh.pop %v1199
    %v1219 = vmul.f32 %v1215, %v1105
    %v1220 = vmul.f32 %v1213, %v1218
    %v1221 = vadd.f32 %v1219, %v1220
    %v1222 = vtanh.pop %v1221
    %v1223 = vmul.f32 %v1217, %v1222
    %s1224 = scalar_lea.vmem [#allocation4], 192
    %v1225 = vld [vmem:[%s1224] sm:$0xff]
    %v1226 = vld [vmem:[%s1224 + $0x8] sm:$0xff]
    %v1227 = vld [vmem:[%s1224 + $0x10] sm:$0xff]
    %v1228 = vld [vmem:[%s1224 + $0x18] sm:$0xff]
    %v1229 = vpack.c.bf16 %v1223, %v1223
    %1230 = vmatprep.subr.bf16.mxu0 %v471
    %1231 = vmatpush1.bf16.msra.mxu0 %v470
    %1232 = vmatprep.subr.bf16.mxu0 %v475
    %1233 = vmatpush1.bf16.msra.mxu0 %v474
    %1234 = vmatprep.subr.bf16.mxu0 %v479
    %1235 = vmatpush1.bf16.msra.mxu0 %v478
    %1236 = vmatprep.subr.bf16.mxu0 %v483
    %1237 = vmatpush1.bf16.msra.mxu0 %v482
    %1238 = vmatprep.subr.bf16.mxu0 %v487
    %1239 = vmatpush1.bf16.msra.mxu0 %v486
    %1240 = vmatprep.subr.bf16.mxu0 %v491
    %1241 = vmatpush1.bf16.msra.mxu0 %v490
    %1242 = vmatprep.subr.bf16.mxu0 %v495
    %1243 = vmatpush1.bf16.msra.mxu0 %v494
    %1244 = vmatprep.subr.bf16.mxu0 %v499
    %1245 = vmatpush1.bf16.msra.mxu0 %v498
    %1246 = vmatprep.subr.bf16.mxu0 0
    %1247 = vmatpush1.bf16.msra.mxu0 0
    %1248 = vmatprep.subr.bf16.mxu0 0
    %1249 = vmatpush1.bf16.msra.mxu0 0
    %1250 = vmatprep.subr.bf16.mxu0 0
    %1251 = vmatpush1.bf16.msra.mxu0 0
    %1252 = vmatprep.subr.bf16.mxu0 0
    %1253 = vmatpush1.bf16.msra.mxu0 0
    %1254 = vmatprep.subr.bf16.mxu0 0
    %1255 = vmatpush1.bf16.msra.mxu0 0
    %1256 = vmatprep.subr.bf16.mxu0 0
    %1257 = vmatpush1.bf16.msra.mxu0 0
    %1258 = vmatprep.subr.bf16.mxu0 0
    %1259 = vmatpush1.bf16.msra.mxu0 0
    %1260 = vmatprep.subr.bf16.mxu0 0
    %1261 = vmatpush1.bf16.msra.mxu0 0
    %1262 = vmatprep.mubr.bf16.mxu0 0
    %1263 = vmatmul.mubr.bf16.gmra.mrb[0].mxu0 %v1229
    %v1264 = vpop.f32.mrb[0].mxu0
    %v1265 = vadd.f32 0.0, %v1264
    %v1266 = vpop.f32.mrb[0].mxu0
    %v1267 = vadd.f32 0.0, %v1266
    %v1268 = vpop.f32.mrb[0].mxu0
    %v1269 = vpop.f32.mrb[0].mxu0
    %1270 = vdwg.mxu0
    %1271 = vmatprep.subr.bf16.mxu0 %v473
    %1272 = vmatpush1.bf16.msra.mxu0 %v472
    %1273 = vmatprep.subr.bf16.mxu0 %v477
    %1274 = vmatpush1.bf16.msra.mxu0 %v476
    %1275 = vmatprep.subr.bf16.mxu0 %v481
    %1276 = vmatpush1.bf16.msra.mxu0 %v480
    %1277 = vmatprep.subr.bf16.mxu0 %v485
    %1278 = vmatpush1.bf16.msra.mxu0 %v484
    %1279 = vmatprep.subr.bf16.mxu0 %v489
    %1280 = vmatpush1.bf16.msra.mxu0 %v488
    %1281 = vmatprep.subr.bf16.mxu0 %v493
    %1282 = vmatpush1.bf16.msra.mxu0 %v492
    %1283 = vmatprep.subr.bf16.mxu0 %v497
    %1284 = vmatpush1.bf16.msra.mxu0 %v496
    %1285 = vmatprep.subr.bf16.mxu0 %v501
    %1286 = vmatpush1.bf16.msra.mxu0 %v500
    %1287 = vmatprep.subr.bf16.mxu0 0
    %1288 = vmatpush1.bf16.msra.mxu0 0
    %1289 = vmatprep.subr.bf16.mxu0 0
    %1290 = vmatpush1.bf16.msra.mxu0 0
    %1291 = vmatprep.subr.bf16.mxu0 0
    %1292 = vmatpush1.bf16.msra.mxu0 0
    %1293 = vmatprep.subr.bf16.mxu0 0
    %1294 = vmatpush1.bf16.msra.mxu0 0
    %1295 = vmatprep.subr.bf16.mxu0 0
    %1296 = vmatpush1.bf16.msra.mxu0 0
    %1297 = vmatprep.subr.bf16.mxu0 0
    %1298 = vmatpush1.bf16.msra.mxu0 0
    %1299 = vmatprep.subr.bf16.mxu0 0
    %1300 = vmatpush1.bf16.msra.mxu0 0
    %1301 = vmatprep.subr.bf16.mxu0 0
    %1302 = vmatpush1.bf16.msra.mxu0 0
    %1303 = vmatprep.mubr.bf16.mxu0 0
    %1304 = vmatmul.mubr.bf16.gmra.mrb[0].mxu0 %v1229
    %v1305 = vpop.f32.mrb[0].mxu0
    %v1306 = vadd.f32 0.0, %v1305
    %v1307 = vpop.f32.mrb[0].mxu0
    %v1308 = vadd.f32 0.0, %v1307
    %v1309 = vpop.f32.mrb[0].mxu0
    %v1310 = vpop.f32.mrb[0].mxu0
    %1311 = vdwg.mxu0
    %v1312 = vadd.f32 %v1225, %v1265
    %v1313 = vadd.f32 %v1226, %v1267
    %v1314 = vadd.f32 %v1227, %v1306
    %v1315 = vadd.f32 %v1228, %v1308
    %v1316 = vxor.u32 %v1312, 2147483648
    %v1317 = vxor.u32 %v1313, 2147483648
    %v1318 = vxor.u32 %v1314, 2147483648
    %v1319 = vmul.f32 %v1316, 1.442695
    %v1320 = vpow.pop %v1319
    %v1321 = vmul.f32 %v1317, 1.442695
    %v1322 = vpow.pop %v1321
    %v1323 = vmul.f32 %v1318, 1.442695
    %v1324 = vpow.pop %v1323
    %v1325 = vadd.f32 %v1320, 1.0
    %v1326 = vadd.f32 %v1322, 1.0
    %v1327 = vadd.f32 %v1324, 1.0
    %v1328 = vrcp.pop %v1325
    %v1329 = vmul.f32 1.0, %v1328
    %v1330 = vrcp.pop %v1326
    %v1331 = vmul.f32 1.0, %v1330
    %v1332 = vrcp.pop %v1327
    %v1333 = vmul.f32 1.0, %v1332
    %v1334 = vtanh.pop %v1315
    %v1335 = vmul.f32 %v1331, %v1221
    %v1336 = vmul.f32 %v1329, %v1334
    %v1337 = vadd.f32 %v1335, %v1336
    %v1338 = vtanh.pop %v1337
    %v1339 = vmul.f32 %v1333, %v1338
    %s1340 = scalar_lea.vmem [#allocation4], 224
    %v1341 = vld [vmem:[%s1340] sm:$0xff]
    %v1342 = vld [vmem:[%s1340 + $0x8] sm:$0xff]
    %v1343 = vld [vmem:[%s1340 + $0x10] sm:$0xff]
    %v1344 = vld [vmem:[%s1340 + $0x18] sm:$0xff]
    %v1345 = vpack.c.bf16 %v1339, %v1339
    %1346 = vmatprep.subr.bf16.mxu0 %v471
    %1347 = vmatpush1.bf16.msra.mxu0 %v470
    %1348 = vmatprep.subr.bf16.mxu0 %v475
    %1349 = vmatpush1.bf16.msra.mxu0 %v474
    %1350 = vmatprep.subr.bf16.mxu0 %v479
    %1351 = vmatpush1.bf16.msra.mxu0 %v478
    %1352 = vmatprep.subr.bf16.mxu0 %v483
    %1353 = vmatpush1.bf16.msra.mxu0 %v482
    %1354 = vmatprep.subr.bf16.mxu0 %v487
    %1355 = vmatpush1.bf16.msra.mxu0 %v486
    %1356 = vmatprep.subr.bf16.mxu0 %v491
    %1357 = vmatpush1.bf16.msra.mxu0 %v490
    %1358 = vmatprep.subr.bf16.mxu0 %v495
    %1359 = vmatpush1.bf16.msra.mxu0 %v494
    %1360 = vmatprep.subr.bf16.mxu0 %v499
    %1361 = vmatpush1.bf16.msra.mxu0 %v498
    %1362 = vmatprep.subr.bf16.mxu0 0
    %1363 = vmatpush1.bf16.msra.mxu0 0
    %1364 = vmatprep.subr.bf16.mxu0 0
    %1365 = vmatpush1.bf16.msra.mxu0 0
    %1366 = vmatprep.subr.bf16.mxu0 0
    %1367 = vmatpush1.bf16.msra.mxu0 0
    %1368 = vmatprep.subr.bf16.mxu0 0
    %1369 = vmatpush1.bf16.msra.mxu0 0
    %1370 = vmatprep.subr.bf16.mxu0 0
    %1371 = vmatpush1.bf16.msra.mxu0 0
    %1372 = vmatprep.subr.bf16.mxu0 0
    %1373 = vmatpush1.bf16.msra.mxu0 0
    %1374 = vmatprep.subr.bf16.mxu0 0
    %1375 = vmatpush1.bf16.msra.mxu0 0
    %1376 = vmatprep.subr.bf16.mxu0 0
    %1377 = vmatpush1.bf16.msra.mxu0 0
    %1378 = vmatprep.mubr.bf16.mxu0 0
    %1379 = vmatmul.mubr.bf16.gmra.mrb[0].mxu0 %v1345
    %v1380 = vpop.f32.mrb[0].mxu0
    %v1381 = vadd.f32 0.0, %v1380
    %v1382 = vpop.f32.mrb[0].mxu0
    %v1383 = vadd.f32 0.0, %v1382
    %v1384 = vpop.f32.mrb[0].mxu0
    %v1385 = vpop.f32.mrb[0].mxu0
    %1386 = vdwg.mxu0
    %1387 = vmatprep.subr.bf16.mxu0 %v473
    %1388 = vmatpush1.bf16.msra.mxu0 %v472
    %1389 = vmatprep.subr.bf16.mxu0 %v477
    %1390 = vmatpush1.bf16.msra.mxu0 %v476
    %1391 = vmatprep.subr.bf16.mxu0 %v481
    %1392 = vmatpush1.bf16.msra.mxu0 %v480
    %1393 = vmatprep.subr.bf16.mxu0 %v485
    %1394 = vmatpush1.bf16.msra.mxu0 %v484
    %1395 = vmatprep.subr.bf16.mxu0 %v489
    %1396 = vmatpush1.bf16.msra.mxu0 %v488
    %1397 = vmatprep.subr.bf16.mxu0 %v493
    %1398 = vmatpush1.bf16.msra.mxu0 %v492
    %1399 = vmatprep.subr.bf16.mxu0 %v497
    %1400 = vmatpush1.bf16.msra.mxu0 %v496
    %1401 = vmatprep.subr.bf16.mxu0 %v501
    %1402 = vmatpush1.bf16.msra.mxu0 %v500
    %1403 = vmatprep.subr.bf16.mxu0 0
    %1404 = vmatpush1.bf16.msra.mxu0 0
    %1405 = vmatprep.subr.bf16.mxu0 0
    %1406 = vmatpush1.bf16.msra.mxu0 0
    %1407 = vmatprep.subr.bf16.mxu0 0
    %1408 = vmatpush1.bf16.msra.mxu0 0
    %1409 = vmatprep.subr.bf16.mxu0 0
    %1410 = vmatpush1.bf16.msra.mxu0 0
    %1411 = vmatprep.subr.bf16.mxu0 0
    %1412 = vmatpush1.bf16.msra.mxu0 0
    %1413 = vmatprep.subr.bf16.mxu0 0
    %1414 = vmatpush1.bf16.msra.mxu0 0
    %1415 = vmatprep.subr.bf16.mxu0 0
    %1416 = vmatpush1.bf16.msra.mxu0 0
    %1417 = vmatprep.subr.bf16.mxu0 0
    %1418 = vmatpush1.bf16.msra.mxu0 0
    %1419 = vmatprep.mubr.bf16.mxu0 0
    %1420 = vmatmul.mubr.bf16.gmra.mrb[0].mxu0 %v1345
    %v1421 = vpop.f32.mrb[0].mxu0
    %v1422 = vadd.f32 0.0, %v1421
    %v1423 = vpop.f32.mrb[0].mxu0
    %v1424 = vadd.f32 0.0, %v1423
    %v1425 = vpop.f32.mrb[0].mxu0
    %v1426 = vpop.f32.mrb[0].mxu0
    %1427 = vdwg.mxu0
    %v1428 = vadd.f32 %v1341, %v1381
    %v1429 = vadd.f32 %v1342, %v1383
    %v1430 = vadd.f32 %v1343, %v1422
    %v1431 = vadd.f32 %v1344, %v1424
    %v1432 = vxor.u32 %v1428, 2147483648
    %v1433 = vxor.u32 %v1429, 2147483648
    %v1434 = vxor.u32 %v1430, 2147483648
    %v1435 = vmul.f32 %v1432, 1.442695
    %v1436 = vpow.pop %v1435
    %v1437 = vmul.f32 %v1433, 1.442695
    %v1438 = vpow.pop %v1437
    %v1439 = vmul.f32 %v1434, 1.442695
    %v1440 = vpow.pop %v1439
    %v1441 = vadd.f32 %v1436, 1.0
    %v1442 = vadd.f32 %v1438, 1.0
    %v1443 = vadd.f32 %v1440, 1.0
    %v1444 = vrcp.pop %v1441
    %v1445 = vmul.f32 1.0, %v1444
    %v1446 = vrcp.pop %v1442
    %v1447 = vmul.f32 1.0, %v1446
    %v1448 = vrcp.pop %v1443
    %v1449 = vmul.f32 1.0, %v1448
    %v1450 = vtanh.pop %v1431
    %v1451 = vmul.f32 %v1447, %v1337
    %v1452 = vmul.f32 %v1445, %v1450
    %v1453 = vadd.f32 %v1451, %v1452
    %v1454 = vtanh.pop %v1453
    %v1455 = vmul.f32 %v1449, %v1454
    %1456 = vst [vmem:[#allocation2] sm:$0xff] %v1455
    %1457 = vst [vmem:[#allocation3] sm:$0xff] %v1453
    // Predicated region
    $region46: #{tpu_custom_call.1} parent=1 // pred_check
      %p1458 = pneg %p80
    $region47: #{tpu_custom_call.1} parent=1 // pred_check_branch
      %1460 = sbr.rel (%p1458) target = $region49
    $region48: #{tpu_custom_call.1} parent=1 // pred_region
      %v1461 = vpack.c.bf16 %v1455, %v1455
      %v1462 = vld [vmem:[#allocation11] sm:$0xf]
      %v1463 = vld [vmem:[#allocation11 + $0x4] sm:$0xf]
      %v1464 = vld [vmem:[#allocation11 + $0x8] sm:$0xf]
      %v1465 = vld [vmem:[#allocation11 + $0xc] sm:$0xf]
      %v1466 = vld [vmem:[#allocation11 + $0x10] sm:$0xf]
      %v1467 = vld [vmem:[#allocation11 + $0x14] sm:$0xf]
      %v1468 = vld [vmem:[#allocation11 + $0x18] sm:$0xf]
      %v1469 = vld [vmem:[#allocation11 + $0x1c] sm:$0xf]
      %v1470 = vld [vmem:[#allocation11 + $0x20] sm:$0xf]
      %v1471 = vld [vmem:[#allocation11 + $0x24] sm:$0xf]
      %v1472 = vld [vmem:[#allocation11 + $0x28] sm:$0xf]
      %v1473 = vld [vmem:[#allocation11 + $0x2c] sm:$0xf]
      %v1474 = vld [vmem:[#allocation11 + $0x30] sm:$0xf]
      %v1475 = vld [vmem:[#allocation11 + $0x34] sm:$0xf]
      %v1476 = vld [vmem:[#allocation11 + $0x38] sm:$0xf]
      %v1477 = vld [vmem:[#allocation11 + $0x3c] sm:$0xf]
      %v1478 = vld [vmem:[%s5] sm:$0x1]
      %v1480 = vlaneseq
      %v1481 = vshrl.u32 %v1480, 7
      %v1482 = vsub.s32 0, %v1481
      %v1483 = vrot.slane %v1478, %v1482
      %v1501 = vunpack.c.l.b16 %v1462
      %v1502 = vunpack.c.l.b16 %v1463
      %v1503 = vunpack.c.l.b16 %v1464
      %v1504 = vunpack.c.l.b16 %v1465
      %v1505 = vunpack.c.l.b16 %v1466
      %v1506 = vunpack.c.l.b16 %v1467
      %v1507 = vunpack.c.l.b16 %v1468
      %v1508 = vunpack.c.l.b16 %v1469
      %v1509 = vunpack.c.l.b16 %v1470
      %v1510 = vunpack.c.l.b16 %v1471
      %v1511 = vunpack.c.l.b16 %v1472
      %v1512 = vunpack.c.l.b16 %v1473
      %v1513 = vunpack.c.l.b16 %v1474
      %v1514 = vunpack.c.l.b16 %v1475
      %v1515 = vunpack.c.l.b16 %v1476
      %v1516 = vunpack.c.l.b16 %v1477
      %v1517 = vpack.c.b16 %v1502, %v1501
      %v1518 = vpack.c.b16 %v1504, %v1503
      %v1519 = vpack.c.b16 %v1506, %v1505
      %v1520 = vpack.c.b16 %v1508, %v1507
      %v1521 = vpack.c.b16 %v1510, %v1509
      %v1522 = vpack.c.b16 %v1512, %v1511
      %v1523 = vpack.c.b16 %v1514, %v1513
      %v1524 = vpack.c.b16 %v1516, %v1515
      %1533 = vmatprep.subr.bf16.mxu0 0
      %1534 = vmatpush1.bf16.msra.mxu0 %v1517
      %1535 = vmatprep.subr.bf16.mxu0 0
      %1536 = vmatpush1.bf16.msra.mxu0 %v1518
      %1537 = vmatprep.subr.bf16.mxu0 0
      %1538 = vmatpush1.bf16.msra.mxu0 %v1519
      %1539 = vmatprep.subr.bf16.mxu0 0
      %1540 = vmatpush1.bf16.msra.mxu0 %v1520
      %1541 = vmatprep.subr.bf16.mxu0 0
      %1542 = vmatpush1.bf16.msra.mxu0 %v1521
      %1543 = vmatprep.subr.bf16.mxu0 0
      %1544 = vmatpush1.bf16.msra.mxu0 %v1522
      %1545 = vmatprep.subr.bf16.mxu0 0
      %1546 = vmatpush1.bf16.msra.mxu0 %v1523
      %1547 = vmatprep.subr.bf16.mxu0 0
      %1548 = vmatpush1.bf16.msra.mxu0 %v1524
      %1549 = vmatprep.subr.bf16.mxu0 0
      %1550 = vmatpush1.bf16.msra.mxu0 0
      %1551 = vmatprep.subr.bf16.mxu0 0
      %1552 = vmatpush1.bf16.msra.mxu0 0
      %1553 = vmatprep.subr.bf16.mxu0 0
      %1554 = vmatpush1.bf16.msra.mxu0 0
      %1555 = vmatprep.subr.bf16.mxu0 0
      %1556 = vmatpush1.bf16.msra.mxu0 0
      %1557 = vmatprep.subr.bf16.mxu0 0
      %1558 = vmatpush1.bf16.msra.mxu0 0
      %1559 = vmatprep.subr.bf16.mxu0 0
      %1560 = vmatpush1.bf16.msra.mxu0 0
      %1561 = vmatprep.subr.bf16.mxu0 0
      %1562 = vmatpush1.bf16.msra.mxu0 0
      %1563 = vmatprep.subr.bf16.mxu0 0
      %1564 = vmatpush1.bf16.msra.mxu0 0
      %1565 = vmatprep.mubr.bf16.mxu0 0
      %1566 = vmatmul.mubr.bf16.gmra.mrb[0].mxu0 %v1461
      %v1567 = vpop.f32.mrb[0].mxu0
      %v1568 = vadd.f32 %v1483, %v1567
      %v1569 = vpop.f32.mrb[0].mxu0
      %v1570 = vpop.f32.mrb[0].mxu0
      %v1571 = vpop.f32.mrb[0].mxu0
      %1572 = vdwg.mxu0
      %1573 = vst [vmem:[#allocation13] sm:$0xff] %v1568
    $region49: #{tpu_custom_call.1} parent=1 // pred_fallthru
      _
    // Predicated region
    $region50: #{tpu_custom_call.1} parent=1 // pred_check
      _
    $region51: #{tpu_custom_call.1} parent=1 // pred_check_branch
      %1575 = sbr.rel (0) target = $region53
    $region52: #{tpu_custom_call.1} parent=1 // pred_region
      %s1577 = ssub.s32 128, 128
      %1578 = vsyncadd [#allocation7], %s1577
      %s1580 = sshll.u32 [#allocation13], 4
      %s1581 = int_to_ptr.vmem [resolvable:$true] %s1580
      %1583 = dma.vmem_to_hbm [thread:$0]  %s1581, 128, %s6, [#allocation7]
    $region53: #{tpu_custom_call.1} parent=1 // pred_fallthru
      _
    // Predicated region
    $region54: #{tpu_custom_call.1} parent=1 // pred_check
      _
    $region55: #{tpu_custom_call.1} parent=1 // pred_check_branch
      %1585 = sbr.rel (0) target = $region57
    $region56: #{tpu_custom_call.1} parent=1 // pred_region
      %1586 = dma.done [#allocation7], 128
    $region57: #{tpu_custom_call.1} parent=1 // pred_fallthru
      _
    %1587 = vsyncpa [#allocation6], 1
    %1588 = vsyncpa [#allocation9], 1
    %1589 = vsyncpa [#allocation12], 1
    %1590 = vsyncpa [#allocation7], 1

// kernel: tpu_custom_call.1
$region0: #{tpu_custom_call.1}
  #allocation0 [shape = 'u32[]', space=smem, size = 0x4, offset = 0x4, fixed_abs, tag = 'smem constant byte address 0x4 - core index']
  #allocation1 [shape = 'u32[144,128]{1,0:T(1,128)}', space=vmem, size = 0x12000, scoped, tag = 'internal scratch']
  #allocation2 [shape = 'f32[8,128]{1,0:T(8,128)}', space=vmem, size = 0x1000, scoped, tag = 'scratch operand']
  #allocation3 [shape = 'f32[8,128]{1,0:T(8,128)}', space=vmem, size = 0x1000, scoped, tag = 'scratch operand']
  #allocation4 [shape = 'f32[8,8,512]{2,1,0:T(8,128)}', space=vmem, size = 0x20000, scoped, tag = 'scratch operand']
  %s0 = inlined_call_operand.hbm [shape: f32[8,8,16], index: 0, kind: input, shape index: {}]
  %s1 = inlined_call_operand.hbm [shape: bf16[16,512], index: 1, kind: input, shape index: {}]
  %s2 = inlined_call_operand.hbm [shape: bf16[128,512], index: 2, kind: input, shape index: {}]
  %s3 = inlined_call_operand.vmem [shape: f32[1,512], index: 3, kind: input, shape index: {}]
  %s4 = inlined_call_operand.hbm [shape: bf16[128,128], index: 4, kind: input, shape index: {}]
  %s5 = inlined_call_operand.vmem [shape: f32[1,128], index: 5, kind: input, shape index: {}]
  %s6 = inlined_call_operand.hbm [shape: f32[8,128], index: 6, kind: output, shape index: {}]
  %s7 = sld [smem:[#allocation0]]
  $region58: #{tpu_custom_call.1} parent=0
    _
  %s9 = ssub.s32 1, %s7
  %s10 = scalar_select 0, %s9, %s7
  $region1: #{tpu_custom_call.1} parent=0
    #allocation5 [shape = 'u8[32768]{0}', space=vmem, size = 0x8000, scoped, tag = 'input window, operand 0, single buffered']
    #allocation6 [shape = 's32[1]{0}', space=sflag, size = 0x4, scoped, tag = 'scoped memory for tpu_custom_call.1']
    #allocation7 [shape = 's32[1]{0}', space=sflag, size = 0x4, scoped, tag = 'scoped memory for tpu_custom_call.1']
    #allocation8 [shape = 'u8[16384]{0}', space=vmem, size = 0x4000, scoped, tag = 'input window, operand 1, single buffered']
    #allocation9 [shape = 's32[1]{0}', space=sflag, size = 0x4, scoped, tag = 'scoped memory for tpu_custom_call.1']
    #allocation10 [shape = 'u8[131072]{0}', space=vmem, size = 0x20000, scoped, tag = 'input window, operand 2, single buffered']
    #allocation11 [shape = 'u8[32768]{0}', space=vmem, size = 0x8000, scoped, tag = 'input window, operand 4, single buffered']
    #allocation12 [shape = 's32[1]{0}', space=sflag, size = 0x4, scoped, tag = 'scoped memory for tpu_custom_call.1']
    #allocation13 [shape = 'u8[4096]{0}', space=vmem, size = 0x1000, scoped, tag = 'output window, operand 0, single buffered']
    %11 = vsyncpa [#allocation6], 0
    %12 = vsyncpa [#allocation9], 0
    %13 = vsyncpa [#allocation12], 0
    %14 = vsyncpa [#allocation7], 0
    // Predicated region
    $region2: #{tpu_custom_call.1} parent=1 // pred_check
      _
    $region3: #{tpu_custom_call.1} parent=1 // pred_check_branch
      %16 = sbr.rel (0) target = $region5
    $region4: #{tpu_custom_call.1} parent=1 // pred_region
      %s18 = ssub.s32 1024, 1024
      %19 = vsyncadd [#allocation6], %s18
      %s20 = sshll.u32 [#allocation5], 4
      %s21 = int_to_ptr.vmem [resolvable:$true] %s20
      %26 = dma.hbm_to_vmem [thread:$0]  %s0, 1024, %s21, [#allocation6], 128, 128, 8
    $region5: #{tpu_custom_call.1} parent=1 // pred_fallthru
      _
    // Predicated region
    $region6: #{tpu_custom_call.1} parent=1 // pred_check
      _
    $region7: #{tpu_custom_call.1} parent=1 // pred_check_branch
      %28 = sbr.rel (0) target = $region9
    $region8: #{tpu_custom_call.1} parent=1 // pred_region
      %s30 = ssub.s32 512, 512
      %31 = vsyncadd [#allocation9], %s30
      %s32 = sshll.u32 [#allocation8], 4
      %s33 = int_to_ptr.vmem [resolvable:$true] %s32
      %38 = dma.hbm_to_vmem [thread:$0]  %s1, 512, %s33, [#allocation9], 256, 256, 16
    $region9: #{tpu_custom_call.1} parent=1 // pred_fallthru
      _
    // Predicated region
    $region10: #{tpu_custom_call.1} parent=1 // pred_check
      _
    $region11: #{tpu_custom_call.1} parent=1 // pred_check_branch
      %40 = sbr.rel (0) target = $region13
    $region12: #{tpu_custom_call.1} parent=1 // pred_region
      %s42 = ssub.s32 4096, 4096
      %43 = vsyncadd [#allocation9], %s42
      %s44 = sshll.u32 [#allocation10], 4
      %s45 = int_to_ptr.vmem [resolvable:$true] %s44
      %50 = dma.hbm_to_vmem [thread:$0]  %s2, 4096, %s45, [#allocation9], 256, 256, 16
    $region13: #{tpu_custom_call.1} parent=1 // pred_fallthru
      _
    // Predicated region
    $region14: #{tpu_custom_call.1} parent=1 // pred_check
      _
    $region15: #{tpu_custom_call.1} parent=1 // pred_check_branch
      %52 = sbr.rel (0) target = $region17
    $region16: #{tpu_custom_call.1} parent=1 // pred_region
      _
    $region17: #{tpu_custom_call.1} parent=1 // pred_fallthru
      _
    // Predicated region
    $region18: #{tpu_custom_call.1} parent=1 // pred_check
      _
    $region19: #{tpu_custom_call.1} parent=1 // pred_check_branch
      %54 = sbr.rel (0) target = $region21
    $region20: #{tpu_custom_call.1} parent=1 // pred_region
      %s56 = ssub.s32 1024, 1024
      %57 = vsyncadd [#allocation12], %s56
      %s58 = sshll.u32 [#allocation11], 4
      %s59 = int_to_ptr.vmem [resolvable:$true] %s58
      %64 = dma.hbm_to_vmem [thread:$0]  %s4, 1024, %s59, [#allocation12], 64, 64, 4
    $region21: #{tpu_custom_call.1} parent=1 // pred_fallthru
      _
    // Predicated region
    $region22: #{tpu_custom_call.1} parent=1 // pred_check
      _
    $region23: #{tpu_custom_call.1} parent=1 // pred_check_branch
      %66 = sbr.rel (0) target = $region25
    $region24: #{tpu_custom_call.1} parent=1 // pred_region
      _
    $region25: #{tpu_custom_call.1} parent=1 // pred_fallthru
      _
    // Predicated region
    $region26: #{tpu_custom_call.1} parent=1 // pred_check
      _
    $region27: #{tpu_custom_call.1} parent=1 // pred_check_branch
      %68 = sbr.rel (0) target = $region29
    $region28: #{tpu_custom_call.1} parent=1 // pred_region
      %69 = dma.done [#allocation6], 1024
    $region29: #{tpu_custom_call.1} parent=1 // pred_fallthru
      _
    // Predicated region
    $region30: #{tpu_custom_call.1} parent=1 // pred_check
      _
    $region31: #{tpu_custom_call.1} parent=1 // pred_check_branch
      %71 = sbr.rel (0) target = $region33
    $region32: #{tpu_custom_call.1} parent=1 // pred_region
      %72 = dma.done [#allocation9], 512
    $region33: #{tpu_custom_call.1} parent=1 // pred_fallthru
      _
    // Predicated region
    $region34: #{tpu_custom_call.1} parent=1 // pred_check
      _
    $region35: #{tpu_custom_call.1} parent=1 // pred_check_branch
      %74 = sbr.rel (0) target = $region37
    $region36: #{tpu_custom_call.1} parent=1 // pred_region
      %75 = dma.done [#allocation9], 4096
    $region37: #{tpu_custom_call.1} parent=1 // pred_fallthru
      _
    // Predicated region
    $region38: #{tpu_custom_call.1} parent=1 // pred_check
      _
    $region39: #{tpu_custom_call.1} parent=1 // pred_check_branch
      %77 = sbr.rel (0) target = $region41
    $region40: #{tpu_custom_call.1} parent=1 // pred_region
      %78 = dma.done [#allocation12], 1024
    $region41: #{tpu_custom_call.1} parent=1 // pred_fallthru
      _
    %p80 = scmp.eq.s32.totalorder 0, 0
    // Predicated region
    $region42: #{tpu_custom_call.1} parent=1 // pred_check
      %p81 = pneg %p80
    $region43: #{tpu_custom_call.1} parent=1 // pred_check_branch
      %83 = sbr.rel (%p81) target = $region45
    $region44: #{tpu_custom_call.1} parent=1 // pred_region
      %84 = vst [vmem:[#allocation2] sm:$0xff] 0.0
      %85 = vst [vmem:[#allocation3] sm:$0xff] 0.0
    $region45: #{tpu_custom_call.1} parent=1 // pred_fallthru
      _
    %v86 = vld [vmem:[#allocation5] sm:$0xff]
    %v87 = vld [vmem:[#allocation5 + $0x8] sm:$0xff]
    %v88 = vld [vmem:[#allocation5 + $0x10] sm:$0xff]
    %v89 = vld [vmem:[#allocation5 + $0x18] sm:$0xff]
    %v90 = vld [vmem:[#allocation5 + $0x20] sm:$0xff]
    %v91 = vld [vmem:[#allocation5 + $0x28] sm:$0xff]
    %v92 = vld [vmem:[#allocation5 + $0x30] sm:$0xff]
    %v93 = vld [vmem:[#allocation5 + $0x38] sm:$0xff]
    %v94 = vpack.c.bf16 %v87, %v86
    %v95 = vpack.c.bf16 %v89, %v88
    %v96 = vpack.c.bf16 %v91, %v90
    %v97 = vpack.c.bf16 %v93, %v92
    %v98 = vld [vmem:[#allocation8] sm:$0xff]
    %v99 = vld [vmem:[#allocation8 + $0x8] sm:$0xff]
    %v100 = vld [vmem:[#allocation8 + $0x10] sm:$0xff]
    %v101 = vld [vmem:[#allocation8 + $0x18] sm:$0xff]
    %v102 = vld [vmem:[%s3] sm:$0xf]
    %v104 = vlaneseq
    %v105 = vshrl.u32 %v104, 7
    %v106 = vsub.s32 0, %v105
    %v107 = vrot.slane %v102, %v106
    %v108 = vlaneseq
    %v109 = vshrl.u32 %v108, 7
    %v110 = vsub.s32 1, %v109
    %v111 = vrot.slane %v102, %v110
    %v112 = vlaneseq
    %v113 = vshrl.u32 %v112, 7
    %v114 = vsub.s32 2, %v113
    %v115 = vrot.slane %v102, %v114
    %v116 = vlaneseq
    %v117 = vshrl.u32 %v116, 7
    %v118 = vsub.s32 3, %v117
    %v119 = vrot.slane %v102, %v118
    %v128 = vunpack.c.l.b16 %v98
    %v129 = vunpack.c.h.b16 %v98
    %v130 = vunpack.c.l.b16 %v99
    %v131 = vunpack.c.h.b16 %v99
    %v132 = vunpack.c.l.b16 %v100
    %v133 = vunpack.c.h.b16 %v100
    %v134 = vunpack.c.l.b16 %v101
    %v135 = vunpack.c.h.b16 %v101
    %v136 = vpack.c.b16 %v132, %v128
    %v137 = vpack.c.b16 %v133, %v129
    %v138 = vpack.c.b16 %v134, %v130
    %v139 = vpack.c.b16 %v135, %v131
    %vm144 = vcmask 130048
    %v146 = vsel %vm144, %v94, 0
    %v149 = vsel %vm144, %v95, 0
    %v152 = vsel %vm144, %v96, 0
    %v155 = vsel %vm144, %v97, 0
    %157 = vmatprep.subr.bf16.mxu0 %v137
    %158 = vmatpush1.bf16.msra.mxu0 %v136
    %159 = vmatprep.subr.bf16.mxu0 0
    %160 = vmatpush1.bf16.msra.mxu0 0
    %161 = vmatprep.subr.bf16.mxu0 0
    %162 = vmatpush1.bf16.msra.mxu0 0
    %163 = vmatprep.subr.bf16.mxu0 0
    %164 = vmatpush1.bf16.msra.mxu0 0
    %165 = vmatprep.subr.bf16.mxu0 0
    %166 = vmatpush1.bf16.msra.mxu0 0
    %167 = vmatprep.subr.bf16.mxu0 0
    %168 = vmatpush1.bf16.msra.mxu0 0
    %169 = vmatprep.subr.bf16.mxu0 0
    %170 = vmatpush1.bf16.msra.mxu0 0
    %171 = vmatprep.subr.bf16.mxu0 0
    %172 = vmatpush1.bf16.msra.mxu0 0
    %173 = vmatprep.subr.bf16.mxu0 0
    %174 = vmatpush1.bf16.msra.mxu0 0
    %175 = vmatprep.subr.bf16.mxu0 0
    %176 = vmatpush1.bf16.msra.mxu0 0
    %177 = vmatprep.subr.bf16.mxu0 0
    %178 = vmatpush1.bf16.msra.mxu0 0
    %179 = vmatprep.subr.bf16.mxu0 0
    %180 = vmatpush1.bf16.msra.mxu0 0
    %181 = vmatprep.subr.bf16.mxu0 0
    %182 = vmatpush1.bf16.msra.mxu0 0
    %183 = vmatprep.subr.bf16.mxu0 0
    %184 = vmatpush1.bf16.msra.mxu0 0
    %185 = vmatprep.subr.bf16.mxu0 0
    %186 = vmatpush1.bf16.msra.mxu0 0
    %187 = vmatprep.subr.bf16.mxu0 0
    %188 = vmatpush1.bf16.msra.mxu0 0
    %189 = vmatprep.mubr.bf16.mxu0 0
    %190 = vmatmul.mubr.bf16.gmra.mrb[0].mxu0 %v146
    %v191 = vpop.f32.mrb[0].mxu0
    %v192 = vadd.f32 %v107, %v191
    %v193 = vpop.f32.mrb[0].mxu0
    %v194 = vadd.f32 %v111, %v193
    %v195 = vpop.f32.mrb[0].mxu0
    %v196 = vadd.f32 %v107, %v195
    %v197 = vpop.f32.mrb[0].mxu0
    %v198 = vadd.f32 %v111, %v197
    %199 = vmatprep.mubr.bf16.mxu0 0
    %200 = vmatmul.mubr.bf16.gmra.mrb[0].mxu0 %v149
    %v201 = vpop.f32.mrb[0].mxu0
    %v202 = vadd.f32 %v107, %v201
    %v203 = vpop.f32.mrb[0].mxu0
    %v204 = vadd.f32 %v111, %v203
    %v205 = vpop.f32.mrb[0].mxu0
    %v206 = vadd.f32 %v107, %v205
    %v207 = vpop.f32.mrb[0].mxu0
    %v208 = vadd.f32 %v111, %v207
    %209 = vmatprep.mubr.bf16.mxu0 0
    %210 = vmatmul.mubr.bf16.gmra.mrb[0].mxu0 %v152
    %v211 = vpop.f32.mrb[0].mxu0
    %v212 = vadd.f32 %v107, %v211
    %v213 = vpop.f32.mrb[0].mxu0
    %v214 = vadd.f32 %v111, %v213
    %v215 = vpop.f32.mrb[0].mxu0
    %v216 = vadd.f32 %v107, %v215
    %v217 = vpop.f32.mrb[0].mxu0
    %v218 = vadd.f32 %v111, %v217
    %219 = vmatprep.mubr.bf16.mxu0 0
    %220 = vmatmul.mubr.bf16.gmra.mrb[0].mxu0 %v155
    %v221 = vpop.f32.mrb[0].mxu0
    %v222 = vadd.f32 %v107, %v221
    %v223 = vpop.f32.mrb[0].mxu0
    %v224 = vadd.f32 %v111, %v223
    %v225 = vpop.f32.mrb[0].mxu0
    %v226 = vadd.f32 %v107, %v225
    %v227 = vpop.f32.mrb[0].mxu0
    %v228 = vadd.f32 %v111, %v227
    %229 = vdwg.mxu0
    %230 = vmatprep.subr.bf16.mxu0 %v139
    %231 = vmatpush1.bf16.msra.mxu0 %v138
    %232 = vmatprep.subr.bf16.mxu0 0
    %233 = vmatpush1.bf16.msra.mxu0 0
    %234 = vmatprep.subr.bf16.mxu0 0
    %235 = vmatpush1.bf16.msra.mxu0 0
    %236 = vmatprep.subr.bf16.mxu0 0
    %237 = vmatpush1.bf16.msra.mxu0 0
    %238 = vmatprep.subr.bf16.mxu0 0
    %239 = vmatpush1.bf16.msra.mxu0 0
    %240 = vmatprep.subr.bf16.mxu0 0
    %241 = vmatpush1.bf16.msra.mxu0 0
    %242 = vmatprep.subr.bf16.mxu0 0
    %243 = vmatpush1.bf16.msra.mxu0 0
    %244 = vmatprep.subr.bf16.mxu0 0
    %245 = vmatpush1.bf16.msra.mxu0 0
    %246 = vmatprep.subr.bf16.mxu0 0
    %247 = vmatpush1.bf16.msra.mxu0 0
    %248 = vmatprep.subr.bf16.mxu0 0
    %249 = vmatpush1.bf16.msra.mxu0 0
    %250 = vmatprep.subr.bf16.mxu0 0
    %251 = vmatpush1.bf16.msra.mxu0 0
    %252 = vmatprep.subr.bf16.mxu0 0
    %253 = vmatpush1.bf16.msra.mxu0 0
    %254 = vmatprep.subr.bf16.mxu0 0
    %255 = vmatpush1.bf16.msra.mxu0 0
    %256 = vmatprep.subr.bf16.mxu0 0
    %257 = vmatpush1.bf16.msra.mxu0 0
    %258 = vmatprep.subr.bf16.mxu0 0
    %259 = vmatpush1.bf16.msra.mxu0 0
    %260 = vmatprep.subr.bf16.mxu0 0
    %261 = vmatpush1.bf16.msra.mxu0 0
    %262 = vmatprep.mubr.bf16.mxu0 0
    %263 = vmatmul.mubr.bf16.gmra.mrb[0].mxu0 %v146
    %v264 = vpop.f32.mrb[0].mxu0
    %v265 = vadd.f32 %v115, %v264
    %v266 = vpop.f32.mrb[0].mxu0
    %v267 = vadd.f32 %v119, %v266
    %v268 = vpop.f32.mrb[0].mxu0
    %v269 = vadd.f32 %v115, %v268
    %v270 = vpop.f32.mrb[0].mxu0
    %v271 = vadd.f32 %v119, %v270
    %272 = vmatprep.mubr.bf16.mxu0 0
    %273 = vmatmul.mubr.bf16.gmra.mrb[0].mxu0 %v149
    %v274 = vpop.f32.mrb[0].mxu0
    %v275 = vadd.f32 %v115, %v274
    %v276 = vpop.f32.mrb[0].mxu0
    %v277 = vadd.f32 %v119, %v276
    %v278 = vpop.f32.mrb[0].mxu0
    %v279 = vadd.f32 %v115, %v278
    %v280 = vpop.f32.mrb[0].mxu0
    %v281 = vadd.f32 %v119, %v280
    %282 = vmatprep.mubr.bf16.mxu0 0
    %283 = vmatmul.mubr.bf16.gmra.mrb[0].mxu0 %v152
    %v284 = vpop.f32.mrb[0].mxu0
    %v285 = vadd.f32 %v115, %v284
    %v286 = vpop.f32.mrb[0].mxu0
    %v287 = vadd.f32 %v119, %v286
    %v288 = vpop.f32.mrb[0].mxu0
    %v289 = vadd.f32 %v115, %v288
    %v290 = vpop.f32.mrb[0].mxu0
    %v291 = vadd.f32 %v119, %v290
    %292 = vmatprep.mubr.bf16.mxu0 0
    %293 = vmatmul.mubr.bf16.gmra.mrb[0].mxu0 %v155
    %v294 = vpop.f32.mrb[0].mxu0
    %v295 = vadd.f32 %v115, %v294
    %v296 = vpop.f32.mrb[0].mxu0
    %v297 = vadd.f32 %v119, %v296
    %v298 = vpop.f32.mrb[0].mxu0
    %v299 = vadd.f32 %v115, %v298
    %v300 = vpop.f32.mrb[0].mxu0
    %v301 = vadd.f32 %v119, %v300
    %302 = vdwg.mxu0
    %303 = vst [vmem:[#allocation4] sm:$0xff] %v192
    %304 = vst [vmem:[#allocation4 + $0x8] sm:$0xff] %v194
    %305 = vst [vmem:[#allocation4 + $0x10] sm:$0xff] %v265
    %306 = vst [vmem:[#allocation4 + $0x18] sm:$0xff] %v267
    %307 = vst [vmem:[#allocation4 + $0x20] sm:$0xff] %v196
    %308 = vst [vmem:[#allocation4 + $0x28] sm:$0xff] %v198
    %309 = vst [vmem:[#allocation4 + $0x30] sm:$0xff] %v269
    %310 = vst [vmem:[#allocation4 + $0x38] sm:$0xff] %v271
    %311 = vst [vmem:[#allocation4 + $0x40] sm:$0xff] %v202
    %312 = vst [vmem:[#allocation4 + $0x48] sm:$0xff] %v204
    %313 = vst [vmem:[#allocation4 + $0x50] sm:$0xff] %v275
    %314 = vst [vmem:[#allocation4 + $0x58] sm:$0xff] %v277
    %315 = vst [vmem:[#allocation4 + $0x60] sm:$0xff] %v206
    %316 = vst [vmem:[#allocation4 + $0x68] sm:$0xff] %v208
    %317 = vst [vmem:[#allocation4 + $0x70] sm:$0xff] %v279
    %318 = vst [vmem:[#allocation4 + $0x78] sm:$0xff] %v281
    %319 = vst [vmem:[#allocation4 + $0x80] sm:$0xff] %v212
    %320 = vst [vmem:[#allocation4 + $0x88] sm:$0xff] %v214
    %321 = vst [vmem:[#allocation4 + $0x90] sm:$0xff] %v285
    %322 = vst [vmem:[#allocation4 + $0x98] sm:$0xff] %v287
    %323 = vst [vmem:[#allocation4 + $0xa0] sm:$0xff] %v216
    %324 = vst [vmem:[#allocation4 + $0xa8] sm:$0xff] %v218
    %325 = vst [vmem:[#allocation4 + $0xb0] sm:$0xff] %v289
    %326 = vst [vmem:[#allocation4 + $0xb8] sm:$0xff] %v291
    %327 = vst [vmem:[#allocation4 + $0xc0] sm:$0xff] %v222
    %328 = vst [vmem:[#allocation4 + $0xc8] sm:$0xff] %v224
    %329 = vst [vmem:[#allocation4 + $0xd0] sm:$0xff] %v295
    %330 = vst [vmem:[#allocation4 + $0xd8] sm:$0xff] %v297
    %331 = vst [vmem:[#allocation4 + $0xe0] sm:$0xff] %v226
    %332 = vst [vmem:[#allocation4 + $0xe8] sm:$0xff] %v228
    %333 = vst [vmem:[#allocation4 + $0xf0] sm:$0xff] %v299
    %334 = vst [vmem:[#allocation4 + $0xf8] sm:$0xff] %v301
    %v335 = vld [vmem:[#allocation10] sm:$0xff]
    %v336 = vld [vmem:[#allocation10 + $0x8] sm:$0xff]
    %v337 = vld [vmem:[#allocation10 + $0x10] sm:$0xff]
    %v338 = vld [vmem:[#allocation10 + $0x18] sm:$0xff]
    %v339 = vld [vmem:[#allocation10 + $0x20] sm:$0xff]
    %v340 = vld [vmem:[#allocation10 + $0x28] sm:$0xff]
    %v341 = vld [vmem:[#allocation10 + $0x30] sm:$0xff]
    %v342 = vld [vmem:[#allocation10 + $0x38] sm:$0xff]
    %v343 = vld [vmem:[#allocation10 + $0x40] sm:$0xff]
    %v344 = vld [vmem:[#allocation10 + $0x48] sm:$0xff]
    %v345 = vld [vmem:[#allocation10 + $0x50] sm:$0xff]
    %v346 = vld [vmem:[#allocation10 + $0x58] sm:$0xff]
    %v347 = vld [vmem:[#allocation10 + $0x60] sm:$0xff]
    %v348 = vld [vmem:[#allocation10 + $0x68] sm:$0xff]
    %v349 = vld [vmem:[#allocation10 + $0x70] sm:$0xff]
    %v350 = vld [vmem:[#allocation10 + $0x78] sm:$0xff]
    %v351 = vld [vmem:[#allocation10 + $0x80] sm:$0xff]
    %v352 = vld [vmem:[#allocation10 + $0x88] sm:$0xff]
    %v353 = vld [vmem:[#allocation10 + $0x90] sm:$0xff]
    %v354 = vld [vmem:[#allocation10 + $0x98] sm:$0xff]
    %v355 = vld [vmem:[#allocation10 + $0xa0] sm:$0xff]
    %v356 = vld [vmem:[#allocation10 + $0xa8] sm:$0xff]
    %v357 = vld [vmem:[#allocation10 + $0xb0] sm:$0xff]
    %v358 = vld [vmem:[#allocation10 + $0xb8] sm:$0xff]
    %v359 = vld [vmem:[#allocation10 + $0xc0] sm:$0xff]
    %v360 = vld [vmem:[#allocation10 + $0xc8] sm:$0xff]
    %v361 = vld [vmem:[#allocation10 + $0xd0] sm:$0xff]
    %v362 = vld [vmem:[#allocation10 + $0xd8] sm:$0xff]
    %v363 = vld [vmem:[#allocation10 + $0xe0] sm:$0xff]
    %v364 = vld [vmem:[#allocation10 + $0xe8] sm:$0xff]
    %v365 = vld [vmem:[#allocation10 + $0xf0] sm:$0xff]
    %v366 = vld [vmem:[#allocation10 + $0xf8] sm:$0xff]
    %v367 = vld [vmem:[#allocation2] sm:$0xff]
    %v368 = vld [vmem:[#allocation3] sm:$0xff]
    %v369 = vld [vmem:[#allocation4] sm:$0xff]
    %v370 = vld [vmem:[#allocation4 + $0x8] sm:$0xff]
    %v371 = vld [vmem:[#allocation4 + $0x10] sm:$0xff]
    %v372 = vld [vmem:[#allocation4 + $0x18] sm:$0xff]
    %v373 = vpack.c.bf16 %v367, %v367
    %v406 = vunpack.c.l.b16 %v335
    %v407 = vunpack.c.h.b16 %v335
    %v408 = vunpack.c.l.b16 %v336
    %v409 = vunpack.c.h.b16 %v336
    %v410 = vunpack.c.l.b16 %v337
    %v411 = vunpack.c.h.b16 %v337
    %v412 = vunpack.c.l.b16 %v338
    %v413 = vunpack.c.h.b16 %v338
    %v414 = vunpack.c.l.b16 %v339
    %v415 = vunpack.c.h.b16 %v339
    %v416 = vunpack.c.l.b16 %v340
    %v417 = vunpack.c.h.b16 %v340
    %v418 = vunpack.c.l.b16 %v341
    %v419 = vunpack.c.h.b16 %v341
    %v420 = vunpack.c.l.b16 %v342
    %v421 = vunpack.c.h.b16 %v342
    %v422 = vunpack.c.l.b16 %v343
    %v423 = vunpack.c.h.b16 %v343
    %v424 = vunpack.c.l.b16 %v344
    %v425 = vunpack.c.h.b16 %v344
    %v426 = vunpack.c.l.b16 %v345
    %v427 = vunpack.c.h.b16 %v345
    %v428 = vunpack.c.l.b16 %v346
    %v429 = vunpack.c.h.b16 %v346
    %v430 = vunpack.c.l.b16 %v347
    %v431 = vunpack.c.h.b16 %v347
    %v432 = vunpack.c.l.b16 %v348
    %v433 = vunpack.c.h.b16 %v348
    %v434 = vunpack.c.l.b16 %v349
    %v435 = vunpack.c.h.b16 %v349
    %v436 = vunpack.c.l.b16 %v350
    %v437 = vunpack.c.h.b16 %v350
    %v438 = vunpack.c.l.b16 %v351
    %v439 = vunpack.c.h.b16 %v351
    %v440 = vunpack.c.l.b16 %v352
    %v441 = vunpack.c.h.b16 %v352
    %v442 = vunpack.c.l.b16 %v353
    %v443 = vunpack.c.h.b16 %v353
    %v444 = vunpack.c.l.b16 %v354
    %v445 = vunpack.c.h.b16 %v354
    %v446 = vunpack.c.l.b16 %v355
    %v447 = vunpack.c.h.b16 %v355
    %v448 = vunpack.c.l.b16 %v356
    %v449 = vunpack.c.h.b16 %v356
    %v450 = vunpack.c.l.b16 %v357
    %v451 = vunpack.c.h.b16 %v357
    %v452 = vunpack.c.l.b16 %v358
    %v453 = vunpack.c.h.b16 %v358
    %v454 = vunpack.c.l.b16 %v359
    %v455 = vunpack.c.h.b16 %v359
    %v456 = vunpack.c.l.b16 %v360
    %v457 = vunpack.c.h.b16 %v360
    %v458 = vunpack.c.l.b16 %v361
    %v459 = vunpack.c.h.b16 %v361
    %v460 = vunpack.c.l.b16 %v362
    %v461 = vunpack.c.h.b16 %v362
    %v462 = vunpack.c.l.b16 %v363
    %v463 = vunpack.c.h.b16 %v363
    %v464 = vunpack.c.l.b16 %v364
    %v465 = vunpack.c.h.b16 %v364
    %v466 = vunpack.c.l.b16 %v365
    %v467 = vunpack.c.h.b16 %v365
    %v468 = vunpack.c.l.b16 %v366
    %v469 = vunpack.c.h.b16 %v366
    %v470 = vpack.c.b16 %v410, %v406
    %v471 = vpack.c.b16 %v411, %v407
    %v472 = vpack.c.b16 %v412, %v408
    %v473 = vpack.c.b16 %v413, %v409
    %v474 = vpack.c.b16 %v418, %v414
    %v475 = vpack.c.b16 %v419, %v415
    %v476 = vpack.c.b16 %v420, %v416
    %v477 = vpack.c.b16 %v421, %v417
    %v478 = vpack.c.b16 %v426, %v422
    %v479 = vpack.c.b16 %v427, %v423
    %v480 = vpack.c.b16 %v428, %v424
    %v481 = vpack.c.b16 %v429, %v425
    %v482 = vpack.c.b16 %v434, %v430
    %v483 = vpack.c.b16 %v435, %v431
    %v484 = vpack.c.b16 %v436, %v432
    %v485 = vpack.c.b16 %v437, %v433
    %v486 = vpack.c.b16 %v442, %v438
    %v487 = vpack.c.b16 %v443, %v439
    %v488 = vpack.c.b16 %v444, %v440
    %v489 = vpack.c.b16 %v445, %v441
    %v490 = vpack.c.b16 %v450, %v446
    %v491 = vpack.c.b16 %v451, %v447
    %v492 = vpack.c.b16 %v452, %v448
    %v493 = vpack.c.b16 %v453, %v449
    %v494 = vpack.c.b16 %v458, %v454
    %v495 = vpack.c.b16 %v459, %v455
    %v496 = vpack.c.b16 %v460, %v456
    %v497 = vpack.c.b16 %v461, %v457
    %v498 = vpack.c.b16 %v466, %v462
    %v499 = vpack.c.b16 %v467, %v463
    %v500 = vpack.c.b16 %v468, %v464
    %v501 = vpack.c.b16 %v469, %v465
    %534 = vmatprep.subr.bf16.mxu0 %v471
    %535 = vmatpush1.bf16.msra.mxu0 %v470
    %536 = vmatprep.subr.bf16.mxu0 %v475
    %537 = vmatpush1.bf16.msra.mxu0 %v474
    %538 = vmatprep.subr.bf16.mxu0 %v479
    %539 = vmatpush1.bf16.msra.mxu0 %v478
    %540 = vmatprep.subr.bf16.mxu0 %v483
    %541 = vmatpush1.bf16.msra.mxu0 %v482
    %542 = vmatprep.subr.bf16.mxu0 %v487
    %543 = vmatpush1.bf16.msra.mxu0 %v486
    %544 = vmatprep.subr.bf16.mxu0 %v491
    %545 = vmatpush1.bf16.msra.mxu0 %v490
    %546 = vmatprep.subr.bf16.mxu0 %v495
    %547 = vmatpush1.bf16.msra.mxu0 %v494
    %548 = vmatprep.subr.bf16.mxu0 %v499
    %549 = vmatpush1.bf16.msra.mxu0 %v498
    %550 = vmatprep.subr.bf16.mxu0 0
    %551 = vmatpush1.bf16.msra.mxu0 0
    %552 = vmatprep.subr.bf16.mxu0 0
    %553 = vmatpush1.bf16.msra.mxu0 0
    %554 = vmatprep.subr.bf16.mxu0 0
    %555 = vmatpush1.bf16.msra.mxu0 0
    %556 = vmatprep.subr.bf16.mxu0 0
    %557 = vmatpush1.bf16.msra.mxu0 0
    %558 = vmatprep.subr.bf16.mxu0 0
    %559 = vmatpush1.bf16.msra.mxu0 0
    %560 = vmatprep.subr.bf16.mxu0 0
    %561 = vmatpush1.bf16.msra.mxu0 0
    %562 = vmatprep.subr.bf16.mxu0 0
    %563 = vmatpush1.bf16.msra.mxu0 0
    %564 = vmatprep.subr.bf16.mxu0 0
    %565 = vmatpush1.bf16.msra.mxu0 0
    %566 = vmatprep.mubr.bf16.mxu0 0
    %567 = vmatmul.mubr.bf16.gmra.mrb[0].mxu0 %v373
    %v568 = vpop.f32.mrb[0].mxu0
    %v569 = vadd.f32 0.0, %v568
    %v570 = vpop.f32.mrb[0].mxu0
    %v571 = vadd.f32 0.0, %v570
    %v572 = vpop.f32.mrb[0].mxu0
    %v573 = vpop.f32.mrb[0].mxu0
    %574 = vdwg.mxu0
    %575 = vmatprep.subr.bf16.mxu0 %v473
    %576 = vmatpush1.bf16.msra.mxu0 %v472
    %577 = vmatprep.subr.bf16.mxu0 %v477
    %578 = vmatpush1.bf16.msra.mxu0 %v476
    %579 = vmatprep.subr.bf16.mxu0 %v481
    %580 = vmatpush1.bf16.msra.mxu0 %v480
    %581 = vmatprep.subr.bf16.mxu0 %v485
    %582 = vmatpush1.bf16.msra.mxu0 %v484
    %583 = vmatprep.subr.bf16.mxu0 %v489
    %584 = vmatpush1.bf16.msra.mxu0 %v488
    %585 = vmatprep.subr.bf16.mxu0 %v493
    %586 = vmatpush1.bf16.msra.mxu0 %v492
    %587 = vmatprep.subr.bf16.mxu0 %v497
    %588 = vmatpush1.bf16.msra.mxu0 %v496
    %589 = vmatprep.subr.bf16.mxu0 %v501
    %590 = vmatpush1.bf16.msra.mxu0 %v500
    %591 = vmatprep.subr.bf16.mxu0 0
    %592 = vmatpush1.bf16.msra.mxu0 0
    %593 = vmatprep.subr.bf16.mxu0 0
    %594 = vmatpush1.bf16.msra.mxu0 0
    %595 = vmatprep.subr.bf16.mxu0 0
    %596 = vmatpush1.bf16.msra.mxu0 0
    %597 = vmatprep.subr.bf16.mxu0 0
    %598 = vmatpush1.bf16.msra.mxu0 0
    %599 = vmatprep.subr.bf16.mxu0 0
    %600 = vmatpush1.bf16.msra.mxu0 0
    %601 = vmatprep.subr.bf16.mxu0 0
    %602 = vmatpush1.bf16.msra.mxu0 0
    %603 = vmatprep.subr.bf16.mxu0 0
    %604 = vmatpush1.bf16.msra.mxu0 0
    %605 = vmatprep.subr.bf16.mxu0 0
    %606 = vmatpush1.bf16.msra.mxu0 0
    %607 = vmatprep.mubr.bf16.mxu0 0
    %608 = vmatmul.mubr.bf16.gmra.mrb[0].mxu0 %v373
    %v609 = vpop.f32.mrb[0].mxu0
    %v610 = vadd.f32 0.0, %v609
    %v611 = vpop.f32.mrb[0].mxu0
    %v612 = vadd.f32 0.0, %v611
    %v613 = vpop.f32.mrb[0].mxu0
    %v614 = vpop.f32.mrb[0].mxu0
    %615 = vdwg.mxu0
    %v616 = vadd.f32 %v369, %v569
    %v617 = vadd.f32 %v370, %v571
    %v618 = vadd.f32 %v371, %v610
    %v619 = vadd.f32 %v372, %v612
    %v620 = vxor.u32 %v616, 2147483648
    %v621 = vxor.u32 %v617, 2147483648
    %v622 = vxor.u32 %v618, 2147483648
    %v623 = vmul.f32 %v620, 1.442695
    %v624 = vpow.pop %v623
    %v625 = vmul.f32 %v621, 1.442695
    %v626 = vpow.pop %v625
    %v627 = vmul.f32 %v622, 1.442695
    %v628 = vpow.pop %v627
    %v629 = vadd.f32 %v624, 1.0
    %v630 = vadd.f32 %v626, 1.0
    %v631 = vadd.f32 %v628, 1.0
    %v632 = vrcp.pop %v629
    %v633 = vmul.f32 1.0, %v632
    %v634 = vrcp.pop %v630
    %v635 = vmul.f32 1.0, %v634
    %v636 = vrcp.pop %v631
    %v637 = vmul.f32 1.0, %v636
    %v638 = vtanh.pop %v619
    %v639 = vmul.f32 %v635, %v368
    %v640 = vmul.f32 %v633, %v638
    %v641 = vadd.f32 %v639, %v640
    %v642 = vtanh.pop %v641
    %v643 = vmul.f32 %v637, %v642
    %s644 = scalar_lea.vmem [#allocation4], 32
    %v645 = vld [vmem:[%s644] sm:$0xff]
    %v646 = vld [vmem:[%s644 + $0x8] sm:$0xff]
    %v647 = vld [vmem:[%s644 + $0x10] sm:$0xff]
    %v648 = vld [vmem:[%s644 + $0x18] sm:$0xff]
    %v649 = vpack.c.bf16 %v643, %v643
    %650 = vmatprep.subr.bf16.mxu0 %v471
    %651 = vmatpush1.bf16.msra.mxu0 %v470
    %652 = vmatprep.subr.bf16.mxu0 %v475
    %653 = vmatpush1.bf16.msra.mxu0 %v474
    %654 = vmatprep.subr.bf16.mxu0 %v479
    %655 = vmatpush1.bf16.msra.mxu0 %v478
    %656 = vmatprep.subr.bf16.mxu0 %v483
    %657 = vmatpush1.bf16.msra.mxu0 %v482
    %658 = vmatprep.subr.bf16.mxu0 %v487
    %659 = vmatpush1.bf16.msra.mxu0 %v486
    %660 = vmatprep.subr.bf16.mxu0 %v491
    %661 = vmatpush1.bf16.msra.mxu0 %v490
    %662 = vmatprep.subr.bf16.mxu0 %v495
    %663 = vmatpush1.bf16.msra.mxu0 %v494
    %664 = vmatprep.subr.bf16.mxu0 %v499
    %665 = vmatpush1.bf16.msra.mxu0 %v498
    %666 = vmatprep.subr.bf16.mxu0 0
    %667 = vmatpush1.bf16.msra.mxu0 0
    %668 = vmatprep.subr.bf16.mxu0 0
    %669 = vmatpush1.bf16.msra.mxu0 0
    %670 = vmatprep.subr.bf16.mxu0 0
    %671 = vmatpush1.bf16.msra.mxu0 0
    %672 = vmatprep.subr.bf16.mxu0 0
    %673 = vmatpush1.bf16.msra.mxu0 0
    %674 = vmatprep.subr.bf16.mxu0 0
    %675 = vmatpush1.bf16.msra.mxu0 0
    %676 = vmatprep.subr.bf16.mxu0 0
    %677 = vmatpush1.bf16.msra.mxu0 0
    %678 = vmatprep.subr.bf16.mxu0 0
    %679 = vmatpush1.bf16.msra.mxu0 0
    %680 = vmatprep.subr.bf16.mxu0 0
    %681 = vmatpush1.bf16.msra.mxu0 0
    %682 = vmatprep.mubr.bf16.mxu0 0
    %683 = vmatmul.mubr.bf16.gmra.mrb[0].mxu0 %v649
    %v684 = vpop.f32.mrb[0].mxu0
    %v685 = vadd.f32 0.0, %v684
    %v686 = vpop.f32.mrb[0].mxu0
    %v687 = vadd.f32 0.0, %v686
    %v688 = vpop.f32.mrb[0].mxu0
    %v689 = vpop.f32.mrb[0].mxu0
    %690 = vdwg.mxu0
    %691 = vmatprep.subr.bf16.mxu0 %v473
    %692 = vmatpush1.bf16.msra.mxu0 %v472
    %693 = vmatprep.subr.bf16.mxu0 %v477
    %694 = vmatpush1.bf16.msra.mxu0 %v476
    %695 = vmatprep.subr.bf16.mxu0 %v481
    %696 = vmatpush1.bf16.msra.mxu0 %v480
    %697 = vmatprep.subr.bf16.mxu0 %v485
    %698 = vmatpush1.bf16.msra.mxu0 %v484
    %699 = vmatprep.subr.bf16.mxu0 %v489
    %700 = vmatpush1.bf16.msra.mxu0 %v488
    %701 = vmatprep.subr.bf16.mxu0 %v493
    %702 = vmatpush1.bf16.msra.mxu0 %v492
    %703 = vmatprep.subr.bf16.mxu0 %v497
    %704 = vmatpush1.bf16.msra.mxu0 %v496
    %705 = vmatprep.subr.bf16.mxu0 %v501
    %706 = vmatpush1.bf16.msra.mxu0 %v500
    %707 = vmatprep.subr.bf16.mxu0 0
    %708 = vmatpush1.bf16.msra.mxu0 0
    %709 = vmatprep.subr.bf16.mxu0 0
    %710 = vmatpush1.bf16.msra.mxu0 0
    %711 = vmatprep.subr.bf16.mxu0 0
    %712 = vmatpush1.bf16.msra.mxu0 0
    %713 = vmatprep.subr.bf16.mxu0 0
    %714 = vmatpush1.bf16.msra.mxu0 0
    %715 = vmatprep.subr.bf16.mxu0 0
    %716 = vmatpush1.bf16.msra.mxu0 0
    %717 = vmatprep.subr.bf16.mxu0 0
    %718 = vmatpush1.bf16.msra.mxu0 0
    %719 = vmatprep.subr.bf16.mxu0 0
    %720 = vmatpush1.bf16.msra.mxu0 0
    %721 = vmatprep.subr.bf16.mxu0 0
    %722 = vmatpush1.bf16.msra.mxu0 0
    %723 = vmatprep.mubr.bf16.mxu0 0
    %724 = vmatmul.mubr.bf16.gmra.mrb[0].mxu0 %v649
    %v725 = vpop.f32.mrb[0].mxu0
    %v726 = vadd.f32 0.0, %v725
    %v727 = vpop.f32.mrb[0].mxu0
    %v728 = vadd.f32 0.0, %v727
    %v729 = vpop.f32.mrb[0].mxu0
    %v730 = vpop.f32.mrb[0].mxu0
    %731 = vdwg.mxu0
    %v732 = vadd.f32 %v645, %v685
    %v733 = vadd.f32 %v646, %v687
    %v734 = vadd.f32 %v647, %v726
    %v735 = vadd.f32 %v648, %v728
    %v736 = vxor.u32 %v732, 2147483648
    %v737 = vxor.u32 %v733, 2147483648
    %v738 = vxor.u32 %v734, 2147483648
    %v739 = vmul.f32 %v736, 1.442695
    %v740 = vpow.pop %v739
    %v741 = vmul.f32 %v737, 1.442695
    %v742 = vpow.pop %v741
    %v743 = vmul.f32 %v738, 1.442695
    %v744 = vpow.pop %v743
    %v745 = vadd.f32 %v740, 1.0
    %v746 = vadd.f32 %v742, 1.0
    %v747 = vadd.f32 %v744, 1.0
    %v748 = vrcp.pop %v745
    %v749 = vmul.f32 1.0, %v748
    %v750 = vrcp.pop %v746
    %v751 = vmul.f32 1.0, %v750
    %v752 = vrcp.pop %v747
    %v753 = vmul.f32 1.0, %v752
    %v754 = vtanh.pop %v735
    %v755 = vmul.f32 %v751, %v641
    %v756 = vmul.f32 %v749, %v754
    %v757 = vadd.f32 %v755, %v756
    %v758 = vtanh.pop %v757
    %v759 = vmul.f32 %v753, %v758
    %s760 = scalar_lea.vmem [#allocation4], 64
    %v761 = vld [vmem:[%s760] sm:$0xff]
    %v762 = vld [vmem:[%s760 + $0x8] sm:$0xff]
    %v763 = vld [vmem:[%s760 + $0x10] sm:$0xff]
    %v764 = vld [vmem:[%s760 + $0x18] sm:$0xff]
    %v765 = vpack.c.bf16 %v759, %v759
    %766 = vmatprep.subr.bf16.mxu0 %v471
    %767 = vmatpush1.bf16.msra.mxu0 %v470
    %768 = vmatprep.subr.bf16.mxu0 %v475
    %769 = vmatpush1.bf16.msra.mxu0 %v474
    %770 = vmatprep.subr.bf16.mxu0 %v479
    %771 = vmatpush1.bf16.msra.mxu0 %v478
    %772 = vmatprep.subr.bf16.mxu0 %v483
    %773 = vmatpush1.bf16.msra.mxu0 %v482
    %774 = vmatprep.subr.bf16.mxu0 %v487
    %775 = vmatpush1.bf16.msra.mxu0 %v486
    %776 = vmatprep.subr.bf16.mxu0 %v491
    %777 = vmatpush1.bf16.msra.mxu0 %v490
    %778 = vmatprep.subr.bf16.mxu0 %v495
    %779 = vmatpush1.bf16.msra.mxu0 %v494
    %780 = vmatprep.subr.bf16.mxu0 %v499
    %781 = vmatpush1.bf16.msra.mxu0 %v498
    %782 = vmatprep.subr.bf16.mxu0 0
    %783 = vmatpush1.bf16.msra.mxu0 0
    %784 = vmatprep.subr.bf16.mxu0 0
    %785 = vmatpush1.bf16.msra.mxu0 0
    %786 = vmatprep.subr.bf16.mxu0 0
    %787 = vmatpush1.bf16.msra.mxu0 0
    %788 = vmatprep.subr.bf16.mxu0 0
    %789 = vmatpush1.bf16.msra.mxu0 0
    %790 = vmatprep.subr.bf16.mxu0 0
    %791 = vmatpush1.bf16.msra.mxu0 0
    %792 = vmatprep.subr.bf16.mxu0 0
    %793 = vmatpush1.bf16.msra.mxu0 0
    %794 = vmatprep.subr.bf16.mxu0 0
    %795 = vmatpush1.bf16.msra.mxu0 0
    %796 = vmatprep.subr.bf16.mxu0 0
    %797 = vmatpush1.bf16.msra.mxu0 0
    %798 = vmatprep.mubr.bf16.mxu0 0
    %799 = vmatmul.mubr.bf16.gmra.mrb[0].mxu0 %v765
    %v800 = vpop.f32.mrb[0].mxu0
    %v801 = vadd.f32 0.0, %v800
    %v802 = vpop.f32.mrb[0].mxu0
    %v803 = vadd.f32 0.0, %v802
    %v804 = vpop.f32.mrb[0].mxu0
    %v805 = vpop.f32.mrb[0].mxu0
    %806 = vdwg.mxu0
    %807 = vmatprep.subr.bf16.mxu0 %v473
    %808 = vmatpush1.bf16.msra.mxu0 %v472
    %809 = vmatprep.subr.bf16.mxu0 %v477
    %810 = vmatpush1.bf16.msra.mxu0 %v476
    %811 = vmatprep.subr.bf16.mxu0 %v481
    %812 = vmatpush1.bf16.msra.mxu0 %v480
    %813 = vmatprep.subr.bf16.mxu0 %v485
    %814 = vmatpush1.bf16.msra.mxu0 %v484
    %815 = vmatprep.subr.bf16.mxu0 %v489
    %816 = vmatpush1.bf16.msra.mxu0 %v488
    %817 = vmatprep.subr.bf16.mxu0 %v493
    %818 = vmatpush1.bf16.msra.mxu0 %v492
    %819 = vmatprep.subr.bf16.mxu0 %v497
    %820 = vmatpush1.bf16.msra.mxu0 %v496
    %821 = vmatprep.subr.bf16.mxu0 %v501
    %822 = vmatpush1.bf16.msra.mxu0 %v500
    %823 = vmatprep.subr.bf16.mxu0 0
    %824 = vmatpush1.bf16.msra.mxu0 0
    %825 = vmatprep.subr.bf16.mxu0 0
    %826 = vmatpush1.bf16.msra.mxu0 0
    %827 = vmatprep.subr.bf16.mxu0 0
    %828 = vmatpush1.bf16.msra.mxu0 0
    %829 = vmatprep.subr.bf16.mxu0 0
    %830 = vmatpush1.bf16.msra.mxu0 0
    %831 = vmatprep.subr.bf16.mxu0 0
    %832 = vmatpush1.bf16.msra.mxu0 0
    %833 = vmatprep.subr.bf16.mxu0 0
    %834 = vmatpush1.bf16.msra.mxu0 0
    %835 = vmatprep.subr.bf16.mxu0 0
    %836 = vmatpush1.bf16.msra.mxu0 0
    %837 = vmatprep.subr.bf16.mxu0 0
    %838 = vmatpush1.bf16.msra.mxu0 0
    %839 = vmatprep.mubr.bf16.mxu0 0
    %840 = vmatmul.mubr.bf16.gmra.mrb[0].mxu0 %v765
    %v841 = vpop.f32.mrb[0].mxu0
    %v842 = vadd.f32 0.0, %v841
    %v843 = vpop.f32.mrb[0].mxu0
    %v844 = vadd.f32 0.0, %v843
    %v845 = vpop.f32.mrb[0].mxu0
    %v846 = vpop.f32.mrb[0].mxu0
    %847 = vdwg.mxu0
    %v848 = vadd.f32 %v761, %v801
    %v849 = vadd.f32 %v762, %v803
    %v850 = vadd.f32 %v763, %v842
    %v851 = vadd.f32 %v764, %v844
    %v852 = vxor.u32 %v848, 2147483648
    %v853 = vxor.u32 %v849, 2147483648
    %v854 = vxor.u32 %v850, 2147483648
    %v855 = vmul.f32 %v852, 1.442695
    %v856 = vpow.pop %v855
    %v857 = vmul.f32 %v853, 1.442695
    %v858 = vpow.pop %v857
    %v859 = vmul.f32 %v854, 1.442695
    %v860 = vpow.pop %v859
    %v861 = vadd.f32 %v856, 1.0
    %v862 = vadd.f32 %v858, 1.0
    %v863 = vadd.f32 %v860, 1.0
    %v864 = vrcp.pop %v861
    %v865 = vmul.f32 1.0, %v864
    %v866 = vrcp.pop %v862
    %v867 = vmul.f32 1.0, %v866
    %v868 = vrcp.pop %v863
    %v869 = vmul.f32 1.0, %v868
    %v870 = vtanh.pop %v851
    %v871 = vmul.f32 %v867, %v757
    %v872 = vmul.f32 %v865, %v870
    %v873 = vadd.f32 %v871, %v872
    %v874 = vtanh.pop %v873
    %v875 = vmul.f32 %v869, %v874
    %s876 = scalar_lea.vmem [#allocation4], 96
    %v877 = vld [vmem:[%s876] sm:$0xff]
    %v878 = vld [vmem:[%s876 + $0x8] sm:$0xff]
    %v879 = vld [vmem:[%s876 + $0x10] sm:$0xff]
    %v880 = vld [vmem:[%s876 + $0x18] sm:$0xff]
    %v881 = vpack.c.bf16 %v875, %v875
    %882 = vmatprep.subr.bf16.mxu0 %v471
    %883 = vmatpush1.bf16.msra.mxu0 %v470
    %884 = vmatprep.subr.bf16.mxu0 %v475
    %885 = vmatpush1.bf16.msra.mxu0 %v474
    %886 = vmatprep.subr.bf16.mxu0 %v479
    %887 = vmatpush1.bf16.msra.mxu0 %v478
    %888 = vmatprep.subr.bf16.mxu0 %v483
    %889 = vmatpush1.bf16.msra.mxu0 %v482
    %890 = vmatprep.subr.bf16.mxu0 %v487
    %891 = vmatpush1.bf16.msra.mxu0 %v486
    %892 = vmatprep.subr.bf16.mxu0 %v491
    %893 = vmatpush1.bf16.msra.mxu0 %v490
    %894 = vmatprep.subr.bf16.mxu0 %v495
    %895 = vmatpush1.bf16.msra.mxu0 %v494
    %896 = vmatprep.subr.bf16.mxu0 %v499
    %897 = vmatpush1.bf16.msra.mxu0 %v498
    %898 = vmatprep.subr.bf16.mxu0 0
    %899 = vmatpush1.bf16.msra.mxu0 0
    %900 = vmatprep.subr.bf16.mxu0 0
    %901 = vmatpush1.bf16.msra.mxu0 0
    %902 = vmatprep.subr.bf16.mxu0 0
    %903 = vmatpush1.bf16.msra.mxu0 0
    %904 = vmatprep.subr.bf16.mxu0 0
    %905 = vmatpush1.bf16.msra.mxu0 0
    %906 = vmatprep.subr.bf16.mxu0 0
    %907 = vmatpush1.bf16.msra.mxu0 0
    %908 = vmatprep.subr.bf16.mxu0 0
    %909 = vmatpush1.bf16.msra.mxu0 0
    %910 = vmatprep.subr.bf16.mxu0 0
    %911 = vmatpush1.bf16.msra.mxu0 0
    %912 = vmatprep.subr.bf16.mxu0 0
    %913 = vmatpush1.bf16.msra.mxu0 0
    %914 = vmatprep.mubr.bf16.mxu0 0
    %915 = vmatmul.mubr.bf16.gmra.mrb[0].mxu0 %v881
    %v916 = vpop.f32.mrb[0].mxu0
    %v917 = vadd.f32 0.0, %v916
    %v918 = vpop.f32.mrb[0].mxu0
    %v919 = vadd.f32 0.0, %v918
    %v920 = vpop.f32.mrb[0].mxu0
    %v921 = vpop.f32.mrb[0].mxu0
    %922 = vdwg.mxu0
    %923 = vmatprep.subr.bf16.mxu0 %v473
    %924 = vmatpush1.bf16.msra.mxu0 %v472
    %925 = vmatprep.subr.bf16.mxu0 %v477
    %926 = vmatpush1.bf16.msra.mxu0 %v476
    %927 = vmatprep.subr.bf16.mxu0 %v481
    %928 = vmatpush1.bf16.msra.mxu0 %v480
    %929 = vmatprep.subr.bf16.mxu0 %v485
    %930 = vmatpush1.bf16.msra.mxu0 %v484
    %931 = vmatprep.subr.bf16.mxu0 %v489
    %932 = vmatpush1.bf16.msra.mxu0 %v488
    %933 = vmatprep.subr.bf16.mxu0 %v493
    %934 = vmatpush1.bf16.msra.mxu0 %v492
    %935 = vmatprep.subr.bf16.mxu0 %v497
    %936 = vmatpush1.bf16.msra.mxu0 %v496
    %937 = vmatprep.subr.bf16.mxu0 %v501
    %938 = vmatpush1.bf16.msra.mxu0 %v500
    %939 = vmatprep.subr.bf16.mxu0 0
    %940 = vmatpush1.bf16.msra.mxu0 0
    %941 = vmatprep.subr.bf16.mxu0 0
    %942 = vmatpush1.bf16.msra.mxu0 0
    %943 = vmatprep.subr.bf16.mxu0 0
    %944 = vmatpush1.bf16.msra.mxu0 0
    %945 = vmatprep.subr.bf16.mxu0 0
    %946 = vmatpush1.bf16.msra.mxu0 0
    %947 = vmatprep.subr.bf16.mxu0 0
    %948 = vmatpush1.bf16.msra.mxu0 0
    %949 = vmatprep.subr.bf16.mxu0 0
    %950 = vmatpush1.bf16.msra.mxu0 0
    %951 = vmatprep.subr.bf16.mxu0 0
    %952 = vmatpush1.bf16.msra.mxu0 0
    %953 = vmatprep.subr.bf16.mxu0 0
    %954 = vmatpush1.bf16.msra.mxu0 0
    %955 = vmatprep.mubr.bf16.mxu0 0
    %956 = vmatmul.mubr.bf16.gmra.mrb[0].mxu0 %v881
    %v957 = vpop.f32.mrb[0].mxu0
    %v958 = vadd.f32 0.0, %v957
    %v959 = vpop.f32.mrb[0].mxu0
    %v960 = vadd.f32 0.0, %v959
    %v961 = vpop.f32.mrb[0].mxu0
    %v962 = vpop.f32.mrb[0].mxu0
    %963 = vdwg.mxu0
    %v964 = vadd.f32 %v877, %v917
    %v965 = vadd.f32 %v878, %v919
    %v966 = vadd.f32 %v879, %v958
    %v967 = vadd.f32 %v880, %v960
    %v968 = vxor.u32 %v964, 2147483648
    %v969 = vxor.u32 %v965, 2147483648
    %v970 = vxor.u32 %v966, 2147483648
    %v971 = vmul.f32 %v968, 1.442695
    %v972 = vpow.pop %v971
    %v973 = vmul.f32 %v969, 1.442695
    %v974 = vpow.pop %v973
    %v975 = vmul.f32 %v970, 1.442695
    %v976 = vpow.pop %v975
    %v977 = vadd.f32 %v972, 1.0
    %v978 = vadd.f32 %v974, 1.0
    %v979 = vadd.f32 %v976, 1.0
    %v980 = vrcp.pop %v977
    %v981 = vmul.f32 1.0, %v980
    %v982 = vrcp.pop %v978
    %v983 = vmul.f32 1.0, %v982
    %v984 = vrcp.pop %v979
    %v985 = vmul.f32 1.0, %v984
    %v986 = vtanh.pop %v967
    %v987 = vmul.f32 %v983, %v873
    %v988 = vmul.f32 %v981, %v986
    %v989 = vadd.f32 %v987, %v988
    %v990 = vtanh.pop %v989
    %v991 = vmul.f32 %v985, %v990
    %s992 = scalar_lea.vmem [#allocation4], 128
    %v993 = vld [vmem:[%s992] sm:$0xff]
    %v994 = vld [vmem:[%s992 + $0x8] sm:$0xff]
    %v995 = vld [vmem:[%s992 + $0x10] sm:$0xff]
    %v996 = vld [vmem:[%s992 + $0x18] sm:$0xff]
    %v997 = vpack.c.bf16 %v991, %v991
    %998 = vmatprep.subr.bf16.mxu0 %v471
    %999 = vmatpush1.bf16.msra.mxu0 %v470
    %1000 = vmatprep.subr.bf16.mxu0 %v475
    %1001 = vmatpush1.bf16.msra.mxu0 %v474
    %1002 = vmatprep.subr.bf16.mxu0 %v479
    %1003 = vmatpush1.bf16.msra.mxu0 %v478
    %1004 = vmatprep.subr.bf16.mxu0 %v483
    %1005 = vmatpush1.bf16.msra.mxu0 %v482
    %1006 = vmatprep.subr.bf16.mxu0 %v487
    %1007 = vmatpush1.bf16.msra.mxu0 %v486
    %1008 = vmatprep.subr.bf16.mxu0 %v491
    %1009 = vmatpush1.bf16.msra.mxu0 %v490
    %1010 = vmatprep.subr.bf16.mxu0 %v495
    %1011 = vmatpush1.bf16.msra.mxu0 %v494
    %1012 = vmatprep.subr.bf16.mxu0 %v499
    %1013 = vmatpush1.bf16.msra.mxu0 %v498
    %1014 = vmatprep.subr.bf16.mxu0 0
    %1015 = vmatpush1.bf16.msra.mxu0 0
    %1016 = vmatprep.subr.bf16.mxu0 0
    %1017 = vmatpush1.bf16.msra.mxu0 0
    %1018 = vmatprep.subr.bf16.mxu0 0
    %1019 = vmatpush1.bf16.msra.mxu0 0
    %1020 = vmatprep.subr.bf16.mxu0 0
    %1021 = vmatpush1.bf16.msra.mxu0 0
    %1022 = vmatprep.subr.bf16.mxu0 0
    %1023 = vmatpush1.bf16.msra.mxu0 0
    %1024 = vmatprep.subr.bf16.mxu0 0
    %1025 = vmatpush1.bf16.msra.mxu0 0
    %1026 = vmatprep.subr.bf16.mxu0 0
    %1027 = vmatpush1.bf16.msra.mxu0 0
    %1028 = vmatprep.subr.bf16.mxu0 0
    %1029 = vmatpush1.bf16.msra.mxu0 0
    %1030 = vmatprep.mubr.bf16.mxu0 0
    %1031 = vmatmul.mubr.bf16.gmra.mrb[0].mxu0 %v997
    %v1032 = vpop.f32.mrb[0].mxu0
    %v1033 = vadd.f32 0.0, %v1032
    %v1034 = vpop.f32.mrb[0].mxu0
    %v1035 = vadd.f32 0.0, %v1034
    %v1036 = vpop.f32.mrb[0].mxu0
    %v1037 = vpop.f32.mrb[0].mxu0
    %1038 = vdwg.mxu0
    %1039 = vmatprep.subr.bf16.mxu0 %v473
    %1040 = vmatpush1.bf16.msra.mxu0 %v472
    %1041 = vmatprep.subr.bf16.mxu0 %v477
    %1042 = vmatpush1.bf16.msra.mxu0 %v476
    %1043 = vmatprep.subr.bf16.mxu0 %v481
    %1044 = vmatpush1.bf16.msra.mxu0 %v480
    %1045 = vmatprep.subr.bf16.mxu0 %v485
    %1046 = vmatpush1.bf16.msra.mxu0 %v484
    %1047 = vmatprep.subr.bf16.mxu0 %v489
    %1048 = vmatpush1.bf16.msra.mxu0 %v488
    %1049 = vmatprep.subr.bf16.mxu0 %v493
    %1050 = vmatpush1.bf16.msra.mxu0 %v492
    %1051 = vmatprep.subr.bf16.mxu0 %v497
    %1052 = vmatpush1.bf16.msra.mxu0 %v496
    %1053 = vmatprep.subr.bf16.mxu0 %v501
    %1054 = vmatpush1.bf16.msra.mxu0 %v500
    %1055 = vmatprep.subr.bf16.mxu0 0
    %1056 = vmatpush1.bf16.msra.mxu0 0
    %1057 = vmatprep.subr.bf16.mxu0 0
    %1058 = vmatpush1.bf16.msra.mxu0 0
    %1059 = vmatprep.subr.bf16.mxu0 0
    %1060 = vmatpush1.bf16.msra.mxu0 0
    %1061 = vmatprep.subr.bf16.mxu0 0
    %1062 = vmatpush1.bf16.msra.mxu0 0
    %1063 = vmatprep.subr.bf16.mxu0 0
    %1064 = vmatpush1.bf16.msra.mxu0 0
    %1065 = vmatprep.subr.bf16.mxu0 0
    %1066 = vmatpush1.bf16.msra.mxu0 0
    %1067 = vmatprep.subr.bf16.mxu0 0
    %1068 = vmatpush1.bf16.msra.mxu0 0
    %1069 = vmatprep.subr.bf16.mxu0 0
    %1070 = vmatpush1.bf16.msra.mxu0 0
    %1071 = vmatprep.mubr.bf16.mxu0 0
    %1072 = vmatmul.mubr.bf16.gmra.mrb[0].mxu0 %v997
    %v1073 = vpop.f32.mrb[0].mxu0
    %v1074 = vadd.f32 0.0, %v1073
    %v1075 = vpop.f32.mrb[0].mxu0
    %v1076 = vadd.f32 0.0, %v1075
    %v1077 = vpop.f32.mrb[0].mxu0
    %v1078 = vpop.f32.mrb[0].mxu0
    %1079 = vdwg.mxu0
    %v1080 = vadd.f32 %v993, %v1033
    %v1081 = vadd.f32 %v994, %v1035
    %v1082 = vadd.f32 %v995, %v1074
    %v1083 = vadd.f32 %v996, %v1076
    %v1084 = vxor.u32 %v1080, 2147483648
    %v1085 = vxor.u32 %v1081, 2147483648
    %v1086 = vxor.u32 %v1082, 2147483648
    %v1087 = vmul.f32 %v1084, 1.442695
    %v1088 = vpow.pop %v1087
    %v1089 = vmul.f32 %v1085, 1.442695
    %v1090 = vpow.pop %v1089
    %v1091 = vmul.f32 %v1086, 1.442695
    %v1092 = vpow.pop %v1091
    %v1093 = vadd.f32 %v1088, 1.0
    %v1094 = vadd.f32 %v1090, 1.0
    %v1095 = vadd.f32 %v1092, 1.0
    %v1096 = vrcp.pop %v1093
    %v1097 = vmul.f32 1.0, %v1096
    %v1098 = vrcp.pop %v1094
    %v1099 = vmul.f32 1.0, %v1098
    %v1100 = vrcp.pop %v1095
    %v1101 = vmul.f32 1.0, %v1100
    %v1102 = vtanh.pop %v1083
    %v1103 = vmul.f32 %v1099, %v989
    %v1104 = vmul.f32 %v1097, %v1102
    %v1105 = vadd.f32 %v1103, %v1104
    %v1106 = vtanh.pop %v1105
    %v1107 = vmul.f32 %v1101, %v1106
    %s1108 = scalar_lea.vmem [#allocation4], 160
    %v1109 = vld [vmem:[%s1108] sm:$0xff]
    %v1110 = vld [vmem:[%s1108 + $0x8] sm:$0xff]
    %v1111 = vld [vmem:[%s1108 + $0x10] sm:$0xff]
    %v1112 = vld [vmem:[%s1108 + $0x18] sm:$0xff]
    %v1113 = vpack.c.bf16 %v1107, %v1107
    %1114 = vmatprep.subr.bf16.mxu0 %v471
    %1115 = vmatpush1.bf16.msra.mxu0 %v470
    %1116 = vmatprep.subr.bf16.mxu0 %v475
    %1117 = vmatpush1.bf16.msra.mxu0 %v474
    %1118 = vmatprep.subr.bf16.mxu0 %v479
    %1119 = vmatpush1.bf16.msra.mxu0 %v478
    %1120 = vmatprep.subr.bf16.mxu0 %v483
    %1121 = vmatpush1.bf16.msra.mxu0 %v482
    %1122 = vmatprep.subr.bf16.mxu0 %v487
    %1123 = vmatpush1.bf16.msra.mxu0 %v486
    %1124 = vmatprep.subr.bf16.mxu0 %v491
    %1125 = vmatpush1.bf16.msra.mxu0 %v490
    %1126 = vmatprep.subr.bf16.mxu0 %v495
    %1127 = vmatpush1.bf16.msra.mxu0 %v494
    %1128 = vmatprep.subr.bf16.mxu0 %v499
    %1129 = vmatpush1.bf16.msra.mxu0 %v498
    %1130 = vmatprep.subr.bf16.mxu0 0
    %1131 = vmatpush1.bf16.msra.mxu0 0
    %1132 = vmatprep.subr.bf16.mxu0 0
    %1133 = vmatpush1.bf16.msra.mxu0 0
    %1134 = vmatprep.subr.bf16.mxu0 0
    %1135 = vmatpush1.bf16.msra.mxu0 0
    %1136 = vmatprep.subr.bf16.mxu0 0
    %1137 = vmatpush1.bf16.msra.mxu0 0
    %1138 = vmatprep.subr.bf16.mxu0 0
    %1139 = vmatpush1.bf16.msra.mxu0 0
    %1140 = vmatprep.subr.bf16.mxu0 0
    %1141 = vmatpush1.bf16.msra.mxu0 0
    %1142 = vmatprep.subr.bf16.mxu0 0
    %1143 = vmatpush1.bf16.msra.mxu0 0
    %1144 = vmatprep.subr.bf16.mxu0 0
    %1145 = vmatpush1.bf16.msra.mxu0 0
    %1146 = vmatprep.mubr.bf16.mxu0 0
    %1147 = vmatmul.mubr.bf16.gmra.mrb[0].mxu0 %v1113
    %v1148 = vpop.f32.mrb[0].mxu0
    %v1149 = vadd.f32 0.0, %v1148
    %v1150 = vpop.f32.mrb[0].mxu0
    %v1151 = vadd.f32 0.0, %v1150
    %v1152 = vpop.f32.mrb[0].mxu0
    %v1153 = vpop.f32.mrb[0].mxu0
    %1154 = vdwg.mxu0
    %1155 = vmatprep.subr.bf16.mxu0 %v473
    %1156 = vmatpush1.bf16.msra.mxu0 %v472
    %1157 = vmatprep.subr.bf16.mxu0 %v477
    %1158 = vmatpush1.bf16.msra.mxu0 %v476
    %1159 = vmatprep.subr.bf16.mxu0 %v481
    %1160 = vmatpush1.bf16.msra.mxu0 %v480
    %1161 = vmatprep.subr.bf16.mxu0 %v485
    %1162 = vmatpush1.bf16.msra.mxu0 %v484
    %1163 = vmatprep.subr.bf16.mxu0 %v489
    %1164 = vmatpush1.bf16.msra.mxu0 %v488
    %1165 = vmatprep.subr.bf16.mxu0 %v493
    %1166 = vmatpush1.bf16.msra.mxu0 %v492
    %1167 = vmatprep.subr.bf16.mxu0 %v497
    %1168 = vmatpush1.bf16.msra.mxu0 %v496
    %1169 = vmatprep.subr.bf16.mxu0 %v501
    %1170 = vmatpush1.bf16.msra.mxu0 %v500
    %1171 = vmatprep.subr.bf16.mxu0 0
    %1172 = vmatpush1.bf16.msra.mxu0 0
    %1173 = vmatprep.subr.bf16.mxu0 0
    %1174 = vmatpush1.bf16.msra.mxu0 0
    %1175 = vmatprep.subr.bf16.mxu0 0
    %1176 = vmatpush1.bf16.msra.mxu0 0
    %1177 = vmatprep.subr.bf16.mxu0 0
    %1178 = vmatpush1.bf16.msra.mxu0 0
    %1179 = vmatprep.subr.bf16.mxu0 0
    %1180 = vmatpush1.bf16.msra.mxu0 0
    %1181 = vmatprep.subr.bf16.mxu0 0
    %1182 = vmatpush1.bf16.msra.mxu0 0
    %1183 = vmatprep.subr.bf16.mxu0 0
    %1184 = vmatpush1.bf16.msra.mxu0 0
    %1185 = vmatprep.subr.bf16.mxu0 0
    %1186 = vmatpush1.bf16.msra.mxu0 0
    %1187 = vmatprep.mubr.bf16.mxu0 0
    %1188 = vmatmul.mubr.bf16.gmra.mrb[0].mxu0 %v1113
    %v1189 = vpop.f32.mrb[0].mxu0
    %v1190 = vadd.f32 0.0, %v1189
    %v1191 = vpop.f32.mrb[0].mxu0
    %v1192 = vadd.f32 0.0, %v1191
    %v1193 = vpop.f32.mrb[0].mxu0
    %v1194 = vpop.f32.mrb[0].mxu0
    %1195 = vdwg.mxu0
    %v1196 = vadd.f32 %v1109, %v1149
    %v1197 = vadd.f32 %v1110, %v1151
    %v1198 = vadd.f32 %v1111, %v1190
    %v1199 = vadd.f32 %v1112, %v1192
    %v1200 = vxor.u32 %v1196, 2147483648
    %v1201 = vxor.u32 %v1197, 2147483648
    %v1202 = vxor.u32 %v1198, 2147483648
    %v1203 = vmul.f32 %v1200, 1.442695
    %v1204 = vpow.pop %v1203
    %v1205 = vmul.f32 %v1201, 1.442695
    %v1206 = vpow.pop %v1205
    %v1207 = vmul.f32 %v1202, 1.442695
    %v1208 = vpow.pop %v1207
    %v1209 = vadd.f32 %v1204, 1.0
    %v1210 = vadd.f32 %v1206, 1.0
    %v1211 = vadd.f32 %v1208, 1.0
    %v1212 = vrcp.pop %v1209
    %v1213 = vmul.f32 1.0, %v1212
    %v1214 = vrcp.pop %v1210
    %v1215 = vmul.f32 1.0, %v1214
    %v1216 = vrcp.pop %v1211
    %v1217 = vmul.f32 1.0, %v1216
    %v1218 = vtanh.pop %v1199
    %v1219 = vmul.f32 %v1215, %v1105
    %v1220 = vmul.f32 %v1213, %v1218
    %v1221 = vadd.f32 %v1219, %v1220
    %v1222 = vtanh.pop %v1221
    %v1223 = vmul.f32 %v1217, %v1222
    %s1224 = scalar_lea.vmem [#allocation4], 192
    %v1225 = vld [vmem:[%s1224] sm:$0xff]
    %v1226 = vld [vmem:[%s1224 + $0x8] sm:$0xff]
    %v1227 = vld [vmem:[%s1224 + $0x10] sm:$0xff]
    %v1228 = vld [vmem:[%s1224 + $0x18] sm:$0xff]
    %v1229 = vpack.c.bf16 %v1223, %v1223
    %1230 = vmatprep.subr.bf16.mxu0 %v471
    %1231 = vmatpush1.bf16.msra.mxu0 %v470
    %1232 = vmatprep.subr.bf16.mxu0 %v475
    %1233 = vmatpush1.bf16.msra.mxu0 %v474
    %1234 = vmatprep.subr.bf16.mxu0 %v479
    %1235 = vmatpush1.bf16.msra.mxu0 %v478
    %1236 = vmatprep.subr.bf16.mxu0 %v483
    %1237 = vmatpush1.bf16.msra.mxu0 %v482
    %1238 = vmatprep.subr.bf16.mxu0 %v487
    %1239 = vmatpush1.bf16.msra.mxu0 %v486
    %1240 = vmatprep.subr.bf16.mxu0 %v491
    %1241 = vmatpush1.bf16.msra.mxu0 %v490
    %1242 = vmatprep.subr.bf16.mxu0 %v495
    %1243 = vmatpush1.bf16.msra.mxu0 %v494
    %1244 = vmatprep.subr.bf16.mxu0 %v499
    %1245 = vmatpush1.bf16.msra.mxu0 %v498
    %1246 = vmatprep.subr.bf16.mxu0 0
    %1247 = vmatpush1.bf16.msra.mxu0 0
    %1248 = vmatprep.subr.bf16.mxu0 0
    %1249 = vmatpush1.bf16.msra.mxu0 0
    %1250 = vmatprep.subr.bf16.mxu0 0
    %1251 = vmatpush1.bf16.msra.mxu0 0
    %1252 = vmatprep.subr.bf16.mxu0 0
    %1253 = vmatpush1.bf16.msra.mxu0 0
    %1254 = vmatprep.subr.bf16.mxu0 0
    %1255 = vmatpush1.bf16.msra.mxu0 0
    %1256 = vmatprep.subr.bf16.mxu0 0
    %1257 = vmatpush1.bf16.msra.mxu0 0
    %1258 = vmatprep.subr.bf16.mxu0 0
    %1259 = vmatpush1.bf16.msra.mxu0 0
    %1260 = vmatprep.subr.bf16.mxu0 0
    %1261 = vmatpush1.bf16.msra.mxu0 0
    %1262 = vmatprep.mubr.bf16.mxu0 0
    %1263 = vmatmul.mubr.bf16.gmra.mrb[0].mxu0 %v1229
    %v1264 = vpop.f32.mrb[0].mxu0
    %v1265 = vadd.f32 0.0, %v1264
    %v1266 = vpop.f32.mrb[0].mxu0
    %v1267 = vadd.f32 0.0, %v1266
    %v1268 = vpop.f32.mrb[0].mxu0
    %v1269 = vpop.f32.mrb[0].mxu0
    %1270 = vdwg.mxu0
    %1271 = vmatprep.subr.bf16.mxu0 %v473
    %1272 = vmatpush1.bf16.msra.mxu0 %v472
    %1273 = vmatprep.subr.bf16.mxu0 %v477
    %1274 = vmatpush1.bf16.msra.mxu0 %v476
    %1275 = vmatprep.subr.bf16.mxu0 %v481
    %1276 = vmatpush1.bf16.msra.mxu0 %v480
    %1277 = vmatprep.subr.bf16.mxu0 %v485
    %1278 = vmatpush1.bf16.msra.mxu0 %v484
    %1279 = vmatprep.subr.bf16.mxu0 %v489
    %1280 = vmatpush1.bf16.msra.mxu0 %v488
    %1281 = vmatprep.subr.bf16.mxu0 %v493
    %1282 = vmatpush1.bf16.msra.mxu0 %v492
    %1283 = vmatprep.subr.bf16.mxu0 %v497
    %1284 = vmatpush1.bf16.msra.mxu0 %v496
    %1285 = vmatprep.subr.bf16.mxu0 %v501
    %1286 = vmatpush1.bf16.msra.mxu0 %v500
    %1287 = vmatprep.subr.bf16.mxu0 0
    %1288 = vmatpush1.bf16.msra.mxu0 0
    %1289 = vmatprep.subr.bf16.mxu0 0
    %1290 = vmatpush1.bf16.msra.mxu0 0
    %1291 = vmatprep.subr.bf16.mxu0 0
    %1292 = vmatpush1.bf16.msra.mxu0 0
    %1293 = vmatprep.subr.bf16.mxu0 0
    %1294 = vmatpush1.bf16.msra.mxu0 0
    %1295 = vmatprep.subr.bf16.mxu0 0
    %1296 = vmatpush1.bf16.msra.mxu0 0
    %1297 = vmatprep.subr.bf16.mxu0 0
    %1298 = vmatpush1.bf16.msra.mxu0 0
    %1299 = vmatprep.subr.bf16.mxu0 0
    %1300 = vmatpush1.bf16.msra.mxu0 0
    %1301 = vmatprep.subr.bf16.mxu0 0
    %1302 = vmatpush1.bf16.msra.mxu0 0
    %1303 = vmatprep.mubr.bf16.mxu0 0
    %1304 = vmatmul.mubr.bf16.gmra.mrb[0].mxu0 %v1229
    %v1305 = vpop.f32.mrb[0].mxu0
    %v1306 = vadd.f32 0.0, %v1305
    %v1307 = vpop.f32.mrb[0].mxu0
    %v1308 = vadd.f32 0.0, %v1307
    %v1309 = vpop.f32.mrb[0].mxu0
    %v1310 = vpop.f32.mrb[0].mxu0
    %1311 = vdwg.mxu0
    %v1312 = vadd.f32 %v1225, %v1265
    %v1313 = vadd.f32 %v1226, %v1267
    %v1314 = vadd.f32 %v1227, %v1306
    %v1315 = vadd.f32 %v1228, %v1308
    %v1316 = vxor.u32 %v1312, 2147483648
    %v1317 = vxor.u32 %v1313, 2147483648
    %v1318 = vxor.u32 %v1314, 2147483648
    %v1319 = vmul.f32 %v1316, 1.442695
    %v1320 = vpow.pop %v1319
    %v1321 = vmul.f32 %v1317, 1.442695
    %v1322 = vpow.pop %v1321
    %v1323 = vmul.f32 %v1318, 1.442695
    %v1324 = vpow.pop %v1323
    %v1325 = vadd.f32 %v1320, 1.0
    %v1326 = vadd.f32 %v1322, 1.0
    %v1327 = vadd.f32 %v1324, 1.0
    %v1328 = vrcp.pop %v1325
    %v1329 = vmul.f32 1.0, %v1328
    %v1330 = vrcp.pop %v1326
    %v1331 = vmul.f32 1.0, %v1330
    %v1332 = vrcp.pop %v1327
    %v1333 = vmul.f32 1.0, %v1332
    %v1334 = vtanh.pop %v1315
    %v1335 = vmul.f32 %v1331, %v1221
    %v1336 = vmul.f32 %v1329, %v1334
    %v1337 = vadd.f32 %v1335, %v1336
    %v1338 = vtanh.pop %v1337
    %v1339 = vmul.f32 %v1333, %v1338
    %s1340 = scalar_lea.vmem [#allocation4], 224
    %v1341 = vld [vmem:[%s1340] sm:$0xff]
    %v1342 = vld [vmem:[%s1340 + $0x8] sm:$0xff]
    %v1343 = vld [vmem:[%s1340 + $0x10] sm:$0xff]
    %v1344 = vld [vmem:[%s1340 + $0x18] sm:$0xff]
    %v1345 = vpack.c.bf16 %v1339, %v1339
    %1346 = vmatprep.subr.bf16.mxu0 %v471
    %1347 = vmatpush1.bf16.msra.mxu0 %v470
    %1348 = vmatprep.subr.bf16.mxu0 %v475
    %1349 = vmatpush1.bf16.msra.mxu0 %v474
    %1350 = vmatprep.subr.bf16.mxu0 %v479
    %1351 = vmatpush1.bf16.msra.mxu0 %v478
    %1352 = vmatprep.subr.bf16.mxu0 %v483
    %1353 = vmatpush1.bf16.msra.mxu0 %v482
    %1354 = vmatprep.subr.bf16.mxu0 %v487
    %1355 = vmatpush1.bf16.msra.mxu0 %v486
    %1356 = vmatprep.subr.bf16.mxu0 %v491
    %1357 = vmatpush1.bf16.msra.mxu0 %v490
    %1358 = vmatprep.subr.bf16.mxu0 %v495
    %1359 = vmatpush1.bf16.msra.mxu0 %v494
    %1360 = vmatprep.subr.bf16.mxu0 %v499
    %1361 = vmatpush1.bf16.msra.mxu0 %v498
    %1362 = vmatprep.subr.bf16.mxu0 0
    %1363 = vmatpush1.bf16.msra.mxu0 0
    %1364 = vmatprep.subr.bf16.mxu0 0
    %1365 = vmatpush1.bf16.msra.mxu0 0
    %1366 = vmatprep.subr.bf16.mxu0 0
    %1367 = vmatpush1.bf16.msra.mxu0 0
    %1368 = vmatprep.subr.bf16.mxu0 0
    %1369 = vmatpush1.bf16.msra.mxu0 0
    %1370 = vmatprep.subr.bf16.mxu0 0
    %1371 = vmatpush1.bf16.msra.mxu0 0
    %1372 = vmatprep.subr.bf16.mxu0 0
    %1373 = vmatpush1.bf16.msra.mxu0 0
    %1374 = vmatprep.subr.bf16.mxu0 0
    %1375 = vmatpush1.bf16.msra.mxu0 0
    %1376 = vmatprep.subr.bf16.mxu0 0
    %1377 = vmatpush1.bf16.msra.mxu0 0
    %1378 = vmatprep.mubr.bf16.mxu0 0
    %1379 = vmatmul.mubr.bf16.gmra.mrb[0].mxu0 %v1345
    %v1380 = vpop.f32.mrb[0].mxu0
    %v1381 = vadd.f32 0.0, %v1380
    %v1382 = vpop.f32.mrb[0].mxu0
    %v1383 = vadd.f32 0.0, %v1382
    %v1384 = vpop.f32.mrb[0].mxu0
    %v1385 = vpop.f32.mrb[0].mxu0
    %1386 = vdwg.mxu0
    %1387 = vmatprep.subr.bf16.mxu0 %v473
    %1388 = vmatpush1.bf16.msra.mxu0 %v472
    %1389 = vmatprep.subr.bf16.mxu0 %v477
    %1390 = vmatpush1.bf16.msra.mxu0 %v476
    %1391 = vmatprep.subr.bf16.mxu0 %v481
    %1392 = vmatpush1.bf16.msra.mxu0 %v480
    %1393 = vmatprep.subr.bf16.mxu0 %v485
    %1394 = vmatpush1.bf16.msra.mxu0 %v484
    %1395 = vmatprep.subr.bf16.mxu0 %v489
    %1396 = vmatpush1.bf16.msra.mxu0 %v488
    %1397 = vmatprep.subr.bf16.mxu0 %v493
    %1398 = vmatpush1.bf16.msra.mxu0 %v492
    %1399 = vmatprep.subr.bf16.mxu0 %v497
    %1400 = vmatpush1.bf16.msra.mxu0 %v496
    %1401 = vmatprep.subr.bf16.mxu0 %v501
    %1402 = vmatpush1.bf16.msra.mxu0 %v500
    %1403 = vmatprep.subr.bf16.mxu0 0
    %1404 = vmatpush1.bf16.msra.mxu0 0
    %1405 = vmatprep.subr.bf16.mxu0 0
    %1406 = vmatpush1.bf16.msra.mxu0 0
    %1407 = vmatprep.subr.bf16.mxu0 0
    %1408 = vmatpush1.bf16.msra.mxu0 0
    %1409 = vmatprep.subr.bf16.mxu0 0
    %1410 = vmatpush1.bf16.msra.mxu0 0
    %1411 = vmatprep.subr.bf16.mxu0 0
    %1412 = vmatpush1.bf16.msra.mxu0 0
    %1413 = vmatprep.subr.bf16.mxu0 0
    %1414 = vmatpush1.bf16.msra.mxu0 0
    %1415 = vmatprep.subr.bf16.mxu0 0
    %1416 = vmatpush1.bf16.msra.mxu0 0
    %1417 = vmatprep.subr.bf16.mxu0 0
    %1418 = vmatpush1.bf16.msra.mxu0 0
    %1419 = vmatprep.mubr.bf16.mxu0 0
    %1420 = vmatmul.mubr.bf16.gmra.mrb[0].mxu0 %v1345
    %v1421 = vpop.f32.mrb[0].mxu0
    %v1422 = vadd.f32 0.0, %v1421
    %v1423 = vpop.f32.mrb[0].mxu0
    %v1424 = vadd.f32 0.0, %v1423
    %v1425 = vpop.f32.mrb[0].mxu0
    %v1426 = vpop.f32.mrb[0].mxu0
    %1427 = vdwg.mxu0
    %v1428 = vadd.f32 %v1341, %v1381
    %v1429 = vadd.f32 %v1342, %v1383
    %v1430 = vadd.f32 %v1343, %v1422
    %v1431 = vadd.f32 %v1344, %v1424
    %v1432 = vxor.u32 %v1428, 2147483648
    %v1433 = vxor.u32 %v1429, 2147483648
    %v1434 = vxor.u32 %v1430, 2147483648
    %v1435 = vmul.f32 %v1432, 1.442695
    %v1436 = vpow.pop %v1435
    %v1437 = vmul.f32 %v1433, 1.442695
    %v1438 = vpow.pop %v1437
    %v1439 = vmul.f32 %v1434, 1.442695
    %v1440 = vpow.pop %v1439
    %v1441 = vadd.f32 %v1436, 1.0
    %v1442 = vadd.f32 %v1438, 1.0
    %v1443 = vadd.f32 %v1440, 1.0
    %v1444 = vrcp.pop %v1441
    %v1445 = vmul.f32 1.0, %v1444
    %v1446 = vrcp.pop %v1442
    %v1447 = vmul.f32 1.0, %v1446
    %v1448 = vrcp.pop %v1443
    %v1449 = vmul.f32 1.0, %v1448
    %v1450 = vtanh.pop %v1431
    %v1451 = vmul.f32 %v1447, %v1337
    %v1452 = vmul.f32 %v1445, %v1450
    %v1453 = vadd.f32 %v1451, %v1452
    %v1454 = vtanh.pop %v1453
    %v1455 = vmul.f32 %v1449, %v1454
    %1456 = vst [vmem:[#allocation2] sm:$0xff] %v1455
    %1457 = vst [vmem:[#allocation3] sm:$0xff] %v1453
    // Predicated region
    $region46: #{tpu_custom_call.1} parent=1 // pred_check
      %p1458 = pneg %p80
    $region47: #{tpu_custom_call.1} parent=1 // pred_check_branch
      %1460 = sbr.rel (%p1458) target = $region49
    $region48: #{tpu_custom_call.1} parent=1 // pred_region
      %v1461 = vpack.c.bf16 %v1455, %v1455
      %v1462 = vld [vmem:[#allocation11] sm:$0xf]
      %v1463 = vld [vmem:[#allocation11 + $0x4] sm:$0xf]
      %v1464 = vld [vmem:[#allocation11 + $0x8] sm:$0xf]
      %v1465 = vld [vmem:[#allocation11 + $0xc] sm:$0xf]
      %v1466 = vld [vmem:[#allocation11 + $0x10] sm:$0xf]
      %v1467 = vld [vmem:[#allocation11 + $0x14] sm:$0xf]
      %v1468 = vld [vmem:[#allocation11 + $0x18] sm:$0xf]
      %v1469 = vld [vmem:[#allocation11 + $0x1c] sm:$0xf]
      %v1470 = vld [vmem:[#allocation11 + $0x20] sm:$0xf]
      %v1471 = vld [vmem:[#allocation11 + $0x24] sm:$0xf]
      %v1472 = vld [vmem:[#allocation11 + $0x28] sm:$0xf]
      %v1473 = vld [vmem:[#allocation11 + $0x2c] sm:$0xf]
      %v1474 = vld [vmem:[#allocation11 + $0x30] sm:$0xf]
      %v1475 = vld [vmem:[#allocation11 + $0x34] sm:$0xf]
      %v1476 = vld [vmem:[#allocation11 + $0x38] sm:$0xf]
      %v1477 = vld [vmem:[#allocation11 + $0x3c] sm:$0xf]
      %v1478 = vld [vmem:[%s5] sm:$0x1]
      %v1480 = vlaneseq
      %v1481 = vshrl.u32 %v1480, 7
      %v1482 = vsub.s32 0, %v1481
      %v1483 = vrot.slane %v1478, %v1482
      %v1501 = vunpack.c.l.b16 %v1462
      %v1502 = vunpack.c.l.b16 %v1463
      %v1503 = vunpack.c.l.b16 %v1464
      %v1504 = vunpack.c.l.b16 %v1465
      %v1505 = vunpack.c.l.b16 %v1466
      %v1506 = vunpack.c.l.b16 %v1467
      %v1507 = vunpack.c.l.b16 %v1468
      %v1508 = vunpack.c.l.b16 %v1469
      %v1509 = vunpack.c.l.b16 %v1470
      %v1510 = vunpack.c.l.b16 %v1471
      %v1511 = vunpack.c.l.b16 %v1472
      %v1512 = vunpack.c.l.b16 %v1473
      %v1513 = vunpack.c.l.b16 %v1474
      %v1514 = vunpack.c.l.b16 %v1475
      %v1515 = vunpack.c.l.b16 %v1476
      %v1516 = vunpack.c.l.b16 %v1477
      %v1517 = vpack.c.b16 %v1502, %v1501
      %v1518 = vpack.c.b16 %v1504, %v1503
      %v1519 = vpack.c.b16 %v1506, %v1505
      %v1520 = vpack.c.b16 %v1508, %v1507
      %v1521 = vpack.c.b16 %v1510, %v1509
      %v1522 = vpack.c.b16 %v1512, %v1511
      %v1523 = vpack.c.b16 %v1514, %v1513
      %v1524 = vpack.c.b16 %v1516, %v1515
      %1533 = vmatprep.subr.bf16.mxu0 0
      %1534 = vmatpush1.bf16.msra.mxu0 %v1517
      %1535 = vmatprep.subr.bf16.mxu0 0
      %1536 = vmatpush1.bf16.msra.mxu0 %v1518
      %1537 = vmatprep.subr.bf16.mxu0 0
      %1538 = vmatpush1.bf16.msra.mxu0 %v1519
      %1539 = vmatprep.subr.bf16.mxu0 0
      %1540 = vmatpush1.bf16.msra.mxu0 %v1520
      %1541 = vmatprep.subr.bf16.mxu0 0
      %1542 = vmatpush1.bf16.msra.mxu0 %v1521
      %1543 = vmatprep.subr.bf16.mxu0 0
      %1544 = vmatpush1.bf16.msra.mxu0 %v1522
      %1545 = vmatprep.subr.bf16.mxu0 0
      %1546 = vmatpush1.bf16.msra.mxu0 %v1523
      %1547 = vmatprep.subr.bf16.mxu0 0
      %1548 = vmatpush1.bf16.msra.mxu0 %v1524
      %1549 = vmatprep.subr.bf16.mxu0 0
      %1550 = vmatpush1.bf16.msra.mxu0 0
      %1551 = vmatprep.subr.bf16.mxu0 0
      %1552 = vmatpush1.bf16.msra.mxu0 0
      %1553 = vmatprep.subr.bf16.mxu0 0
      %1554 = vmatpush1.bf16.msra.mxu0 0
      %1555 = vmatprep.subr.bf16.mxu0 0
      %1556 = vmatpush1.bf16.msra.mxu0 0
      %1557 = vmatprep.subr.bf16.mxu0 0
      %1558 = vmatpush1.bf16.msra.mxu0 0
      %1559 = vmatprep.subr.bf16.mxu0 0
      %1560 = vmatpush1.bf16.msra.mxu0 0
      %1561 = vmatprep.subr.bf16.mxu0 0
      %1562 = vmatpush1.bf16.msra.mxu0 0
      %1563 = vmatprep.subr.bf16.mxu0 0
      %1564 = vmatpush1.bf16.msra.mxu0 0
      %1565 = vmatprep.mubr.bf16.mxu0 0
      %1566 = vmatmul.mubr.bf16.gmra.mrb[0].mxu0 %v1461
      %v1567 = vpop.f32.mrb[0].mxu0
      %v1568 = vadd.f32 %v1483, %v1567
      %v1569 = vpop.f32.mrb[0].mxu0
      %v1570 = vpop.f32.mrb[0].mxu0
      %v1571 = vpop.f32.mrb[0].mxu0
      %1572 = vdwg.mxu0
      %1573 = vst [vmem:[#allocation13] sm:$0xff] %v1568
    $region49: #{tpu_custom_call.1} parent=1 // pred_fallthru
      _
    // Predicated region
    $region50: #{tpu_custom_call.1} parent=1 // pred_check
      _
    $region51: #{tpu_custom_call.1} parent=1 // pred_check_branch
      %1575 = sbr.rel (0) target = $region53
    $region52: #{tpu_custom_call.1} parent=1 // pred_region
      %s1577 = ssub.s32 128, 128
      %1578 = vsyncadd [#allocation7], %s1577
      %s1580 = sshll.u32 [#allocation13], 4
      %s1581 = int_to_ptr.vmem [resolvable:$true] %s1580
      %1583 = dma.vmem_to_hbm [thread:$0]  %s1581, 128, %s6, [#allocation7]
    $region53: #{tpu_custom_call.1} parent=1 // pred_fallthru
      _
    // Predicated region
    $region54: #{tpu_custom_call.1} parent=1 // pred_check
      _
    $region55: #{tpu_custom_call.1} parent=1 // pred_check_branch
      %1585 = sbr.rel (0) target = $region57
    $region56: #{tpu_custom_call.1} parent=1 // pred_region
      %1586 = dma.done [#allocation7], 128
    $region57: #{tpu_custom_call.1} parent=1 // pred_fallthru
      _
    %1587 = vsyncpa [#allocation6], 1
    %1588 = vsyncpa [#allocation9], 1
    %1589 = vsyncpa [#allocation12], 1
    %1590 = vsyncpa [#allocation7], 1

</llo_original>
